<compile_context>
chip_gen: v7x
topology: tpu7x:2x2x1
jax: 0.10.0
libtpu: 0.0.40
codegen_flags: <defaults>
</compile_context>

<pallas_src>
import numpy as np
import jax
import jax.numpy as jnp
from jax.experimental import pallas as pl
from jax.experimental.pallas import tpu as pltpu


def prime_factorize(n, is_ascending_order=True):
    factors = []
    m = n
    d = 2
    while d * d <= m:
        while m % d == 0:
            factors.append(d)
            m //= d
        d += 1
    if m > 1:
        factors.append(m)
    factors.sort()
    if not is_ascending_order:
        factors.reverse()
    return factors


def _pack_stage(w_hwio, b, H, W, hf, wf, b_blk):
    """Host-side prep for one stage (for a given per-step image block B_blk):
      * fold the 3 kw taps + width zero-padding of the 3x3 conv into three
        banded (W*Cin, W*Cout) bf16 GEMM weights (one per kh row offset),
      * tile the bias to the lane-packed (1, W*Cout) f32 row,
      * build the 0/1 selection matrices that finish the height / width
        max-pools (the height selector also drops the junk rows produced at
        image boundaries when B_blk images are stacked in the GEMM M dim)."""
    w_np = np.asarray(w_hwio, dtype=np.float32)            # (3, 3, Cin, Cout)
    b_np = np.asarray(b, dtype=np.float32)                 # (Cout,)
    Cin, Cout = int(w_np.shape[2]), int(w_np.shape[3])
    K, L = W * Cin, W * Cout
    Hout, Wout = H // hf, W // wf
    Hpad = H + 2                                           # per-image rows incl. halo
    M = b_blk * Hpad - 2                                   # rows of the conv GEMM result

    band = np.zeros((3, K, L), np.float32)
    for kh in range(3):
        for kw in range(3):
            for wo in range(W):
                wi = wo + kw - 1                           # input column (SAME pad)
                if 0 <= wi < W:
                    band[kh, wi * Cin:(wi + 1) * Cin,
                         wo * Cout:(wo + 1) * Cout] = w_np[kh, kw]

    bias_row = np.tile(b_np, W).reshape(1, L)

    # height pool: after the hf shifted-row maxima over the stacked conv result,
    # pooled row ho of image bb lives at stacked row bb*Hpad + ho*hf.
    sel_h = np.zeros((b_blk * Hout, M - hf + 1), np.float32)
    for bb in range(b_blk):
        for ho in range(Hout):
            sel_h[bb * Hout + ho, bb * Hpad + ho * hf] = 1.0

    sel_w = np.zeros(((W - wf + 1) * Cout, Wout * Cout), np.float32)
    for wo in range(Wout):
        sel_w[wo * wf * Cout + np.arange(Cout),
              wo * Cout + np.arange(Cout)] = 1.0

    selh_id = (sel_h.shape[0] == sel_h.shape[1]
               and np.array_equal(sel_h, np.eye(sel_h.shape[0], dtype=np.float32)))
    selw_id = (sel_w.shape[0] == sel_w.shape[1]
               and np.array_equal(sel_w, np.eye(sel_w.shape[0], dtype=np.float32)))

    arrays = (jnp.asarray(band, dtype=jnp.bfloat16),       # bf16 MXU weights
              jnp.asarray(bias_row),                       # f32
              jnp.asarray(sel_h),                          # f32 0/1
              jnp.asarray(sel_w))                          # f32 0/1
    return arrays, (selh_id, selw_id)


def _const_index_map(ndim):
    zeros = (0,) * ndim
    return lambda g, _z=zeros: _z


def _make_fused_kernel(stage_shapes, sel_flags, b_blk):
    n_stages = len(stage_shapes)

    def kernel(*refs):
        x_ref = refs[0]
        param_refs = refs[1:1 + 4 * n_stages]
        out_refs = refs[1 + 4 * n_stages:1 + 5 * n_stages]
        pad_ref, acc_ref = refs[1 + 5 * n_stages:]

        cur = x_ref[0]                                     # (B_blk*H0, W0*C0) f32
        for i, (H, W, Cin, Cout, hf, wf) in enumerate(stage_shapes):
            band_ref = param_refs[4 * i + 0]               # (3, W*Cin, W*Cout) bf16
            bias_ref = param_refs[4 * i + 1]               # (1, W*Cout) f32
            selh_ref = param_refs[4 * i + 2]               # (B_blk*Hout, M-hf+1) f32
            selw_ref = param_refs[4 * i + 3]               # ((W-wf+1)*Cout, Wout*Cout) f32
            selh_id, selw_id = sel_flags[i]
            K, L = W * Cin, W * Cout
            Hout, Wout = H // hf, W // wf
            Hpad = H + 2
            M = b_blk * Hpad - 2                           # conv GEMM M (incl. junk rows)

            # Stack the B_blk images into the SHARED halo scratch with one zero
            # row above and below each image (SAME padding + image separators;
            # the separators are mandatory so the conv never mixes images).
            zrow = jnp.zeros((1, K), jnp.float32)
            for bb in range(b_blk):
                base = bb * Hpad
                pad_ref[base:base + 1, 0:K] = zrow
                pad_ref[base + H + 1:base + H + 2, 0:K] = zrow
                pad_ref[base + 1:base + 1 + H, 0:K] = cur[bb * H:(bb + 1) * H, :]

            # 3x3 conv == 3 banded bf16 GEMMs (kw taps + width padding folded
            # into K), accumulated into the shared f32 VMEM scratch so the MXU
            # result buffer can hold the partials (v7x MRB).
            for kh in range(3):
                lhs = pad_ref[kh:kh + M, 0:K].astype(jnp.bfloat16)
                part = jnp.dot(lhs, band_ref[kh],
                               preferred_element_type=jnp.float32)
                if kh == 0:
                    acc_ref[0:M, 0:L] = part
                else:
                    acc_ref[0:M, 0:L] += part
            conv = jnp.maximum(acc_ref[0:M, 0:L] + bias_ref[...], 0.0)  # (M, L) f32

            # Height max-pool: shifted-row maxima, then a 0/1 row-selection GEMM
            # that both strides by hf and drops the image-boundary junk rows.
            Th = M - hf + 1
            t = conv[0:Th, :]
            for ph in range(1, hf):
                t = jnp.maximum(t, conv[ph:ph + Th, :])
            if selh_id:
                hp = t                                     # selector is identity
            else:
                hp = jnp.dot(selh_ref[...], t,
                             preferred_element_type=jnp.float32)
            # hp: (B_blk*Hout, W*Cout), images stacked contiguously (no junk)

            # Width max-pool: shifted-lane maxima + 0/1 column-selection GEMM.
            if wf > 1:
                Lw = (W - wf + 1) * Cout
                u = hp[:, 0:Lw]
                for pw in range(1, wf):
                    u = jnp.maximum(u, hp[:, pw * Cout:pw * Cout + Lw])
            else:
                u = hp
            if selw_id:
                out = u
            else:
                out = jnp.dot(u, selw_ref[...],
                              preferred_element_type=jnp.float32)

            out_refs[i][0] = out                           # (B_blk*Hout, Wout*Cout)
            cur = out                                      # feeds the next stage

    return kernel


def seg_encoder_forward(x_nchw, stage_shapes, packed_arrays, sel_flags,
                        b_blk, num_steps):
    """Runs the whole encoder pyramid in ONE pallas_call with B_blk images per
    grid step; returns per-stage outputs in NCHW (PyTorch convention)."""
    N = x_nchw.shape[0]
    H0, W0, C0 = stage_shapes[0][0], stage_shapes[0][1], stage_shapes[0][2]
    n_pad = b_blk * num_steps

    # NCHW -> lane-packed (H, W*C) rows; layout plumbing only, done once outside.
    x = jnp.transpose(x_nchw, (0, 2, 3, 1)).astype(jnp.float32)
    x = x.reshape(N, H0, W0 * C0)
    if n_pad > N:
        x = jnp.concatenate(
            [x, jnp.zeros((n_pad - N, H0, W0 * C0), jnp.float32)], axis=0)
    # B_blk images stacked along rows per grid step -> big GEMM M dimension.
    x = x.reshape(num_steps, b_blk * H0, W0 * C0)

    in_specs = [pl.BlockSpec((1, b_blk * H0, W0 * C0), lambda g: (g, 0, 0))]
    flat_params, out_shape, out_specs = [], [], []
    max_pad_rows = max_pad_k = max_acc_rows = max_acc_l = 0
    flops = 0
    param_bytes = 0
    for (H, W, Cin, Cout, hf, wf), packed in zip(stage_shapes, packed_arrays):
        K, L = W * Cin, W * Cout
        Hout, Wout = H // hf, W // wf
        R = b_blk * (H + 2)
        M = R - 2
        max_pad_rows = max(max_pad_rows, R)
        max_pad_k = max(max_pad_k, K)
        max_acc_rows = max(max_acc_rows, M)
        max_acc_l = max(max_acc_l, L)
        for arr in packed:
            flat_params.append(arr)
            # Grid-invariant params (constant index_map): Pallas re-uses the
            # fetched block across steps.  For much larger configs these could
            # also be single-buffered via pipeline_mode to halve their VMEM.
            in_specs.append(pl.BlockSpec(arr.shape, _const_index_map(arr.ndim)))
            param_bytes += int(arr.size) * arr.dtype.itemsize
        out_shape.append(jax.ShapeDtypeStruct(
            (num_steps, b_blk * Hout, Wout * Cout), jnp.float32))
        out_specs.append(pl.BlockSpec((1, b_blk * Hout, Wout * Cout),
                                      lambda g: (g, 0, 0)))
        flops += num_steps * (2 * 3 * M * K * L                           # conv GEMMs
                              + 2 * (b_blk * Hout) * (M - hf + 1) * L     # height sel
                              + 2 * (b_blk * Hout) * ((W - wf + 1) * Cout)
                              * (Wout * Cout))                            # width sel

    # ONE shared halo scratch + ONE shared accumulator, max-sized over stages
    # (scratch_shapes are live for the whole kernel, so per-stage scratches sum).
    scratch_shapes = [pltpu.VMEM((max_pad_rows, max_pad_k), jnp.float32),
                      pltpu.VMEM((max_acc_rows, max_acc_l), jnp.float32)]

    in_bytes = int(x.size) * 4
    out_bytes = sum(int(np.prod(s.shape)) * 4 for s in out_shape)
    block_bytes = (2 * (b_blk * H0 * W0 * C0 * 4)                 # input, double-buffered
                   + 2 * param_bytes                              # params, double-buffered
                   + 2 * sum(int(np.prod(s.shape[1:])) * 4 for s in out_shape)
                   + (max_pad_rows * max_pad_k + max_acc_rows * max_acc_l) * 4)
    # Explicit scoped-VMEM budget (defaults are well below physical VMEM);
    # capped at 64 MiB so it is valid on every current chip (v7x per-TC limit).
    vmem_limit = int(min(max(32 * 1024 * 1024, 2 * block_bytes + 4 * 1024 * 1024),
                         64 * 1024 * 1024))

    outs = pl.pallas_call(
        _make_fused_kernel(stage_shapes, sel_flags, b_blk),
        out_shape=tuple(out_shape),
        grid=(num_steps,),
        in_specs=in_specs,
        out_specs=tuple(out_specs),
        scratch_shapes=scratch_shapes,
        compiler_params=pltpu.CompilerParams(
            dimension_semantics=("parallel",),     # >=2 steps -> both v7x cores
            vmem_limit_bytes=vmem_limit),
        cost_estimate=pl.CostEstimate(flops=int(flops), transcendentals=0,
                                      bytes_accessed=int(in_bytes + param_bytes
                                                         + out_bytes)),
    )(x, *flat_params)

    results = []
    for o, (H, W, Cin, Cout, hf, wf) in zip(outs, stage_shapes):
        Hout, Wout = H // hf, W // wf
        o = o.reshape(n_pad, Hout, Wout, Cout)[:N]   # unpack (step, b_blk) and lanes
        results.append(jnp.transpose(o, (0, 3, 1, 2)))                   # -> NCHW
    return results


class SegEncoderPallas:
    """JAX/Pallas port of the PyTorch SegEncoder. z_dim is unused in forward
    (same as the reference module)."""
    # TODO(synk): for large images (W*C of a few thousand lanes) the banded-GEMM
    # weights grow quadratically in W; switch to a width-tiled / K=9*Cin im2col
    # GEMM with a height-halo grid axis above W ~ 32-64.

    def __init__(self, img_ch, img_height, img_width, z_dim, conv_unit_ch, key):
        hfs = prime_factorize(img_height, True)
        wfs = prime_factorize(img_width, True)
        while len(hfs) != len(wfs):
            if len(hfs) < len(wfs):
                hfs.insert(0, 1)
            else:
                wfs.insert(0, 1)
        self.factors = list(zip(hfs, wfs))
        self.z_dim = z_dim

        self.params = []        # raw (w HWIO, b) -- also used by the XLA reference
        self.stage_shapes = []  # (H, W, Cin, Cout, hf, wf)
        H, W, in_ch = img_height, img_width, img_ch
        for i, (hf, wf) in enumerate(self.factors):
            out_ch = (i + 1) * conv_unit_ch
            key, k_w, k_b = jax.random.split(key, 3)
            fan_in = 3 * 3 * in_ch
            w = jax.random.normal(k_w, (3, 3, in_ch, out_ch), jnp.float32) / np.sqrt(fan_in)
            b = 0.01 * jax.random.normal(k_b, (out_ch,), jnp.float32)
            self.params.append((w, b))
            self.stage_shapes.append((H, W, in_ch, out_ch, hf, wf))
            in_ch, H, W = out_ch, H // hf, W // wf
        self._packed_cache = {}     # b_blk -> (packed arrays, selector-identity flags)

    def _packed_for(self, b_blk):
        if b_blk not in self._packed_cache:
            packed, flags = [], []
            for (w, b), (H, W, Cin, Cout, hf, wf) in zip(self.params, self.stage_shapes):
                arrs, fl = _pack_stage(w, b, H, W, hf, wf, b_blk)
                packed.append(arrs)
                flags.append(fl)
            self._packed_cache[b_blk] = (packed, flags)
        return self._packed_cache[b_blk]

    def __call__(self, x_nchw):
        N = int(x_nchw.shape[0])
        # Keep >= 2 grid steps so both v7x TensorCores get work; fold the rest
        # of the batch into the GEMM M dimension of each step.
        num_steps = 2 if N >= 2 else 1
        b_blk = -(-N // num_steps)              # ceil(N / num_steps)
        packed, flags = self._packed_for(b_blk)
        return seg_encoder_forward(x_nchw, self.stage_shapes, packed, flags,
                                   b_blk, num_steps)


def reference_forward(x_nchw, params, factors):
    """Pure-JAX reference (XLA conv / reduce_window) for correctness checking."""
    x = jnp.transpose(x_nchw, (0, 2, 3, 1)).astype(jnp.float32)
    outs = []
    for (w, b), (hf, wf) in zip(params, factors):
        y = jax.lax.conv_general_dilated(
            x, w, window_strides=(1, 1), padding="SAME",
            dimension_numbers=("NHWC", "HWIO", "NHWC"))
        y = jnp.maximum(y + b, 0.0)
        y = jax.lax.reduce_window(y, -jnp.inf, jax.lax.max,
                                  (1, hf, wf, 1), (1, hf, wf, 1), "VALID")
        x = y
        outs.append(jnp.transpose(y, (0, 3, 1, 2)))
    return outs


if __name__ == "__main__":
    # Small shapes consistent with the module: batch=2, img_ch=4, 16x16 image,
    # conv_unit_ch=8, z_dim=32 (unused in forward).
    N, img_ch, img_h, img_w = 2, 4, 16, 16
    conv_unit_ch, z_dim = 8, 32

    key = jax.random.PRNGKey(0)
    key, kx, kp = jax.random.split(key, 3)
    x = jax.random.normal(kx, (N, img_ch, img_h, img_w), jnp.float32)  # NCHW

    enc = SegEncoderPallas(img_ch, img_h, img_w, z_dim, conv_unit_ch, kp)

    outs = [jax.block_until_ready(o) for o in enc(x)]
    refs = [jax.block_until_ready(r) for r in reference_forward(x, enc.params, enc.factors)]

    assert len(outs) == len(enc.factors)
    # Tolerance reflects bf16 MXU conv operands vs. the f32 XLA reference,
    # compounded over the 4 chained stages.
    for o, r in zip(outs, refs):
        assert o.shape == r.shape, (o.shape, r.shape)
        np.testing.assert_allclose(np.asarray(o), np.asarray(r), rtol=5e-2, atol=5e-2)

    # Second check with a batch that does not split evenly (N=5 -> 2 grid steps
    # of 3 images each, one zero-padded): exercises the batch-into-GEMM-M
    # packing with zero separator rows and junk-row dropping.
    key, kx2 = jax.random.split(key)
    x2 = jax.random.normal(kx2, (5, img_ch, img_h, img_w), jnp.float32)
    outs2 = [jax.block_until_ready(o) for o in enc(x2)]
    refs2 = [jax.block_until_ready(r) for r in reference_forward(x2, enc.params, enc.factors)]
    for o, r in zip(outs2, refs2):
        assert o.shape == r.shape, (o.shape, r.shape)
        np.testing.assert_allclose(np.asarray(o), np.asarray(r), rtol=5e-2, atol=5e-2)

    print("KERNEL_OK")
</pallas_src>

<mosaic_0001>
module attributes {stable_mosaic.version = 11 : i64} {
  func.func @kernel(%arg0: i32, %arg1: memref<1x16x64xf32, #tpu.memory_space<vmem>>, %arg2: memref<3x64x128xbf16, #tpu.memory_space<vmem>>, %arg3: memref<1x128xf32, #tpu.memory_space<vmem>>, %arg4: memref<8x15xf32, #tpu.memory_space<vmem>>, %arg5: memref<120x64xf32, #tpu.memory_space<vmem>>, %arg6: memref<3x64x128xbf16, #tpu.memory_space<vmem>>, %arg7: memref<1x128xf32, #tpu.memory_space<vmem>>, %arg8: memref<4x7xf32, #tpu.memory_space<vmem>>, %arg9: memref<112x64xf32, #tpu.memory_space<vmem>>, %arg10: memref<3x64x96xbf16, #tpu.memory_space<vmem>>, %arg11: memref<1x96xf32, #tpu.memory_space<vmem>>, %arg12: memref<2x3xf32, #tpu.memory_space<vmem>>, %arg13: memref<72x48xf32, #tpu.memory_space<vmem>>, %arg14: memref<3x48x64xbf16, #tpu.memory_space<vmem>>, %arg15: memref<1x64xf32, #tpu.memory_space<vmem>>, %arg16: memref<1x1xf32, #tpu.memory_space<vmem>>, %arg17: memref<32x32xf32, #tpu.memory_space<vmem>>, %arg18: memref<1x8x64xf32, #tpu.memory_space<vmem>>, %arg19: memref<1x4x64xf32, #tpu.memory_space<vmem>>, %arg20: memref<1x2x48xf32, #tpu.memory_space<vmem>>, %arg21: memref<1x1x32xf32, #tpu.memory_space<vmem>>, %arg22: memref<18x64xf32, #tpu.memory_space<vmem>>, %arg23: memref<16x128xf32, #tpu.memory_space<vmem>>) attributes {dimension_semantics = [#tpu.dimension_semantics<parallel>], iteration_bounds = array<i64: 2>, scalar_prefetch = 0 : i64, scratch_operands = 2 : i64, tpu.core_type = #tpu.core_type<tc>, window_params = [{transform_indices = @transform_0, window_bounds = array<i64: 1, 16, 64>}, {pipeline_mode = #tpu.pipeline_mode<synchronous>, transform_indices = @transform_1, window_bounds = array<i64: 3, 64, 128>}, {pipeline_mode = #tpu.pipeline_mode<synchronous>, transform_indices = @transform_2, window_bounds = array<i64: 1, 128>}, {pipeline_mode = #tpu.pipeline_mode<synchronous>, transform_indices = @transform_3, window_bounds = array<i64: 8, 15>}, {pipeline_mode = #tpu.pipeline_mode<synchronous>, transform_indices = @transform_4, window_bounds = array<i64: 120, 64>}, {pipeline_mode = #tpu.pipeline_mode<synchronous>, transform_indices = @transform_5, window_bounds = array<i64: 3, 64, 128>}, {pipeline_mode = #tpu.pipeline_mode<synchronous>, transform_indices = @transform_6, window_bounds = array<i64: 1, 128>}, {pipeline_mode = #tpu.pipeline_mode<synchronous>, transform_indices = @transform_7, window_bounds = array<i64: 4, 7>}, {pipeline_mode = #tpu.pipeline_mode<synchronous>, transform_indices = @transform_8, window_bounds = array<i64: 112, 64>}, {pipeline_mode = #tpu.pipeline_mode<synchronous>, transform_indices = @transform_9, window_bounds = array<i64: 3, 64, 96>}, {pipeline_mode = #tpu.pipeline_mode<synchronous>, transform_indices = @transform_10, window_bounds = array<i64: 1, 96>}, {pipeline_mode = #tpu.pipeline_mode<synchronous>, transform_indices = @transform_11, window_bounds = array<i64: 2, 3>}, {pipeline_mode = #tpu.pipeline_mode<synchronous>, transform_indices = @transform_12, window_bounds = array<i64: 72, 48>}, {pipeline_mode = #tpu.pipeline_mode<synchronous>, transform_indices = @transform_13, window_bounds = array<i64: 3, 48, 64>}, {pipeline_mode = #tpu.pipeline_mode<synchronous>, transform_indices = @transform_14, window_bounds = array<i64: 1, 64>}, {pipeline_mode = #tpu.pipeline_mode<synchronous>, transform_indices = @transform_15, window_bounds = array<i64: 1, 1>}, {pipeline_mode = #tpu.pipeline_mode<synchronous>, transform_indices = @transform_16, window_bounds = array<i64: 32, 32>}, {transform_indices = @transform_17, window_bounds = array<i64: 1, 8, 64>}, {transform_indices = @transform_18, window_bounds = array<i64: 1, 4, 64>}, {transform_indices = @transform_19, window_bounds = array<i64: 1, 2, 48>}, {transform_indices = @transform_20, window_bounds = array<i64: 1, 1, 32>}]} {
    %c0 = arith.constant 0 : index
    %c0_0 = arith.constant 0 : index
    %c0_1 = arith.constant 0 : index
    %0 = vector.load %arg1[%c0, %c0_0, %c0_1] : memref<1x16x64xf32, #tpu.memory_space<vmem>>, vector<1x16x64xf32>
    %1 = vector.shape_cast %0 : vector<1x16x64xf32> to vector<16x64xf32>
    %cst = arith.constant 0.000000e+00 : f32
    %2 = vector.broadcast %cst : f32 to vector<1x64xf32>
    %c0_2 = arith.constant 0 : index
    %c0_3 = arith.constant 0 : index
    %3 = vector.load %arg22[%c0_2, %c0_3] : memref<18x64xf32, #tpu.memory_space<vmem>>, vector<1x64xf32>
    tpu.vector_store %arg22[%c0_2, %c0_3], %2 {strides = array<i32>} : memref<18x64xf32, #tpu.memory_space<vmem>>, vector<1x64xf32>,
    %c17 = arith.constant 17 : index
    %c0_4 = arith.constant 0 : index
    %4 = vector.load %arg22[%c17, %c0_4] : memref<18x64xf32, #tpu.memory_space<vmem>>, vector<1x64xf32>
    tpu.vector_store %arg22[%c17, %c0_4], %2 {strides = array<i32>} : memref<18x64xf32, #tpu.memory_space<vmem>>, vector<1x64xf32>,
    %c1 = arith.constant 1 : index
    %c0_5 = arith.constant 0 : index
    %5 = vector.load %arg22[%c1, %c0_5] : memref<18x64xf32, #tpu.memory_space<vmem>>, vector<16x64xf32>
    tpu.vector_store %arg22[%c1, %c0_5], %1 {strides = array<i32>} : memref<18x64xf32, #tpu.memory_space<vmem>>, vector<16x64xf32>,
    %c0_6 = arith.constant 0 : index
    %c0_7 = arith.constant 0 : index
    %6 = vector.load %arg22[%c0_6, %c0_7] : memref<18x64xf32, #tpu.memory_space<vmem>>, vector<16x64xf32>
    %7 = arith.truncf %6 : vector<16x64xf32> to vector<16x64xbf16>
    %c0_8 = arith.constant 0 : index
    %c0_9 = arith.constant 0 : index
    %c0_10 = arith.constant 0 : index
    %8 = vector.load %arg2[%c0_8, %c0_9, %c0_10] : memref<3x64x128xbf16, #tpu.memory_space<vmem>>, vector<1x64x128xbf16>
    %9 = vector.shape_cast %8 : vector<1x64x128xbf16> to vector<64x128xbf16>
    %cst_11 = arith.constant dense<0.000000e+00> : vector<16x128xf32>
    %10 = tpu.matmul %7, %9, %cst_11 {dimension_numbers = #tpu.dot_dimension_numbers<[1], [0], [0], [1], [0, 0, 1, 1], [], []>} : vector<16x64xbf16>, vector<64x128xbf16>, vector<16x128xf32> -> vector<16x128xf32>
    %c0_12 = arith.constant 0 : index
    %c0_13 = arith.constant 0 : index
    %11 = vector.load %arg23[%c0_12, %c0_13] : memref<16x128xf32, #tpu.memory_space<vmem>>, vector<16x128xf32>
    tpu.vector_store %arg23[%c0_12, %c0_13], %10 {strides = array<i32>} : memref<16x128xf32, #tpu.memory_space<vmem>>, vector<16x128xf32>,
    %c1_14 = arith.constant 1 : index
    %c0_15 = arith.constant 0 : index
    %12 = vector.load %arg22[%c1_14, %c0_15] : memref<18x64xf32, #tpu.memory_space<vmem>>, vector<16x64xf32>
    %13 = arith.truncf %12 : vector<16x64xf32> to vector<16x64xbf16>
    %c1_16 = arith.constant 1 : index
    %c0_17 = arith.constant 0 : index
    %c0_18 = arith.constant 0 : index
    %14 = vector.load %arg2[%c1_16, %c0_17, %c0_18] : memref<3x64x128xbf16, #tpu.memory_space<vmem>>, vector<1x64x128xbf16>
    %15 = vector.shape_cast %14 : vector<1x64x128xbf16> to vector<64x128xbf16>
    %cst_19 = arith.constant dense<0.000000e+00> : vector<16x128xf32>
    %16 = tpu.matmul %13, %15, %cst_19 {dimension_numbers = #tpu.dot_dimension_numbers<[1], [0], [0], [1], [0, 0, 1, 1], [], []>} : vector<16x64xbf16>, vector<64x128xbf16>, vector<16x128xf32> -> vector<16x128xf32>
    %c0_20 = arith.constant 0 : index
    %c0_21 = arith.constant 0 : index
    %17 = vector.load %arg23[%c0_20, %c0_21] : memref<16x128xf32, #tpu.memory_space<vmem>>, vector<16x128xf32>
    %18 = arith.addf %17, %16 : vector<16x128xf32>
    %c0_22 = arith.constant 0 : index
    %c0_23 = arith.constant 0 : index
    %19 = vector.load %arg23[%c0_22, %c0_23] : memref<16x128xf32, #tpu.memory_space<vmem>>, vector<16x128xf32>
    tpu.vector_store %arg23[%c0_22, %c0_23], %18 {strides = array<i32>} : memref<16x128xf32, #tpu.memory_space<vmem>>, vector<16x128xf32>,
    %c2 = arith.constant 2 : index
    %c0_24 = arith.constant 0 : index
    %20 = vector.load %arg22[%c2, %c0_24] : memref<18x64xf32, #tpu.memory_space<vmem>>, vector<16x64xf32>
    %21 = arith.truncf %20 : vector<16x64xf32> to vector<16x64xbf16>
    %c2_25 = arith.constant 2 : index
    %c0_26 = arith.constant 0 : index
    %c0_27 = arith.constant 0 : index
    %22 = vector.load %arg2[%c2_25, %c0_26, %c0_27] : memref<3x64x128xbf16, #tpu.memory_space<vmem>>, vector<1x64x128xbf16>
    %23 = vector.shape_cast %22 : vector<1x64x128xbf16> to vector<64x128xbf16>
    %cst_28 = arith.constant dense<0.000000e+00> : vector<16x128xf32>
    %24 = tpu.matmul %21, %23, %cst_28 {dimension_numbers = #tpu.dot_dimension_numbers<[1], [0], [0], [1], [0, 0, 1, 1], [], []>} : vector<16x64xbf16>, vector<64x128xbf16>, vector<16x128xf32> -> vector<16x128xf32>
    %c0_29 = arith.constant 0 : index
    %c0_30 = arith.constant 0 : index
    %25 = vector.load %arg23[%c0_29, %c0_30] : memref<16x128xf32, #tpu.memory_space<vmem>>, vector<16x128xf32>
    %26 = arith.addf %25, %24 : vector<16x128xf32>
    %c0_31 = arith.constant 0 : index
    %c0_32 = arith.constant 0 : index
    %27 = vector.load %arg23[%c0_31, %c0_32] : memref<16x128xf32, #tpu.memory_space<vmem>>, vector<16x128xf32>
    tpu.vector_store %arg23[%c0_31, %c0_32], %26 {strides = array<i32>} : memref<16x128xf32, #tpu.memory_space<vmem>>, vector<16x128xf32>,
    %c0_33 = arith.constant 0 : index
    %c0_34 = arith.constant 0 : index
    %28 = vector.load %arg23[%c0_33, %c0_34] : memref<16x128xf32, #tpu.memory_space<vmem>>, vector<16x128xf32>
    %c0_35 = arith.constant 0 : index
    %c0_36 = arith.constant 0 : index
    %29 = vector.load %arg3[%c0_35, %c0_36] : memref<1x128xf32, #tpu.memory_space<vmem>>, vector<1x128xf32>
    %30 = vector.broadcast %29 : vector<1x128xf32> to vector<16x128xf32>
    %31 = arith.addf %28, %30 : vector<16x128xf32>
    %cst_37 = arith.constant 0.000000e+00 : f32
    %32 = vector.broadcast %cst_37 : f32 to vector<16x128xf32>
    %33 = arith.maximumf %31, %32 : vector<16x128xf32>
    %34 = vector.extract_strided_slice %33 {offsets = [0, 0], sizes = [15, 128], strides = [1, 1]} : vector<16x128xf32> to vector<15x128xf32>
    %35 = vector.extract_strided_slice %33 {offsets = [1, 0], sizes = [15, 128], strides = [1, 1]} : vector<16x128xf32> to vector<15x128xf32>
    %36 = arith.maximumf %34, %35 : vector<15x128xf32>
    %c0_38 = arith.constant 0 : index
    %c0_39 = arith.constant 0 : index
    %37 = vector.load %arg4[%c0_38, %c0_39] : memref<8x15xf32, #tpu.memory_space<vmem>>, vector<8x15xf32>
    %cst_40 = arith.constant dense<0.000000e+00> : vector<8x128xf32>
    %38 = tpu.matmul %37, %36, %cst_40 {dimension_numbers = #tpu.dot_dimension_numbers<[1], [0], [0], [1], [0, 0, 1, 1], [], []>} : vector<8x15xf32>, vector<15x128xf32>, vector<8x128xf32> -> vector<8x128xf32>
    %39 = vector.extract_strided_slice %38 {offsets = [0, 0], sizes = [8, 120], strides = [1, 1]} : vector<8x128xf32> to vector<8x120xf32>
    %40 = vector.extract_strided_slice %38 {offsets = [0, 8], sizes = [8, 120], strides = [1, 1]} : vector<8x128xf32> to vector<8x120xf32>
    %41 = arith.maximumf %39, %40 : vector<8x120xf32>
    %c0_41 = arith.constant 0 : index
    %c0_42 = arith.constant 0 : index
    %42 = vector.load %arg5[%c0_41, %c0_42] : memref<120x64xf32, #tpu.memory_space<vmem>>, vector<120x64xf32>
    %cst_43 = arith.constant dense<0.000000e+00> : vector<8x64xf32>
    %43 = tpu.matmul %41, %42, %cst_43 {dimension_numbers = #tpu.dot_dimension_numbers<[1], [0], [0], [1], [0, 0, 1, 1], [], []>} : vector<8x120xf32>, vector<120x64xf32>, vector<8x64xf32> -> vector<8x64xf32>
    %c0_44 = arith.constant 0 : index
    %c0_45 = arith.constant 0 : index
    %c0_46 = arith.constant 0 : index
    %44 = vector.load %arg18[%c0_44, %c0_45, %c0_46] : memref<1x8x64xf32, #tpu.memory_space<vmem>>, vector<1x8x64xf32>
    %45 = vector.shape_cast %44 : vector<1x8x64xf32> to vector<8x64xf32>
    %46 = vector.shape_cast %43 : vector<8x64xf32> to vector<1x8x64xf32>
    tpu.vector_store %arg18[%c0_44, %c0_45, %c0_46], %46 {strides = array<i32>} : memref<1x8x64xf32, #tpu.memory_space<vmem>>, vector<1x8x64xf32>,
    %cst_47 = arith.constant 0.000000e+00 : f32
    %47 = vector.broadcast %cst_47 : f32 to vector<1x64xf32>
    %c0_48 = arith.constant 0 : index
    %c0_49 = arith.constant 0 : index
    %48 = vector.load %arg22[%c0_48, %c0_49] : memref<18x64xf32, #tpu.memory_space<vmem>>, vector<1x64xf32>
    tpu.vector_store %arg22[%c0_48, %c0_49], %47 {strides = array<i32>} : memref<18x64xf32, #tpu.memory_space<vmem>>, vector<1x64xf32>,
    %c9 = arith.constant 9 : index
    %c0_50 = arith.constant 0 : index
    %49 = vector.load %arg22[%c9, %c0_50] : memref<18x64xf32, #tpu.memory_space<vmem>>, vector<1x64xf32>
    tpu.vector_store %arg22[%c9, %c0_50], %47 {strides = array<i32>} : memref<18x64xf32, #tpu.memory_space<vmem>>, vector<1x64xf32>,
    %c1_51 = arith.constant 1 : index
    %c0_52 = arith.constant 0 : index
    %50 = vector.load %arg22[%c1_51, %c0_52] : memref<18x64xf32, #tpu.memory_space<vmem>>, vector<8x64xf32>
    tpu.vector_store %arg22[%c1_51, %c0_52], %43 {strides = array<i32>} : memref<18x64xf32, #tpu.memory_space<vmem>>, vector<8x64xf32>,
    %c0_53 = arith.constant 0 : index
    %c0_54 = arith.constant 0 : index
    %51 = vector.load %arg22[%c0_53, %c0_54] : memref<18x64xf32, #tpu.memory_space<vmem>>, vector<8x64xf32>
    %52 = arith.truncf %51 : vector<8x64xf32> to vector<8x64xbf16>
    %c0_55 = arith.constant 0 : index
    %c0_56 = arith.constant 0 : index
    %c0_57 = arith.constant 0 : index
    %53 = vector.load %arg6[%c0_55, %c0_56, %c0_57] : memref<3x64x128xbf16, #tpu.memory_space<vmem>>, vector<1x64x128xbf16>
    %54 = vector.shape_cast %53 : vector<1x64x128xbf16> to vector<64x128xbf16>
    %cst_58 = arith.constant dense<0.000000e+00> : vector<8x128xf32>
    %55 = tpu.matmul %52, %54, %cst_58 {dimension_numbers = #tpu.dot_dimension_numbers<[1], [0], [0], [1], [0, 0, 1, 1], [], []>} : vector<8x64xbf16>, vector<64x128xbf16>, vector<8x128xf32> -> vector<8x128xf32>
    %c0_59 = arith.constant 0 : index
    %c0_60 = arith.constant 0 : index
    %56 = vector.load %arg23[%c0_59, %c0_60] : memref<16x128xf32, #tpu.memory_space<vmem>>, vector<8x128xf32>
    tpu.vector_store %arg23[%c0_59, %c0_60], %55 {strides = array<i32>} : memref<16x128xf32, #tpu.memory_space<vmem>>, vector<8x128xf32>,
    %c1_61 = arith.constant 1 : index
    %c0_62 = arith.constant 0 : index
    %57 = vector.load %arg22[%c1_61, %c0_62] : memref<18x64xf32, #tpu.memory_space<vmem>>, vector<8x64xf32>
    %58 = arith.truncf %57 : vector<8x64xf32> to vector<8x64xbf16>
    %c1_63 = arith.constant 1 : index
    %c0_64 = arith.constant 0 : index
    %c0_65 = arith.constant 0 : index
    %59 = vector.load %arg6[%c1_63, %c0_64, %c0_65] : memref<3x64x128xbf16, #tpu.memory_space<vmem>>, vector<1x64x128xbf16>
    %60 = vector.shape_cast %59 : vector<1x64x128xbf16> to vector<64x128xbf16>
    %cst_66 = arith.constant dense<0.000000e+00> : vector<8x128xf32>
    %61 = tpu.matmul %58, %60, %cst_66 {dimension_numbers = #tpu.dot_dimension_numbers<[1], [0], [0], [1], [0, 0, 1, 1], [], []>} : vector<8x64xbf16>, vector<64x128xbf16>, vector<8x128xf32> -> vector<8x128xf32>
    %c0_67 = arith.constant 0 : index
    %c0_68 = arith.constant 0 : index
    %62 = vector.load %arg23[%c0_67, %c0_68] : memref<16x128xf32, #tpu.memory_space<vmem>>, vector<8x128xf32>
    %63 = arith.addf %62, %61 : vector<8x128xf32>
    %c0_69 = arith.constant 0 : index
    %c0_70 = arith.constant 0 : index
    %64 = vector.load %arg23[%c0_69, %c0_70] : memref<16x128xf32, #tpu.memory_space<vmem>>, vector<8x128xf32>
    tpu.vector_store %arg23[%c0_69, %c0_70], %63 {strides = array<i32>} : memref<16x128xf32, #tpu.memory_space<vmem>>, vector<8x128xf32>,
    %c2_71 = arith.constant 2 : index
    %c0_72 = arith.constant 0 : index
    %65 = vector.load %arg22[%c2_71, %c0_72] : memref<18x64xf32, #tpu.memory_space<vmem>>, vector<8x64xf32>
    %66 = arith.truncf %65 : vector<8x64xf32> to vector<8x64xbf16>
    %c2_73 = arith.constant 2 : index
    %c0_74 = arith.constant 0 : index
    %c0_75 = arith.constant 0 : index
    %67 = vector.load %arg6[%c2_73, %c0_74, %c0_75] : memref<3x64x128xbf16, #tpu.memory_space<vmem>>, vector<1x64x128xbf16>
    %68 = vector.shape_cast %67 : vector<1x64x128xbf16> to vector<64x128xbf16>
    %cst_76 = arith.constant dense<0.000000e+00> : vector<8x128xf32>
    %69 = tpu.matmul %66, %68, %cst_76 {dimension_numbers = #tpu.dot_dimension_numbers<[1], [0], [0], [1], [0, 0, 1, 1], [], []>} : vector<8x64xbf16>, vector<64x128xbf16>, vector<8x128xf32> -> vector<8x128xf32>
    %c0_77 = arith.constant 0 : index
    %c0_78 = arith.constant 0 : index
    %70 = vector.load %arg23[%c0_77, %c0_78] : memref<16x128xf32, #tpu.memory_space<vmem>>, vector<8x128xf32>
    %71 = arith.addf %70, %69 : vector<8x128xf32>
    %c0_79 = arith.constant 0 : index
    %c0_80 = arith.constant 0 : index
    %72 = vector.load %arg23[%c0_79, %c0_80] : memref<16x128xf32, #tpu.memory_space<vmem>>, vector<8x128xf32>
    tpu.vector_store %arg23[%c0_79, %c0_80], %71 {strides = array<i32>} : memref<16x128xf32, #tpu.memory_space<vmem>>, vector<8x128xf32>,
    %c0_81 = arith.constant 0 : index
    %c0_82 = arith.constant 0 : index
    %73 = vector.load %arg23[%c0_81, %c0_82] : memref<16x128xf32, #tpu.memory_space<vmem>>, vector<8x128xf32>
    %c0_83 = arith.constant 0 : index
    %c0_84 = arith.constant 0 : index
    %74 = vector.load %arg7[%c0_83, %c0_84] : memref<1x128xf32, #tpu.memory_space<vmem>>, vector<1x128xf32>
    %75 = vector.broadcast %74 : vector<1x128xf32> to vector<8x128xf32>
    %76 = arith.addf %73, %75 : vector<8x128xf32>
    %cst_85 = arith.constant 0.000000e+00 : f32
    %77 = vector.broadcast %cst_85 : f32 to vector<8x128xf32>
    %78 = arith.maximumf %76, %77 : vector<8x128xf32>
    %79 = vector.extract_strided_slice %78 {offsets = [0, 0], sizes = [7, 128], strides = [1, 1]} : vector<8x128xf32> to vector<7x128xf32>
    %80 = vector.extract_strided_slice %78 {offsets = [1, 0], sizes = [7, 128], strides = [1, 1]} : vector<8x128xf32> to vector<7x128xf32>
    %81 = arith.maximumf %79, %80 : vector<7x128xf32>
    %c0_86 = arith.constant 0 : index
    %c0_87 = arith.constant 0 : index
    %82 = vector.load %arg8[%c0_86, %c0_87] : memref<4x7xf32, #tpu.memory_space<vmem>>, vector<4x7xf32>
    %cst_88 = arith.constant dense<0.000000e+00> : vector<4x128xf32>
    %83 = tpu.matmul %82, %81, %cst_88 {dimension_numbers = #tpu.dot_dimension_numbers<[1], [0], [0], [1], [0, 0, 1, 1], [], []>} : vector<4x7xf32>, vector<7x128xf32>, vector<4x128xf32> -> vector<4x128xf32>
    %84 = vector.extract_strided_slice %83 {offsets = [0, 0], sizes = [4, 112], strides = [1, 1]} : vector<4x128xf32> to vector<4x112xf32>
    %85 = vector.extract_strided_slice %83 {offsets = [0, 16], sizes = [4, 112], strides = [1, 1]} : vector<4x128xf32> to vector<4x112xf32>
    %86 = arith.maximumf %84, %85 : vector<4x112xf32>
    %c0_89 = arith.constant 0 : index
    %c0_90 = arith.constant 0 : index
    %87 = vector.load %arg9[%c0_89, %c0_90] : memref<112x64xf32, #tpu.memory_space<vmem>>, vector<112x64xf32>
    %cst_91 = arith.constant dense<0.000000e+00> : vector<4x64xf32>
    %88 = tpu.matmul %86, %87, %cst_91 {dimension_numbers = #tpu.dot_dimension_numbers<[1], [0], [0], [1], [0, 0, 1, 1], [], []>} : vector<4x112xf32>, vector<112x64xf32>, vector<4x64xf32> -> vector<4x64xf32>
    %c0_92 = arith.constant 0 : index
    %c0_93 = arith.constant 0 : index
    %c0_94 = arith.constant 0 : index
    %89 = vector.load %arg19[%c0_92, %c0_93, %c0_94] : memref<1x4x64xf32, #tpu.memory_space<vmem>>, vector<1x4x64xf32>
    %90 = vector.shape_cast %89 : vector<1x4x64xf32> to vector<4x64xf32>
    %91 = vector.shape_cast %88 : vector<4x64xf32> to vector<1x4x64xf32>
    tpu.vector_store %arg19[%c0_92, %c0_93, %c0_94], %91 {strides = array<i32>} : memref<1x4x64xf32, #tpu.memory_space<vmem>>, vector<1x4x64xf32>,
    %cst_95 = arith.constant 0.000000e+00 : f32
    %92 = vector.broadcast %cst_95 : f32 to vector<1x64xf32>
    %c0_96 = arith.constant 0 : index
    %c0_97 = arith.constant 0 : index
    %93 = vector.load %arg22[%c0_96, %c0_97] : memref<18x64xf32, #tpu.memory_space<vmem>>, vector<1x64xf32>
    tpu.vector_store %arg22[%c0_96, %c0_97], %92 {strides = array<i32>} : memref<18x64xf32, #tpu.memory_space<vmem>>, vector<1x64xf32>,
    %c5 = arith.constant 5 : index
    %c0_98 = arith.constant 0 : index
    %94 = vector.load %arg22[%c5, %c0_98] : memref<18x64xf32, #tpu.memory_space<vmem>>, vector<1x64xf32>
    tpu.vector_store %arg22[%c5, %c0_98], %92 {strides = array<i32>} : memref<18x64xf32, #tpu.memory_space<vmem>>, vector<1x64xf32>,
    %c1_99 = arith.constant 1 : index
    %c0_100 = arith.constant 0 : index
    %95 = vector.load %arg22[%c1_99, %c0_100] : memref<18x64xf32, #tpu.memory_space<vmem>>, vector<4x64xf32>
    tpu.vector_store %arg22[%c1_99, %c0_100], %88 {strides = array<i32>} : memref<18x64xf32, #tpu.memory_space<vmem>>, vector<4x64xf32>,
    %c0_101 = arith.constant 0 : index
    %c0_102 = arith.constant 0 : index
    %96 = vector.load %arg22[%c0_101, %c0_102] : memref<18x64xf32, #tpu.memory_space<vmem>>, vector<4x64xf32>
    %97 = arith.truncf %96 : vector<4x64xf32> to vector<4x64xbf16>
    %c0_103 = arith.constant 0 : index
    %c0_104 = arith.constant 0 : index
    %c0_105 = arith.constant 0 : index
    %98 = vector.load %arg10[%c0_103, %c0_104, %c0_105] : memref<3x64x96xbf16, #tpu.memory_space<vmem>>, vector<1x64x96xbf16>
    %99 = vector.shape_cast %98 : vector<1x64x96xbf16> to vector<64x96xbf16>
    %cst_106 = arith.constant dense<0.000000e+00> : vector<4x96xf32>
    %100 = tpu.matmul %97, %99, %cst_106 {dimension_numbers = #tpu.dot_dimension_numbers<[1], [0], [0], [1], [0, 0, 1, 1], [], []>} : vector<4x64xbf16>, vector<64x96xbf16>, vector<4x96xf32> -> vector<4x96xf32>
    %c0_107 = arith.constant 0 : index
    %c0_108 = arith.constant 0 : index
    %101 = vector.load %arg23[%c0_107, %c0_108] : memref<16x128xf32, #tpu.memory_space<vmem>>, vector<4x96xf32>
    tpu.vector_store %arg23[%c0_107, %c0_108], %100 {strides = array<i32>} : memref<16x128xf32, #tpu.memory_space<vmem>>, vector<4x96xf32>,
    %c1_109 = arith.constant 1 : index
    %c0_110 = arith.constant 0 : index
    %102 = vector.load %arg22[%c1_109, %c0_110] : memref<18x64xf32, #tpu.memory_space<vmem>>, vector<4x64xf32>
    %103 = arith.truncf %102 : vector<4x64xf32> to vector<4x64xbf16>
    %c1_111 = arith.constant 1 : index
    %c0_112 = arith.constant 0 : index
    %c0_113 = arith.constant 0 : index
    %104 = vector.load %arg10[%c1_111, %c0_112, %c0_113] : memref<3x64x96xbf16, #tpu.memory_space<vmem>>, vector<1x64x96xbf16>
    %105 = vector.shape_cast %104 : vector<1x64x96xbf16> to vector<64x96xbf16>
    %cst_114 = arith.constant dense<0.000000e+00> : vector<4x96xf32>
    %106 = tpu.matmul %103, %105, %cst_114 {dimension_numbers = #tpu.dot_dimension_numbers<[1], [0], [0], [1], [0, 0, 1, 1], [], []>} : vector<4x64xbf16>, vector<64x96xbf16>, vector<4x96xf32> -> vector<4x96xf32>
    %c0_115 = arith.constant 0 : index
    %c0_116 = arith.constant 0 : index
    %107 = vector.load %arg23[%c0_115, %c0_116] : memref<16x128xf32, #tpu.memory_space<vmem>>, vector<4x96xf32>
    %108 = arith.addf %107, %106 : vector<4x96xf32>
    %c0_117 = arith.constant 0 : index
    %c0_118 = arith.constant 0 : index
    %109 = vector.load %arg23[%c0_117, %c0_118] : memref<16x128xf32, #tpu.memory_space<vmem>>, vector<4x96xf32>
    tpu.vector_store %arg23[%c0_117, %c0_118], %108 {strides = array<i32>} : memref<16x128xf32, #tpu.memory_space<vmem>>, vector<4x96xf32>,
    %c2_119 = arith.constant 2 : index
    %c0_120 = arith.constant 0 : index
    %110 = vector.load %arg22[%c2_119, %c0_120] : memref<18x64xf32, #tpu.memory_space<vmem>>, vector<4x64xf32>
    %111 = arith.truncf %110 : vector<4x64xf32> to vector<4x64xbf16>
    %c2_121 = arith.constant 2 : index
    %c0_122 = arith.constant 0 : index
    %c0_123 = arith.constant 0 : index
    %112 = vector.load %arg10[%c2_121, %c0_122, %c0_123] : memref<3x64x96xbf16, #tpu.memory_space<vmem>>, vector<1x64x96xbf16>
    %113 = vector.shape_cast %112 : vector<1x64x96xbf16> to vector<64x96xbf16>
    %cst_124 = arith.constant dense<0.000000e+00> : vector<4x96xf32>
    %114 = tpu.matmul %111, %113, %cst_124 {dimension_numbers = #tpu.dot_dimension_numbers<[1], [0], [0], [1], [0, 0, 1, 1], [], []>} : vector<4x64xbf16>, vector<64x96xbf16>, vector<4x96xf32> -> vector<4x96xf32>
    %c0_125 = arith.constant 0 : index
    %c0_126 = arith.constant 0 : index
    %115 = vector.load %arg23[%c0_125, %c0_126] : memref<16x128xf32, #tpu.memory_space<vmem>>, vector<4x96xf32>
    %116 = arith.addf %115, %114 : vector<4x96xf32>
    %c0_127 = arith.constant 0 : index
    %c0_128 = arith.constant 0 : index
    %117 = vector.load %arg23[%c0_127, %c0_128] : memref<16x128xf32, #tpu.memory_space<vmem>>, vector<4x96xf32>
    tpu.vector_store %arg23[%c0_127, %c0_128], %116 {strides = array<i32>} : memref<16x128xf32, #tpu.memory_space<vmem>>, vector<4x96xf32>,
    %c0_129 = arith.constant 0 : index
    %c0_130 = arith.constant 0 : index
    %118 = vector.load %arg23[%c0_129, %c0_130] : memref<16x128xf32, #tpu.memory_space<vmem>>, vector<4x96xf32>
    %c0_131 = arith.constant 0 : index
    %c0_132 = arith.constant 0 : index
    %119 = vector.load %arg11[%c0_131, %c0_132] : memref<1x96xf32, #tpu.memory_space<vmem>>, vector<1x96xf32>
    %120 = vector.broadcast %119 : vector<1x96xf32> to vector<4x96xf32>
    %121 = arith.addf %118, %120 : vector<4x96xf32>
    %cst_133 = arith.constant 0.000000e+00 : f32
    %122 = vector.broadcast %cst_133 : f32 to vector<4x96xf32>
    %123 = arith.maximumf %121, %122 : vector<4x96xf32>
    %124 = vector.extract_strided_slice %123 {offsets = [0, 0], sizes = [3, 96], strides = [1, 1]} : vector<4x96xf32> to vector<3x96xf32>
    %125 = vector.extract_strided_slice %123 {offsets = [1, 0], sizes = [3, 96], strides = [1, 1]} : vector<4x96xf32> to vector<3x96xf32>
    %126 = arith.maximumf %124, %125 : vector<3x96xf32>
    %c0_134 = arith.constant 0 : index
    %c0_135 = arith.constant 0 : index
    %127 = vector.load %arg12[%c0_134, %c0_135] : memref<2x3xf32, #tpu.memory_space<vmem>>, vector<2x3xf32>
    %cst_136 = arith.constant dense<0.000000e+00> : vector<2x96xf32>
    %128 = tpu.matmul %127, %126, %cst_136 {dimension_numbers = #tpu.dot_dimension_numbers<[1], [0], [0], [1], [0, 0, 1, 1], [], []>} : vector<2x3xf32>, vector<3x96xf32>, vector<2x96xf32> -> vector<2x96xf32>
    %129 = vector.extract_strided_slice %128 {offsets = [0, 0], sizes = [2, 72], strides = [1, 1]} : vector<2x96xf32> to vector<2x72xf32>
    %130 = vector.extract_strided_slice %128 {offsets = [0, 24], sizes = [2, 72], strides = [1, 1]} : vector<2x96xf32> to vector<2x72xf32>
    %131 = arith.maximumf %129, %130 : vector<2x72xf32>
    %c0_137 = arith.constant 0 : index
    %c0_138 = arith.constant 0 : index
    %132 = vector.load %arg13[%c0_137, %c0_138] : memref<72x48xf32, #tpu.memory_space<vmem>>, vector<72x48xf32>
    %cst_139 = arith.constant dense<0.000000e+00> : vector<2x48xf32>
    %133 = tpu.matmul %131, %132, %cst_139 {dimension_numbers = #tpu.dot_dimension_numbers<[1], [0], [0], [1], [0, 0, 1, 1], [], []>} : vector<2x72xf32>, vector<72x48xf32>, vector<2x48xf32> -> vector<2x48xf32>
    %c0_140 = arith.constant 0 : index
    %c0_141 = arith.constant 0 : index
    %c0_142 = arith.constant 0 : index
    %134 = vector.load %arg20[%c0_140, %c0_141, %c0_142] : memref<1x2x48xf32, #tpu.memory_space<vmem>>, vector<1x2x48xf32>
    %135 = vector.shape_cast %134 : vector<1x2x48xf32> to vector<2x48xf32>
    %136 = vector.shape_cast %133 : vector<2x48xf32> to vector<1x2x48xf32>
    tpu.vector_store %arg20[%c0_140, %c0_141, %c0_142], %136 {strides = array<i32>} : memref<1x2x48xf32, #tpu.memory_space<vmem>>, vector<1x2x48xf32>,
    %cst_143 = arith.constant 0.000000e+00 : f32
    %137 = vector.broadcast %cst_143 : f32 to vector<1x48xf32>
    %c0_144 = arith.constant 0 : index
    %c0_145 = arith.constant 0 : index
    %138 = vector.load %arg22[%c0_144, %c0_145] : memref<18x64xf32, #tpu.memory_space<vmem>>, vector<1x48xf32>
    tpu.vector_store %arg22[%c0_144, %c0_145], %137 {strides = array<i32>} : memref<18x64xf32, #tpu.memory_space<vmem>>, vector<1x48xf32>,
    %c3 = arith.constant 3 : index
    %c0_146 = arith.constant 0 : index
    %139 = vector.load %arg22[%c3, %c0_146] : memref<18x64xf32, #tpu.memory_space<vmem>>, vector<1x48xf32>
    tpu.vector_store %arg22[%c3, %c0_146], %137 {strides = array<i32>} : memref<18x64xf32, #tpu.memory_space<vmem>>, vector<1x48xf32>,
    %c1_147 = arith.constant 1 : index
    %c0_148 = arith.constant 0 : index
    %140 = vector.load %arg22[%c1_147, %c0_148] : memref<18x64xf32, #tpu.memory_space<vmem>>, vector<2x48xf32>
    tpu.vector_store %arg22[%c1_147, %c0_148], %133 {strides = array<i32>} : memref<18x64xf32, #tpu.memory_space<vmem>>, vector<2x48xf32>,
    %c0_149 = arith.constant 0 : index
    %c0_150 = arith.constant 0 : index
    %141 = vector.load %arg22[%c0_149, %c0_150] : memref<18x64xf32, #tpu.memory_space<vmem>>, vector<2x48xf32>
    %142 = arith.truncf %141 : vector<2x48xf32> to vector<2x48xbf16>
    %c0_151 = arith.constant 0 : index
    %c0_152 = arith.constant 0 : index
    %c0_153 = arith.constant 0 : index
    %143 = vector.load %arg14[%c0_151, %c0_152, %c0_153] : memref<3x48x64xbf16, #tpu.memory_space<vmem>>, vector<1x48x64xbf16>
    %144 = vector.shape_cast %143 : vector<1x48x64xbf16> to vector<48x64xbf16>
    %cst_154 = arith.constant dense<0.000000e+00> : vector<2x64xf32>
    %145 = tpu.matmul %142, %144, %cst_154 {dimension_numbers = #tpu.dot_dimension_numbers<[1], [0], [0], [1], [0, 0, 1, 1], [], []>} : vector<2x48xbf16>, vector<48x64xbf16>, vector<2x64xf32> -> vector<2x64xf32>
    %c0_155 = arith.constant 0 : index
    %c0_156 = arith.constant 0 : index
    %146 = vector.load %arg23[%c0_155, %c0_156] : memref<16x128xf32, #tpu.memory_space<vmem>>, vector<2x64xf32>
    tpu.vector_store %arg23[%c0_155, %c0_156], %145 {strides = array<i32>} : memref<16x128xf32, #tpu.memory_space<vmem>>, vector<2x64xf32>,
    %c1_157 = arith.constant 1 : index
    %c0_158 = arith.constant 0 : index
    %147 = vector.load %arg22[%c1_157, %c0_158] : memref<18x64xf32, #tpu.memory_space<vmem>>, vector<2x48xf32>
    %148 = arith.truncf %147 : vector<2x48xf32> to vector<2x48xbf16>
    %c1_159 = arith.constant 1 : index
    %c0_160 = arith.constant 0 : index
    %c0_161 = arith.constant 0 : index
    %149 = vector.load %arg14[%c1_159, %c0_160, %c0_161] : memref<3x48x64xbf16, #tpu.memory_space<vmem>>, vector<1x48x64xbf16>
    %150 = vector.shape_cast %149 : vector<1x48x64xbf16> to vector<48x64xbf16>
    %cst_162 = arith.constant dense<0.000000e+00> : vector<2x64xf32>
    %151 = tpu.matmul %148, %150, %cst_162 {dimension_numbers = #tpu.dot_dimension_numbers<[1], [0], [0], [1], [0, 0, 1, 1], [], []>} : vector<2x48xbf16>, vector<48x64xbf16>, vector<2x64xf32> -> vector<2x64xf32>
    %c0_163 = arith.constant 0 : index
    %c0_164 = arith.constant 0 : index
    %152 = vector.load %arg23[%c0_163, %c0_164] : memref<16x128xf32, #tpu.memory_space<vmem>>, vector<2x64xf32>
    %153 = arith.addf %152, %151 : vector<2x64xf32>
    %c0_165 = arith.constant 0 : index
    %c0_166 = arith.constant 0 : index
    %154 = vector.load %arg23[%c0_165, %c0_166] : memref<16x128xf32, #tpu.memory_space<vmem>>, vector<2x64xf32>
    tpu.vector_store %arg23[%c0_165, %c0_166], %153 {strides = array<i32>} : memref<16x128xf32, #tpu.memory_space<vmem>>, vector<2x64xf32>,
    %c2_167 = arith.constant 2 : index
    %c0_168 = arith.constant 0 : index
    %155 = vector.load %arg22[%c2_167, %c0_168] : memref<18x64xf32, #tpu.memory_space<vmem>>, vector<2x48xf32>
    %156 = arith.truncf %155 : vector<2x48xf32> to vector<2x48xbf16>
    %c2_169 = arith.constant 2 : index
    %c0_170 = arith.constant 0 : index
    %c0_171 = arith.constant 0 : index
    %157 = vector.load %arg14[%c2_169, %c0_170, %c0_171] : memref<3x48x64xbf16, #tpu.memory_space<vmem>>, vector<1x48x64xbf16>
    %158 = vector.shape_cast %157 : vector<1x48x64xbf16> to vector<48x64xbf16>
    %cst_172 = arith.constant dense<0.000000e+00> : vector<2x64xf32>
    %159 = tpu.matmul %156, %158, %cst_172 {dimension_numbers = #tpu.dot_dimension_numbers<[1], [0], [0], [1], [0, 0, 1, 1], [], []>} : vector<2x48xbf16>, vector<48x64xbf16>, vector<2x64xf32> -> vector<2x64xf32>
    %c0_173 = arith.constant 0 : index
    %c0_174 = arith.constant 0 : index
    %160 = vector.load %arg23[%c0_173, %c0_174] : memref<16x128xf32, #tpu.memory_space<vmem>>, vector<2x64xf32>
    %161 = arith.addf %160, %159 : vector<2x64xf32>
    %c0_175 = arith.constant 0 : index
    %c0_176 = arith.constant 0 : index
    %162 = vector.load %arg23[%c0_175, %c0_176] : memref<16x128xf32, #tpu.memory_space<vmem>>, vector<2x64xf32>
    tpu.vector_store %arg23[%c0_175, %c0_176], %161 {strides = array<i32>} : memref<16x128xf32, #tpu.memory_space<vmem>>, vector<2x64xf32>,
    %c0_177 = arith.constant 0 : index
    %c0_178 = arith.constant 0 : index
    %163 = vector.load %arg23[%c0_177, %c0_178] : memref<16x128xf32, #tpu.memory_space<vmem>>, vector<2x64xf32>
    %c0_179 = arith.constant 0 : index
    %c0_180 = arith.constant 0 : index
    %164 = vector.load %arg15[%c0_179, %c0_180] : memref<1x64xf32, #tpu.memory_space<vmem>>, vector<1x64xf32>
    %165 = vector.broadcast %164 : vector<1x64xf32> to vector<2x64xf32>
    %166 = arith.addf %163, %165 : vector<2x64xf32>
    %cst_181 = arith.constant 0.000000e+00 : f32
    %167 = vector.broadcast %cst_181 : f32 to vector<2x64xf32>
    %168 = arith.maximumf %166, %167 : vector<2x64xf32>
    %169 = vector.extract_strided_slice %168 {offsets = [0, 0], sizes = [1, 64], strides = [1, 1]} : vector<2x64xf32> to vector<1x64xf32>
    %170 = vector.extract_strided_slice %168 {offsets = [1, 0], sizes = [1, 64], strides = [1, 1]} : vector<2x64xf32> to vector<1x64xf32>
    %171 = arith.maximumf %169, %170 : vector<1x64xf32>
    %172 = vector.extract_strided_slice %171 {offsets = [0, 0], sizes = [1, 32], strides = [1, 1]} : vector<1x64xf32> to vector<1x32xf32>
    %173 = vector.extract_strided_slice %171 {offsets = [0, 32], sizes = [1, 32], strides = [1, 1]} : vector<1x64xf32> to vector<1x32xf32>
    %174 = arith.maximumf %172, %173 : vector<1x32xf32>
    %c0_182 = arith.constant 0 : index
    %c0_183 = arith.constant 0 : index
    %c0_184 = arith.constant 0 : index
    %175 = vector.load %arg21[%c0_182, %c0_183, %c0_184] : memref<1x1x32xf32, #tpu.memory_space<vmem>>, vector<1x1x32xf32>
    %176 = vector.shape_cast %175 : vector<1x1x32xf32> to vector<1x32xf32>
    %177 = vector.shape_cast %174 : vector<1x32xf32> to vector<1x1x32xf32>
    tpu.vector_store %arg21[%c0_182, %c0_183, %c0_184], %177 {strides = array<i32>} : memref<1x1x32xf32, #tpu.memory_space<vmem>>, vector<1x1x32xf32>,
    return
  }
  func.func @transform_0(%arg0: i32) -> (i32, i32, i32) {
    %c0_i32 = arith.constant 0 : i32
    %c0_i32_0 = arith.constant 0 : i32
    %c0_i32_1 = arith.constant 0 : i32
    return %arg0, %c0_i32, %c0_i32_0 : i32, i32, i32
  }
  func.func @transform_1(%arg0: i32) -> (i32, i32, i32) {
    %c0_i32 = arith.constant 0 : i32
    %c0_i32_0 = arith.constant 0 : i32
    %c0_i32_1 = arith.constant 0 : i32
    %c0_i32_2 = arith.constant 0 : i32
    return %c0_i32, %c0_i32_0, %c0_i32_1 : i32, i32, i32
  }
  func.func @transform_2(%arg0: i32) -> (i32, i32) {
    %c0_i32 = arith.constant 0 : i32
    %c0_i32_0 = arith.constant 0 : i32
    %c0_i32_1 = arith.constant 0 : i32
    return %c0_i32, %c0_i32_0 : i32, i32
  }
  func.func @transform_3(%arg0: i32) -> (i32, i32) {
    %c0_i32 = arith.constant 0 : i32
    %c0_i32_0 = arith.constant 0 : i32
    %c0_i32_1 = arith.constant 0 : i32
    return %c0_i32, %c0_i32_0 : i32, i32
  }
  func.func @transform_4(%arg0: i32) -> (i32, i32) {
    %c0_i32 = arith.constant 0 : i32
    %c0_i32_0 = arith.constant 0 : i32
    %c0_i32_1 = arith.constant 0 : i32
    return %c0_i32, %c0_i32_0 : i32, i32
  }
  func.func @transform_5(%arg0: i32) -> (i32, i32, i32) {
    %c0_i32 = arith.constant 0 : i32
    %c0_i32_0 = arith.constant 0 : i32
    %c0_i32_1 = arith.constant 0 : i32
    %c0_i32_2 = arith.constant 0 : i32
    return %c0_i32, %c0_i32_0, %c0_i32_1 : i32, i32, i32
  }
  func.func @transform_6(%arg0: i32) -> (i32, i32) {
    %c0_i32 = arith.constant 0 : i32
    %c0_i32_0 = arith.constant 0 : i32
    %c0_i32_1 = arith.constant 0 : i32
    return %c0_i32, %c0_i32_0 : i32, i32
  }
  func.func @transform_7(%arg0: i32) -> (i32, i32) {
    %c0_i32 = arith.constant 0 : i32
    %c0_i32_0 = arith.constant 0 : i32
    %c0_i32_1 = arith.constant 0 : i32
    return %c0_i32, %c0_i32_0 : i32, i32
  }
  func.func @transform_8(%arg0: i32) -> (i32, i32) {
    %c0_i32 = arith.constant 0 : i32
    %c0_i32_0 = arith.constant 0 : i32
    %c0_i32_1 = arith.constant 0 : i32
    return %c0_i32, %c0_i32_0 : i32, i32
  }
  func.func @transform_9(%arg0: i32) -> (i32, i32, i32) {
    %c0_i32 = arith.constant 0 : i32
    %c0_i32_0 = arith.constant 0 : i32
    %c0_i32_1 = arith.constant 0 : i32
    %c0_i32_2 = arith.constant 0 : i32
    return %c0_i32, %c0_i32_0, %c0_i32_1 : i32, i32, i32
  }
  func.func @transform_10(%arg0: i32) -> (i32, i32) {
    %c0_i32 = arith.constant 0 : i32
    %c0_i32_0 = arith.constant 0 : i32
    %c0_i32_1 = arith.constant 0 : i32
    return %c0_i32, %c0_i32_0 : i32, i32
  }
  func.func @transform_11(%arg0: i32) -> (i32, i32) {
    %c0_i32 = arith.constant 0 : i32
    %c0_i32_0 = arith.constant 0 : i32
    %c0_i32_1 = arith.constant 0 : i32
    return %c0_i32, %c0_i32_0 : i32, i32
  }
  func.func @transform_12(%arg0: i32) -> (i32, i32) {
    %c0_i32 = arith.constant 0 : i32
    %c0_i32_0 = arith.constant 0 : i32
    %c0_i32_1 = arith.constant 0 : i32
    return %c0_i32, %c0_i32_0 : i32, i32
  }
  func.func @transform_13(%arg0: i32) -> (i32, i32, i32) {
    %c0_i32 = arith.constant 0 : i32
    %c0_i32_0 = arith.constant 0 : i32
    %c0_i32_1 = arith.constant 0 : i32
    %c0_i32_2 = arith.constant 0 : i32
    return %c0_i32, %c0_i32_0, %c0_i32_1 : i32, i32, i32
  }
  func.func @transform_14(%arg0: i32) -> (i32, i32) {
    %c0_i32 = arith.constant 0 : i32
    %c0_i32_0 = arith.constant 0 : i32
    %c0_i32_1 = arith.constant 0 : i32
    return %c0_i32, %c0_i32_0 : i32, i32
  }
  func.func @transform_15(%arg0: i32) -> (i32, i32) {
    %c0_i32 = arith.constant 0 : i32
    %c0_i32_0 = arith.constant 0 : i32
    %c0_i32_1 = arith.constant 0 : i32
    return %c0_i32, %c0_i32_0 : i32, i32
  }
  func.func @transform_16(%arg0: i32) -> (i32, i32) {
    %c0_i32 = arith.constant 0 : i32
    %c0_i32_0 = arith.constant 0 : i32
    %c0_i32_1 = arith.constant 0 : i32
    return %c0_i32, %c0_i32_0 : i32, i32
  }
  func.func @transform_17(%arg0: i32) -> (i32, i32, i32) {
    %c0_i32 = arith.constant 0 : i32
    %c0_i32_0 = arith.constant 0 : i32
    %c0_i32_1 = arith.constant 0 : i32
    return %arg0, %c0_i32, %c0_i32_0 : i32, i32, i32
  }
  func.func @transform_18(%arg0: i32) -> (i32, i32, i32) {
    %c0_i32 = arith.constant 0 : i32
    %c0_i32_0 = arith.constant 0 : i32
    %c0_i32_1 = arith.constant 0 : i32
    return %arg0, %c0_i32, %c0_i32_0 : i32, i32, i32
  }
  func.func @transform_19(%arg0: i32) -> (i32, i32, i32) {
    %c0_i32 = arith.constant 0 : i32
    %c0_i32_0 = arith.constant 0 : i32
    %c0_i32_1 = arith.constant 0 : i32
    return %arg0, %c0_i32, %c0_i32_0 : i32, i32, i32
  }
  func.func @transform_20(%arg0: i32) -> (i32, i32, i32) {
    %c0_i32 = arith.constant 0 : i32
    %c0_i32_0 = arith.constant 0 : i32
    %c0_i32_1 = arith.constant 0 : i32
    return %arg0, %c0_i32, %c0_i32_0 : i32, i32, i32
  }
}

</mosaic_0001>

<llo_original>
// kernel: tpu_custom_call.1
$region0: #{tpu_custom_call.1}
  #allocation0 [shape = 'u32[]', space=smem, size = 0x4, offset = 0x4, fixed_abs, tag = 'smem constant byte address 0x4 - core index']
  #allocation1 [shape = 'u32[144,128]{1,0:T(1,128)}', space=vmem, size = 0x12000, scoped, tag = 'internal scratch']
  #allocation2 [shape = 'f32[18,64]{1,0:T(8,128)}', space=vmem, size = 0x3000, scoped, tag = 'scratch operand']
  #allocation3 [shape = 'f32[16,128]{1,0:T(8,128)}', space=vmem, size = 0x2000, scoped, tag = 'scratch operand']
  #allocation4 [shape = 'f32[1,1]{1,0:T(1,128)S(1)}', space=vmem, size = 0x200, scoped, tag = 'scoped memory for tpu_custom_call.1']
  %s0 = inlined_call_operand.hbm [shape: f32[2,16,64], index: 0, kind: input, shape index: {}]
  %s1 = inlined_call_operand.vmem [shape: bf16[3,64,128], index: 1, kind: input, shape index: {}]
  %s2 = inlined_call_operand.vmem [shape: f32[1,128], index: 2, kind: input, shape index: {}]
  %s3 = inlined_call_operand.hbm [shape: f32[8,15], index: 3, kind: input, shape index: {}]
  %s4 = inlined_call_operand.vmem [shape: f32[120,64], index: 4, kind: input, shape index: {}]
  %s5 = inlined_call_operand.vmem [shape: bf16[3,64,128], index: 5, kind: input, shape index: {}]
  %s6 = inlined_call_operand.hbm [shape: f32[1,128], index: 6, kind: input, shape index: {}]
  %s7 = inlined_call_operand.vmem [shape: f32[4,7], index: 7, kind: input, shape index: {}]
  %s8 = inlined_call_operand.vmem [shape: f32[112,64], index: 8, kind: input, shape index: {}]
  %s9 = inlined_call_operand.vmem [shape: bf16[3,64,96], index: 9, kind: input, shape index: {}]
  %s10 = inlined_call_operand.hbm [shape: f32[1,96], index: 10, kind: input, shape index: {}]
  %s11 = inlined_call_operand.hbm [shape: f32[2,3], index: 11, kind: input, shape index: {}]
  %s12 = inlined_call_operand.vmem [shape: f32[72,48], index: 12, kind: input, shape index: {}]
  %s13 = inlined_call_operand.vmem [shape: bf16[3,48,64], index: 13, kind: input, shape index: {}]
  %s14 = inlined_call_operand.vmem [shape: f32[1,64], index: 14, kind: input, shape index: {}]
  %s15 = inlined_call_operand.<no memory space> [shape: f32[1,1], index: 15, kind: input, shape index: {}]
  %s16 = inlined_call_operand.vmem [shape: f32[32,32], index: 16, kind: input, shape index: {}]
  %s17 = inlined_call_operand.hbm [shape: f32[2,8,64], index: 17, kind: output, shape index: {0}]
  %s18 = inlined_call_operand.hbm [shape: f32[2,4,64], index: 18, kind: output, shape index: {1}]
  %s19 = inlined_call_operand.hbm [shape: f32[2,2,48], index: 19, kind: output, shape index: {2}]
  %s20 = inlined_call_operand.hbm [shape: f32[2,1,32], index: 20, kind: output, shape index: {3}]
  %21 = xla_tuple %s17, %s18, %s19, %s20
  %s22 = sld [smem:[#allocation0]]
  $region145: #{tpu_custom_call.1} parent=0
    _
  %s24 = ssub.s32 1, %s22
  %s25 = scalar_select 0, %s24, %s22
  %v26 = vstv %s15
  %27 = vst [vmem:[#allocation4] sm:$0x1] %v26
  $region1: #{tpu_custom_call.1} parent=0
    #allocation5 [shape = 'u8[16384]{0}', space=vmem, size = 0x4000, scoped, tag = 'input window, operand 0']
    #allocation6 [shape = 's32[2]{0}', space=sflag, size = 0x8, scoped, tag = 'scoped memory for tpu_custom_call.1']
    #allocation7 [shape = 's32[2]{0}', space=sflag, size = 0x8, scoped, tag = 'scoped memory for tpu_custom_call.1']
    #allocation8 [shape = 'u8[4096]{0}', space=vmem, size = 0x1000, scoped, tag = 'input window, operand 3, single buffered']
    #allocation9 [shape = 's32[1]{0}', space=sflag, size = 0x4, scoped, tag = 'scoped memory for tpu_custom_call.1']
    #allocation10 [shape = 'u8[512]{0}', space=vmem, size = 0x400, scoped, tag = 'input window, operand 6, single buffered']
    #allocation11 [shape = 'u8[512]{0}', space=vmem, size = 0x400, scoped, tag = 'input window, operand 10, single buffered']
    #allocation12 [shape = 's32[1]{0}', space=sflag, size = 0x4, scoped, tag = 'scoped memory for tpu_custom_call.1']
    #allocation13 [shape = 'u8[1024]{0}', space=vmem, size = 0x400, scoped, tag = 'input window, operand 11, single buffered']
    #allocation14 [shape = 'u8[8192]{0}', space=vmem, size = 0x2000, scoped, tag = 'output window, operand 0']
    #allocation15 [shape = 'u8[4096]{0}', space=vmem, size = 0x1000, scoped, tag = 'output window, operand 1']
    #allocation16 [shape = 's32[2]{0}', space=sflag, size = 0x8, scoped, tag = 'scoped memory for tpu_custom_call.1']
    #allocation17 [shape = 'u8[2048]{0}', space=vmem, size = 0x800, scoped, tag = 'output window, operand 2']
    #allocation18 [shape = 'u8[1024]{0}', space=vmem, size = 0x400, scoped, tag = 'output window, operand 3']
    #allocation19 [shape = 's32[2]{0}', space=sflag, size = 0x8, scoped, tag = 'scoped memory for tpu_custom_call.1']
    %28 = vsyncpa [#allocation6], 0
    %s29 = scalar_lea.sflag [#allocation6], 1
    %30 = vsyncpa %s29, 0
    %31 = vsyncpa [#allocation9], 0
    %32 = vsyncpa [#allocation12], 0
    %33 = vsyncpa [#allocation7], 0
    %s34 = scalar_lea.sflag [#allocation7], 1
    %35 = vsyncpa %s34, 0
    %36 = vsyncpa [#allocation16], 0
    %s37 = scalar_lea.sflag [#allocation16], 1
    %38 = vsyncpa %s37, 0
    %39 = vsyncpa [#allocation19], 0
    %s40 = scalar_lea.sflag [#allocation19], 1
    %41 = vsyncpa %s40, 0
    loop: start=0, step=1, limit=4
    $region2: #{tpu_custom_call.1} parent=1 // loop_pre_header
      _
    $region3: #{tpu_custom_call.1} parent=1 // loop_header
      %s43 = sphi 0, %s47
      %p44 = scmp.ge.s32.totalorder %s43, 4
      %s53 = sphi 0, %s55
      %s56 = sphi 0, %s53
      %s57 = sphi 0, %s56
      %s73 = sphi 0, %s57
      %s77 = sphi 0, %s77
      %s79 = sphi 0, %s77
      %s80 = sphi 0, %s79
      %s94 = sphi 0, %s80
      %s98 = sphi 0, %s98
      %s100 = sphi 0, %s98
      %s101 = sphi 0, %s100
      %s115 = sphi 0, %s101
      %s119 = sphi 0, %s119
      %s121 = sphi 0, %s119
      %s122 = sphi 0, %s121
      %s136 = sphi 0, %s122
      %s140 = sphi 0, %s140
      %s142 = sphi 0, %s140
      %s143 = sphi 0, %s142
      %s157 = sphi 0, %s143
      %s161 = sphi 0, %s161
      %s163 = sphi 0, %s161
      %s164 = sphi 0, %s163
      %s178 = sphi 0, %s164
      %s182 = sphi 0, %s182
      %s184 = sphi 0, %s182
      %s185 = sphi 0, %s184
      %s199 = sphi 0, %s185
      %s203 = sphi 0, %s203
      %s205 = sphi 0, %s203
      %s206 = sphi 0, %s205
      %s220 = sphi 0, %s206
      %s224 = sphi 0, %s224
      %s226 = sphi 0, %s224
      %s227 = sphi 0, %s226
      %s241 = sphi 0, %s227
      %s245 = sphi 0, %s245
      %s247 = sphi 0, %s245
      %s248 = sphi 0, %s247
      %s262 = sphi 0, %s248
      %s266 = sphi 0, %s266
      %s268 = sphi 0, %s266
      %s269 = sphi 0, %s268
      %s283 = sphi 0, %s269
      %s287 = sphi 0, %s287
      %s289 = sphi 0, %s287
      %s290 = sphi 0, %s289
      %s304 = sphi 0, %s290
      %s308 = sphi 0, %s308
      %s310 = sphi 0, %s308
      %s311 = sphi 0, %s310
      %s325 = sphi 0, %s311
      %s329 = sphi 0, %s329
      %s331 = sphi 0, %s329
      %s332 = sphi 0, %s331
      %s346 = sphi 0, %s332
      %s350 = sphi 0, %s350
      %s352 = sphi 0, %s350
      %s353 = sphi 0, %s352
      %s367 = sphi 0, %s353
      %s371 = sphi 0, %s371
      %s373 = sphi 0, %s371
      %s374 = sphi 0, %s373
      %s388 = sphi 0, %s374
      %s392 = sphi 0, %s392
      %s394 = sphi 0, %s392
      %s395 = sphi 0, %s394
      %s409 = sphi 0, %s395
      %s415 = sphi 0, %s417
      %s418 = sphi 0, %s415
      %s419 = sphi 0, %s418
      %s435 = sphi 0, %s419
      %s441 = sphi 0, %s443
      %s444 = sphi 0, %s441
      %s445 = sphi 0, %s444
      %s461 = sphi 0, %s445
      %s467 = sphi 0, %s469
      %s470 = sphi 0, %s467
      %s471 = sphi 0, %s470
      %s487 = sphi 0, %s471
      %s493 = sphi 0, %s495
      %s496 = sphi 0, %s493
      %s497 = sphi 0, %s496
      %s513 = sphi 0, %s497
    $region4: #{tpu_custom_call.1} parent=1 // loop_header_branch
      %46 = sbr.rel (%p44) target = $region8
    $region5: #{tpu_custom_call.1} parent=1 // loop_body
      %s48 = ssub.s32 %s43, 1
      %s49 = ssub.s32 %s43, 2
      %s50 = sadd.s32 %s43, 1
      %s51 = ssub.s32 %s43, %s50
      %p52 = scmp.eq.s32.totalorder %s51, 0
      %s54 = sadd.s32 %s53, 1
      %s55 = scalar_select %p52, %s53, %s54
      %p58 = pneg %p52
      %p59 = scmp.eq.s32.totalorder %s43, 1
      %p60 = por %p58, %p59
      %p61 = scmp.ne.s32.totalorder %s53, %s56
      %p62 = scmp.eq.s32.totalorder %s43, 0
      %p63 = por %p61, %p62
      %p64 = scmp.ne.s32.totalorder %s53, %s56
      %p65 = scmp.eq.s32.totalorder %s48, 1
      %p66 = por %p64, %p65
      %p67 = scmp.ne.s32.totalorder %s56, %s57
      %p68 = scmp.eq.s32.totalorder %s48, 0
      %p69 = por %p67, %p68
      %p70 = scmp.ne.s32.totalorder %s56, %s57
      %p71 = scmp.eq.s32.totalorder %s49, 1
      %p72 = por %p70, %p71
      %p74 = scmp.ne.s32.totalorder %s57, %s73
      %p75 = scmp.eq.s32.totalorder %s49, 0
      %p76 = por %p74, %p75
      %s78 = sadd.s32 %s77, 1
      %p81 = scmp.eq.s32.totalorder %s43, 1
      %p82 = scmp.ne.s32.totalorder %s77, %s79
      %p83 = scmp.eq.s32.totalorder %s43, 0
      %p84 = por %p82, %p83
      %p85 = scmp.ne.s32.totalorder %s77, %s79
      %p86 = scmp.eq.s32.totalorder %s48, 1
      %p87 = por %p85, %p86
      %p88 = scmp.ne.s32.totalorder %s79, %s80
      %p89 = scmp.eq.s32.totalorder %s48, 0
      %p90 = por %p88, %p89
      %p91 = scmp.ne.s32.totalorder %s79, %s80
      %p92 = scmp.eq.s32.totalorder %s49, 1
      %p93 = por %p91, %p92
      %p95 = scmp.ne.s32.totalorder %s80, %s94
      %p96 = scmp.eq.s32.totalorder %s49, 0
      %p97 = por %p95, %p96
      %s99 = sadd.s32 %s98, 1
      %p102 = scmp.eq.s32.totalorder %s43, 1
      %p103 = scmp.ne.s32.totalorder %s98, %s100
      %p104 = scmp.eq.s32.totalorder %s43, 0
      %p105 = por %p103, %p104
      %p106 = scmp.ne.s32.totalorder %s98, %s100
      %p107 = scmp.eq.s32.totalorder %s48, 1
      %p108 = por %p106, %p107
      %p109 = scmp.ne.s32.totalorder %s100, %s101
      %p110 = scmp.eq.s32.totalorder %s48, 0
      %p111 = por %p109, %p110
      %p112 = scmp.ne.s32.totalorder %s100, %s101
      %p113 = scmp.eq.s32.totalorder %s49, 1
      %p114 = por %p112, %p113
      %p116 = scmp.ne.s32.totalorder %s101, %s115
      %p117 = scmp.eq.s32.totalorder %s49, 0
      %p118 = por %p116, %p117
      %s120 = sadd.s32 %s119, 1
      %p123 = scmp.eq.s32.totalorder %s43, 1
      %p124 = scmp.ne.s32.totalorder %s119, %s121
      %p125 = scmp.eq.s32.totalorder %s43, 0
      %p126 = por %p124, %p125
      %p127 = scmp.ne.s32.totalorder %s119, %s121
      %p128 = scmp.eq.s32.totalorder %s48, 1
      %p129 = por %p127, %p128
      %p130 = scmp.ne.s32.totalorder %s121, %s122
      %p131 = scmp.eq.s32.totalorder %s48, 0
      %p132 = por %p130, %p131
      %p133 = scmp.ne.s32.totalorder %s121, %s122
      %p134 = scmp.eq.s32.totalorder %s49, 1
      %p135 = por %p133, %p134
      %p137 = scmp.ne.s32.totalorder %s122, %s136
      %p138 = scmp.eq.s32.totalorder %s49, 0
      %p139 = por %p137, %p138
      %s141 = sadd.s32 %s140, 1
      %p144 = scmp.eq.s32.totalorder %s43, 1
      %p145 = scmp.ne.s32.totalorder %s140, %s142
      %p146 = scmp.eq.s32.totalorder %s43, 0
      %p147 = por %p145, %p146
      %p148 = scmp.ne.s32.totalorder %s140, %s142
      %p149 = scmp.eq.s32.totalorder %s48, 1
      %p150 = por %p148, %p149
      %p151 = scmp.ne.s32.totalorder %s142, %s143
      %p152 = scmp.eq.s32.totalorder %s48, 0
      %p153 = por %p151, %p152
      %p154 = scmp.ne.s32.totalorder %s142, %s143
      %p155 = scmp.eq.s32.totalorder %s49, 1
      %p156 = por %p154, %p155
      %p158 = scmp.ne.s32.totalorder %s143, %s157
      %p159 = scmp.eq.s32.totalorder %s49, 0
      %p160 = por %p158, %p159
      %s162 = sadd.s32 %s161, 1
      %p165 = scmp.eq.s32.totalorder %s43, 1
      %p166 = scmp.ne.s32.totalorder %s161, %s163
      %p167 = scmp.eq.s32.totalorder %s43, 0
      %p168 = por %p166, %p167
      %p169 = scmp.ne.s32.totalorder %s161, %s163
      %p170 = scmp.eq.s32.totalorder %s48, 1
      %p171 = por %p169, %p170
      %p172 = scmp.ne.s32.totalorder %s163, %s164
      %p173 = scmp.eq.s32.totalorder %s48, 0
      %p174 = por %p172, %p173
      %p175 = scmp.ne.s32.totalorder %s163, %s164
      %p176 = scmp.eq.s32.totalorder %s49, 1
      %p177 = por %p175, %p176
      %p179 = scmp.ne.s32.totalorder %s164, %s178
      %p180 = scmp.eq.s32.totalorder %s49, 0
      %p181 = por %p179, %p180
      %s183 = sadd.s32 %s182, 1
      %p186 = scmp.eq.s32.totalorder %s43, 1
      %p187 = scmp.ne.s32.totalorder %s182, %s184
      %p188 = scmp.eq.s32.totalorder %s43, 0
      %p189 = por %p187, %p188
      %p190 = scmp.ne.s32.totalorder %s182, %s184
      %p191 = scmp.eq.s32.totalorder %s48, 1
      %p192 = por %p190, %p191
      %p193 = scmp.ne.s32.totalorder %s184, %s185
      %p194 = scmp.eq.s32.totalorder %s48, 0
      %p195 = por %p193, %p194
      %p196 = scmp.ne.s32.totalorder %s184, %s185
      %p197 = scmp.eq.s32.totalorder %s49, 1
      %p198 = por %p196, %p197
      %p200 = scmp.ne.s32.totalorder %s185, %s199
      %p201 = scmp.eq.s32.totalorder %s49, 0
      %p202 = por %p200, %p201
      %s204 = sadd.s32 %s203, 1
      %p207 = scmp.eq.s32.totalorder %s43, 1
      %p208 = scmp.ne.s32.totalorder %s203, %s205
      %p209 = scmp.eq.s32.totalorder %s43, 0
      %p210 = por %p208, %p209
      %p211 = scmp.ne.s32.totalorder %s203, %s205
      %p212 = scmp.eq.s32.totalorder %s48, 1
      %p213 = por %p211, %p212
      %p214 = scmp.ne.s32.totalorder %s205, %s206
      %p215 = scmp.eq.s32.totalorder %s48, 0
      %p216 = por %p214, %p215
      %p217 = scmp.ne.s32.totalorder %s205, %s206
      %p218 = scmp.eq.s32.totalorder %s49, 1
      %p219 = por %p217, %p218
      %p221 = scmp.ne.s32.totalorder %s206, %s220
      %p222 = scmp.eq.s32.totalorder %s49, 0
      %p223 = por %p221, %p222
      %s225 = sadd.s32 %s224, 1
      %p228 = scmp.eq.s32.totalorder %s43, 1
      %p229 = scmp.ne.s32.totalorder %s224, %s226
      %p230 = scmp.eq.s32.totalorder %s43, 0
      %p231 = por %p229, %p230
      %p232 = scmp.ne.s32.totalorder %s224, %s226
      %p233 = scmp.eq.s32.totalorder %s48, 1
      %p234 = por %p232, %p233
      %p235 = scmp.ne.s32.totalorder %s226, %s227
      %p236 = scmp.eq.s32.totalorder %s48, 0
      %p237 = por %p235, %p236
      %p238 = scmp.ne.s32.totalorder %s226, %s227
      %p239 = scmp.eq.s32.totalorder %s49, 1
      %p240 = por %p238, %p239
      %p242 = scmp.ne.s32.totalorder %s227, %s241
      %p243 = scmp.eq.s32.totalorder %s49, 0
      %p244 = por %p242, %p243
      %s246 = sadd.s32 %s245, 1
      %p249 = scmp.eq.s32.totalorder %s43, 1
      %p250 = scmp.ne.s32.totalorder %s245, %s247
      %p251 = scmp.eq.s32.totalorder %s43, 0
      %p252 = por %p250, %p251
      %p253 = scmp.ne.s32.totalorder %s245, %s247
      %p254 = scmp.eq.s32.totalorder %s48, 1
      %p255 = por %p253, %p254
      %p256 = scmp.ne.s32.totalorder %s247, %s248
      %p257 = scmp.eq.s32.totalorder %s48, 0
      %p258 = por %p256, %p257
      %p259 = scmp.ne.s32.totalorder %s247, %s248
      %p260 = scmp.eq.s32.totalorder %s49, 1
      %p261 = por %p259, %p260
      %p263 = scmp.ne.s32.totalorder %s248, %s262
      %p264 = scmp.eq.s32.totalorder %s49, 0
      %p265 = por %p263, %p264
      %s267 = sadd.s32 %s266, 1
      %p270 = scmp.eq.s32.totalorder %s43, 1
      %p271 = scmp.ne.s32.totalorder %s266, %s268
      %p272 = scmp.eq.s32.totalorder %s43, 0
      %p273 = por %p271, %p272
      %p274 = scmp.ne.s32.totalorder %s266, %s268
      %p275 = scmp.eq.s32.totalorder %s48, 1
      %p276 = por %p274, %p275
      %p277 = scmp.ne.s32.totalorder %s268, %s269
      %p278 = scmp.eq.s32.totalorder %s48, 0
      %p279 = por %p277, %p278
      %p280 = scmp.ne.s32.totalorder %s268, %s269
      %p281 = scmp.eq.s32.totalorder %s49, 1
      %p282 = por %p280, %p281
      %p284 = scmp.ne.s32.totalorder %s269, %s283
      %p285 = scmp.eq.s32.totalorder %s49, 0
      %p286 = por %p284, %p285
      %s288 = sadd.s32 %s287, 1
      %p291 = scmp.eq.s32.totalorder %s43, 1
      %p292 = scmp.ne.s32.totalorder %s287, %s289
      %p293 = scmp.eq.s32.totalorder %s43, 0
      %p294 = por %p292, %p293
      %p295 = scmp.ne.s32.totalorder %s287, %s289
      %p296 = scmp.eq.s32.totalorder %s48, 1
      %p297 = por %p295, %p296
      %p298 = scmp.ne.s32.totalorder %s289, %s290
      %p299 = scmp.eq.s32.totalorder %s48, 0
      %p300 = por %p298, %p299
      %p301 = scmp.ne.s32.totalorder %s289, %s290
      %p302 = scmp.eq.s32.totalorder %s49, 1
      %p303 = por %p301, %p302
      %p305 = scmp.ne.s32.totalorder %s290, %s304
      %p306 = scmp.eq.s32.totalorder %s49, 0
      %p307 = por %p305, %p306
      %s309 = sadd.s32 %s308, 1
      %p312 = scmp.eq.s32.totalorder %s43, 1
      %p313 = scmp.ne.s32.totalorder %s308, %s310
      %p314 = scmp.eq.s32.totalorder %s43, 0
      %p315 = por %p313, %p314
      %p316 = scmp.ne.s32.totalorder %s308, %s310
      %p317 = scmp.eq.s32.totalorder %s48, 1
      %p318 = por %p316, %p317
      %p319 = scmp.ne.s32.totalorder %s310, %s311
      %p320 = scmp.eq.s32.totalorder %s48, 0
      %p321 = por %p319, %p320
      %p322 = scmp.ne.s32.totalorder %s310, %s311
      %p323 = scmp.eq.s32.totalorder %s49, 1
      %p324 = por %p322, %p323
      %p326 = scmp.ne.s32.totalorder %s311, %s325
      %p327 = scmp.eq.s32.totalorder %s49, 0
      %p328 = por %p326, %p327
      %s330 = sadd.s32 %s329, 1
      %p333 = scmp.eq.s32.totalorder %s43, 1
      %p334 = scmp.ne.s32.totalorder %s329, %s331
      %p335 = scmp.eq.s32.totalorder %s43, 0
      %p336 = por %p334, %p335
      %p337 = scmp.ne.s32.totalorder %s329, %s331
      %p338 = scmp.eq.s32.totalorder %s48, 1
      %p339 = por %p337, %p338
      %p340 = scmp.ne.s32.totalorder %s331, %s332
      %p341 = scmp.eq.s32.totalorder %s48, 0
      %p342 = por %p340, %p341
      %p343 = scmp.ne.s32.totalorder %s331, %s332
      %p344 = scmp.eq.s32.totalorder %s49, 1
      %p345 = por %p343, %p344
      %p347 = scmp.ne.s32.totalorder %s332, %s346
      %p348 = scmp.eq.s32.totalorder %s49, 0
      %p349 = por %p347, %p348
      %s351 = sadd.s32 %s350, 1
      %p354 = scmp.eq.s32.totalorder %s43, 1
      %p355 = scmp.ne.s32.totalorder %s350, %s352
      %p356 = scmp.eq.s32.totalorder %s43, 0
      %p357 = por %p355, %p356
      %p358 = scmp.ne.s32.totalorder %s350, %s352
      %p359 = scmp.eq.s32.totalorder %s48, 1
      %p360 = por %p358, %p359
      %p361 = scmp.ne.s32.totalorder %s352, %s353
      %p362 = scmp.eq.s32.totalorder %s48, 0
      %p363 = por %p361, %p362
      %p364 = scmp.ne.s32.totalorder %s352, %s353
      %p365 = scmp.eq.s32.totalorder %s49, 1
      %p366 = por %p364, %p365
      %p368 = scmp.ne.s32.totalorder %s353, %s367
      %p369 = scmp.eq.s32.totalorder %s49, 0
      %p370 = por %p368, %p369
      %s372 = sadd.s32 %s371, 1
      %p375 = scmp.eq.s32.totalorder %s43, 1
      %p376 = scmp.ne.s32.totalorder %s371, %s373
      %p377 = scmp.eq.s32.totalorder %s43, 0
      %p378 = por %p376, %p377
      %p379 = scmp.ne.s32.totalorder %s371, %s373
      %p380 = scmp.eq.s32.totalorder %s48, 1
      %p381 = por %p379, %p380
      %p382 = scmp.ne.s32.totalorder %s373, %s374
      %p383 = scmp.eq.s32.totalorder %s48, 0
      %p384 = por %p382, %p383
      %p385 = scmp.ne.s32.totalorder %s373, %s374
      %p386 = scmp.eq.s32.totalorder %s49, 1
      %p387 = por %p385, %p386
      %p389 = scmp.ne.s32.totalorder %s374, %s388
      %p390 = scmp.eq.s32.totalorder %s49, 0
      %p391 = por %p389, %p390
      %s393 = sadd.s32 %s392, 1
      %p396 = scmp.eq.s32.totalorder %s43, 1
      %p397 = scmp.ne.s32.totalorder %s392, %s394
      %p398 = scmp.eq.s32.totalorder %s43, 0
      %p399 = por %p397, %p398
      %p400 = scmp.ne.s32.totalorder %s392, %s394
      %p401 = scmp.eq.s32.totalorder %s48, 1
      %p402 = por %p400, %p401
      %p403 = scmp.ne.s32.totalorder %s394, %s395
      %p404 = scmp.eq.s32.totalorder %s48, 0
      %p405 = por %p403, %p404
      %p406 = scmp.ne.s32.totalorder %s394, %s395
      %p407 = scmp.eq.s32.totalorder %s49, 1
      %p408 = por %p406, %p407
      %p410 = scmp.ne.s32.totalorder %s395, %s409
      %p411 = scmp.eq.s32.totalorder %s49, 0
      %p412 = por %p410, %p411
      %s413 = ssub.s32 %s43, %s50
      %p414 = scmp.eq.s32.totalorder %s413, 0
      %s416 = sadd.s32 %s415, 1
      %s417 = scalar_select %p414, %s415, %s416
      %p420 = pneg %p414
      %p421 = scmp.eq.s32.totalorder %s43, 1
      %p422 = por %p420, %p421
      %p423 = scmp.ne.s32.totalorder %s415, %s418
      %p424 = scmp.eq.s32.totalorder %s43, 0
      %p425 = por %p423, %p424
      %p426 = scmp.ne.s32.totalorder %s415, %s418
      %p427 = scmp.eq.s32.totalorder %s48, 1
      %p428 = por %p426, %p427
      %p429 = scmp.ne.s32.totalorder %s418, %s419
      %p430 = scmp.eq.s32.totalorder %s48, 0
      %p431 = por %p429, %p430
      %p432 = scmp.ne.s32.totalorder %s418, %s419
      %p433 = scmp.eq.s32.totalorder %s49, 1
      %p434 = por %p432, %p433
      %p436 = scmp.ne.s32.totalorder %s419, %s435
      %p437 = scmp.eq.s32.totalorder %s49, 0
      %p438 = por %p436, %p437
      %s439 = ssub.s32 %s43, %s50
      %p440 = scmp.eq.s32.totalorder %s439, 0
      %s442 = sadd.s32 %s441, 1
      %s443 = scalar_select %p440, %s441, %s442
      %p446 = pneg %p440
      %p447 = scmp.eq.s32.totalorder %s43, 1
      %p448 = por %p446, %p447
      %p449 = scmp.ne.s32.totalorder %s441, %s444
      %p450 = scmp.eq.s32.totalorder %s43, 0
      %p451 = por %p449, %p450
      %p452 = scmp.ne.s32.totalorder %s441, %s444
      %p453 = scmp.eq.s32.totalorder %s48, 1
      %p454 = por %p452, %p453
      %p455 = scmp.ne.s32.totalorder %s444, %s445
      %p456 = scmp.eq.s32.totalorder %s48, 0
      %p457 = por %p455, %p456
      %p458 = scmp.ne.s32.totalorder %s444, %s445
      %p459 = scmp.eq.s32.totalorder %s49, 1
      %p460 = por %p458, %p459
      %p462 = scmp.ne.s32.totalorder %s445, %s461
      %p463 = scmp.eq.s32.totalorder %s49, 0
      %p464 = por %p462, %p463
      %s465 = ssub.s32 %s43, %s50
      %p466 = scmp.eq.s32.totalorder %s465, 0
      %s468 = sadd.s32 %s467, 1
      %s469 = scalar_select %p466, %s467, %s468
      %p472 = pneg %p466
      %p473 = scmp.eq.s32.totalorder %s43, 1
      %p474 = por %p472, %p473
      %p475 = scmp.ne.s32.totalorder %s467, %s470
      %p476 = scmp.eq.s32.totalorder %s43, 0
      %p477 = por %p475, %p476
      %p478 = scmp.ne.s32.totalorder %s467, %s470
      %p479 = scmp.eq.s32.totalorder %s48, 1
      %p480 = por %p478, %p479
      %p481 = scmp.ne.s32.totalorder %s470, %s471
      %p482 = scmp.eq.s32.totalorder %s48, 0
      %p483 = por %p481, %p482
      %p484 = scmp.ne.s32.totalorder %s470, %s471
      %p485 = scmp.eq.s32.totalorder %s49, 1
      %p486 = por %p484, %p485
      %p488 = scmp.ne.s32.totalorder %s471, %s487
      %p489 = scmp.eq.s32.totalorder %s49, 0
      %p490 = por %p488, %p489
      %s491 = ssub.s32 %s43, %s50
      %p492 = scmp.eq.s32.totalorder %s491, 0
      %s494 = sadd.s32 %s493, 1
      %s495 = scalar_select %p492, %s493, %s494
      %p498 = pneg %p492
      %p499 = scmp.eq.s32.totalorder %s43, 1
      %p500 = por %p498, %p499
      %p501 = scmp.ne.s32.totalorder %s493, %s496
      %p502 = scmp.eq.s32.totalorder %s43, 0
      %p503 = por %p501, %p502
      %p504 = scmp.ne.s32.totalorder %s493, %s496
      %p505 = scmp.eq.s32.totalorder %s48, 1
      %p506 = por %p504, %p505
      %p507 = scmp.ne.s32.totalorder %s496, %s497
      %p508 = scmp.eq.s32.totalorder %s48, 0
      %p509 = por %p507, %p508
      %p510 = scmp.ne.s32.totalorder %s496, %s497
      %p511 = scmp.eq.s32.totalorder %s49, 1
      %p512 = por %p510, %p511
      %p514 = scmp.ne.s32.totalorder %s497, %s513
      %p515 = scmp.eq.s32.totalorder %s49, 0
      %p516 = por %p514, %p515
      %p517 = scmp.le.s32.totalorder 1, %s43
      %p518 = scmp.lt.s32.totalorder %s43, 3
      %p519 = pnand %p517, %p518
      %p520 = pneg %p519
      // Predicated region
      $region9: #{tpu_custom_call.1} parent=5 // pred_check
        _
      $region10: #{tpu_custom_call.1} parent=5 // pred_check_branch
        %522 = sbr.rel (%p519) target = $region12
      $region11: #{tpu_custom_call.1} parent=5 // pred_region
        %s523 = ssub.s32 %s43, 1
        // Predicated region
        $region13: #{tpu_custom_call.1} parent=11 // pred_check
          %p524 = pneg %p90
        $region14: #{tpu_custom_call.1} parent=11 // pred_check_branch
          %526 = sbr.rel (%p524) target = $region16
        $region15: #{tpu_custom_call.1} parent=11 // pred_region
          _
        $region16: #{tpu_custom_call.1} parent=11 // pred_fallthru
          _
        // Predicated region
        $region17: #{tpu_custom_call.1} parent=11 // pred_check
          %p527 = pneg %p111
        $region18: #{tpu_custom_call.1} parent=11 // pred_check_branch
          %529 = sbr.rel (%p527) target = $region20
        $region19: #{tpu_custom_call.1} parent=11 // pred_region
          _
        $region20: #{tpu_custom_call.1} parent=11 // pred_fallthru
          _
        // Predicated region
        $region21: #{tpu_custom_call.1} parent=11 // pred_check
          %p530 = pneg %p132
        $region22: #{tpu_custom_call.1} parent=11 // pred_check_branch
          %532 = sbr.rel (%p530) target = $region24
        $region23: #{tpu_custom_call.1} parent=11 // pred_region
          %s534 = ssub.s32 128, 128
          %535 = vsyncadd [#allocation9], %s534
          %s537 = sshll.u32 [#allocation8], 4
          %s538 = int_to_ptr.vmem [resolvable:$true] %s537
          %540 = dma.hbm_to_vmem [thread:$0]  %s3, 128, %s538, [#allocation9]
        $region24: #{tpu_custom_call.1} parent=11 // pred_fallthru
          _
        // Predicated region
        $region25: #{tpu_custom_call.1} parent=11 // pred_check
          %p541 = pneg %p153
        $region26: #{tpu_custom_call.1} parent=11 // pred_check_branch
          %543 = sbr.rel (%p541) target = $region28
        $region27: #{tpu_custom_call.1} parent=11 // pred_region
          _
        $region28: #{tpu_custom_call.1} parent=11 // pred_fallthru
          _
        // Predicated region
        $region29: #{tpu_custom_call.1} parent=11 // pred_check
          %p544 = pneg %p174
        $region30: #{tpu_custom_call.1} parent=11 // pred_check_branch
          %546 = sbr.rel (%p544) target = $region32
        $region31: #{tpu_custom_call.1} parent=11 // pred_region
          _
        $region32: #{tpu_custom_call.1} parent=11 // pred_fallthru
          _
        // Predicated region
        $region33: #{tpu_custom_call.1} parent=11 // pred_check
          %p547 = pneg %p195
        $region34: #{tpu_custom_call.1} parent=11 // pred_check_branch
          %549 = sbr.rel (%p547) target = $region36
        $region35: #{tpu_custom_call.1} parent=11 // pred_region
          %s551 = ssub.s32 16, 16
          %552 = vsyncadd [#allocation9], %s551
          %s554 = sshll.u32 [#allocation10], 4
          %s555 = int_to_ptr.vmem [resolvable:$true] %s554
          %557 = dma.hbm_to_vmem [thread:$0]  %s6, 16, %s555, [#allocation9]
        $region36: #{tpu_custom_call.1} parent=11 // pred_fallthru
          _
        // Predicated region
        $region37: #{tpu_custom_call.1} parent=11 // pred_check
          %p558 = pneg %p216
        $region38: #{tpu_custom_call.1} parent=11 // pred_check_branch
          %560 = sbr.rel (%p558) target = $region40
        $region39: #{tpu_custom_call.1} parent=11 // pred_region
          _
        $region40: #{tpu_custom_call.1} parent=11 // pred_fallthru
          _
        // Predicated region
        $region41: #{tpu_custom_call.1} parent=11 // pred_check
          %p561 = pneg %p237
        $region42: #{tpu_custom_call.1} parent=11 // pred_check_branch
          %563 = sbr.rel (%p561) target = $region44
        $region43: #{tpu_custom_call.1} parent=11 // pred_region
          _
        $region44: #{tpu_custom_call.1} parent=11 // pred_fallthru
          _
        // Predicated region
        $region45: #{tpu_custom_call.1} parent=11 // pred_check
          %p564 = pneg %p258
        $region46: #{tpu_custom_call.1} parent=11 // pred_check_branch
          %566 = sbr.rel (%p564) target = $region48
        $region47: #{tpu_custom_call.1} parent=11 // pred_region
          _
        $region48: #{tpu_custom_call.1} parent=11 // pred_fallthru
          _
        // Predicated region
        $region49: #{tpu_custom_call.1} parent=11 // pred_check
          %p567 = pneg %p279
        $region50: #{tpu_custom_call.1} parent=11 // pred_check_branch
          %569 = sbr.rel (%p567) target = $region52
        $region51: #{tpu_custom_call.1} parent=11 // pred_region
          %s571 = ssub.s32 16, 16
          %572 = vsyncadd [#allocation12], %s571
          %s574 = sshll.u32 [#allocation11], 4
          %s575 = int_to_ptr.vmem [resolvable:$true] %s574
          %577 = dma.hbm_to_vmem [thread:$0]  %s10, 16, %s575, [#allocation12]
        $region52: #{tpu_custom_call.1} parent=11 // pred_fallthru
          _
        // Predicated region
        $region53: #{tpu_custom_call.1} parent=11 // pred_check
          %p578 = pneg %p300
        $region54: #{tpu_custom_call.1} parent=11 // pred_check_branch
          %580 = sbr.rel (%p578) target = $region56
        $region55: #{tpu_custom_call.1} parent=11 // pred_region
          %s582 = ssub.s32 32, 32
          %583 = vsyncadd [#allocation12], %s582
          %s585 = sshll.u32 [#allocation13], 4
          %s586 = int_to_ptr.vmem [resolvable:$true] %s585
          %588 = dma.hbm_to_vmem [thread:$0]  %s11, 32, %s586, [#allocation12]
        $region56: #{tpu_custom_call.1} parent=11 // pred_fallthru
          _
        // Predicated region
        $region57: #{tpu_custom_call.1} parent=11 // pred_check
          %p589 = pneg %p321
        $region58: #{tpu_custom_call.1} parent=11 // pred_check_branch
          %591 = sbr.rel (%p589) target = $region60
        $region59: #{tpu_custom_call.1} parent=11 // pred_region
          _
        $region60: #{tpu_custom_call.1} parent=11 // pred_fallthru
          _
        // Predicated region
        $region61: #{tpu_custom_call.1} parent=11 // pred_check
          %p592 = pneg %p342
        $region62: #{tpu_custom_call.1} parent=11 // pred_check_branch
          %594 = sbr.rel (%p592) target = $region64
        $region63: #{tpu_custom_call.1} parent=11 // pred_region
          _
        $region64: #{tpu_custom_call.1} parent=11 // pred_fallthru
          _
        // Predicated region
        $region65: #{tpu_custom_call.1} parent=11 // pred_check
          %p595 = pneg %p363
        $region66: #{tpu_custom_call.1} parent=11 // pred_check_branch
          %597 = sbr.rel (%p595) target = $region68
        $region67: #{tpu_custom_call.1} parent=11 // pred_region
          _
        $region68: #{tpu_custom_call.1} parent=11 // pred_fallthru
          _
        // Predicated region
        $region69: #{tpu_custom_call.1} parent=11 // pred_check
          %p598 = pneg %p384
        $region70: #{tpu_custom_call.1} parent=11 // pred_check_branch
          %600 = sbr.rel (%p598) target = $region72
        $region71: #{tpu_custom_call.1} parent=11 // pred_region
          _
        $region72: #{tpu_custom_call.1} parent=11 // pred_fallthru
          _
        // Predicated region
        $region73: #{tpu_custom_call.1} parent=11 // pred_check
          %p601 = pneg %p405
        $region74: #{tpu_custom_call.1} parent=11 // pred_check_branch
          %603 = sbr.rel (%p601) target = $region76
        $region75: #{tpu_custom_call.1} parent=11 // pred_region
          _
        $region76: #{tpu_custom_call.1} parent=11 // pred_fallthru
          _
      $region12: #{tpu_custom_call.1} parent=5 // pred_fallthru
        _
      %p604 = scmp.lt.s32.totalorder %s43, 2
      // Predicated region
      $region77: #{tpu_custom_call.1} parent=5 // pred_check
        %p605 = pneg %p604
      $region78: #{tpu_custom_call.1} parent=5 // pred_check_branch
        %607 = sbr.rel (%p605) target = $region80
      $region79: #{tpu_custom_call.1} parent=5 // pred_region
        // Predicated region
        $region81: #{tpu_custom_call.1} parent=79 // pred_check
          %p608 = pneg %p63
        $region82: #{tpu_custom_call.1} parent=79 // pred_check_branch
          %610 = sbr.rel (%p608) target = $region84
        $region83: #{tpu_custom_call.1} parent=79 // pred_region
          %s611 = sand.u32 %s53, 1
          %s612 = scalar_lea.sflag [#allocation6], %s611
          %s613 = sand.u32 %s53, 1
          %s614 = smul.addr %s613, 16
          %s615 = scalar_lea.vmem [#allocation5], %s614
          %s617 = ssub.s32 256, 256
          %618 = vsyncadd %s612, %s617
          %s619 = smul.addr %s43, 2
          %s620 = smul.addr %s619, 128
          %s621 = scalar_lea.hbm %s0, %s620
          %s622 = sshll.u32 %s615, 4
          %s623 = int_to_ptr.vmem [resolvable:$true] %s622
          %628 = dma.hbm_to_vmem [thread:$0]  %s621, 256, %s623, %s612, 128, 128, 8
        $region84: #{tpu_custom_call.1} parent=79 // pred_fallthru
          _
      $region80: #{tpu_custom_call.1} parent=5 // pred_fallthru
        _
      %p629 = scmp.le.s32.totalorder 1, %s43
      %p630 = scmp.lt.s32.totalorder %s43, 3
      %p631 = pnand %p629, %p630
      %p632 = pneg %p631
      // Predicated region
      $region85: #{tpu_custom_call.1} parent=5 // pred_check
        _
      $region86: #{tpu_custom_call.1} parent=5 // pred_check_branch
        %634 = sbr.rel (%p631) target = $region88
      $region87: #{tpu_custom_call.1} parent=5 // pred_region
        %s635 = ssub.s32 %s43, 1
        %s636 = sand.u32 %s56, 1
        %s637 = scalar_lea.sflag [#allocation6], %s636
        %s638 = sand.u32 %s56, 1
        %s639 = smul.addr %s638, 16
        %s640 = scalar_lea.vmem [#allocation5], %s639
        // Predicated region
        $region89: #{tpu_custom_call.1} parent=87 // pred_check
          %p641 = pneg %p69
        $region90: #{tpu_custom_call.1} parent=87 // pred_check_branch
          %643 = sbr.rel (%p641) target = $region92
        $region91: #{tpu_custom_call.1} parent=87 // pred_region
          %644 = dma.done %s637, 256
        $region92: #{tpu_custom_call.1} parent=87 // pred_fallthru
          _
        // Predicated region
        $region93: #{tpu_custom_call.1} parent=87 // pred_check
          %p645 = pneg %p132
        $region94: #{tpu_custom_call.1} parent=87 // pred_check_branch
          %647 = sbr.rel (%p645) target = $region96
        $region95: #{tpu_custom_call.1} parent=87 // pred_region
          %648 = dma.done [#allocation9], 128
        $region96: #{tpu_custom_call.1} parent=87 // pred_fallthru
          _
        // Predicated region
        $region97: #{tpu_custom_call.1} parent=87 // pred_check
          %p649 = pneg %p195
        $region98: #{tpu_custom_call.1} parent=87 // pred_check_branch
          %651 = sbr.rel (%p649) target = $region100
        $region99: #{tpu_custom_call.1} parent=87 // pred_region
          %652 = dma.done [#allocation9], 16
        $region100: #{tpu_custom_call.1} parent=87 // pred_fallthru
          _
        // Predicated region
        $region101: #{tpu_custom_call.1} parent=87 // pred_check
          %p653 = pneg %p279
        $region102: #{tpu_custom_call.1} parent=87 // pred_check_branch
          %655 = sbr.rel (%p653) target = $region104
        $region103: #{tpu_custom_call.1} parent=87 // pred_region
          %656 = dma.done [#allocation12], 16
        $region104: #{tpu_custom_call.1} parent=87 // pred_fallthru
          _
        // Predicated region
        $region105: #{tpu_custom_call.1} parent=87 // pred_check
          %p657 = pneg %p300
        $region106: #{tpu_custom_call.1} parent=87 // pred_check_branch
          %659 = sbr.rel (%p657) target = $region108
        $region107: #{tpu_custom_call.1} parent=87 // pred_region
          %660 = dma.done [#allocation12], 32
        $region108: #{tpu_custom_call.1} parent=87 // pred_fallthru
          _
        %s661 = sand.u32 %s56, 1
        %s662 = scalar_lea.sflag [#allocation6], %s661
        %s663 = sand.u32 %s56, 1
        %s664 = smul.addr %s663, 16
        %s665 = scalar_lea.vmem [#allocation5], %s664
        %p666 = pneg %p69
        %p667 = pneg %p66
        %p668 = pneg %p90
        %p669 = pneg %p87
        %p670 = pneg %p111
        %p671 = pneg %p108
        %p672 = pneg %p132
        %p673 = pneg %p129
        %p674 = pneg %p153
        %p675 = pneg %p150
        %p676 = pneg %p174
        %p677 = pneg %p171
        %p678 = pneg %p195
        %p679 = pneg %p192
        %p680 = pneg %p216
        %p681 = pneg %p213
        %p682 = pneg %p237
        %p683 = pneg %p234
        %p684 = pneg %p258
        %p685 = pneg %p255
        %p686 = pneg %p279
        %p687 = pneg %p276
        %p688 = pneg %p300
        %p689 = pneg %p297
        %p690 = pneg %p321
        %p691 = pneg %p318
        %p692 = pneg %p342
        %p693 = pneg %p339
        %p694 = pneg %p363
        %p695 = pneg %p360
        %p696 = pneg %p384
        %p697 = pneg %p381
        %p698 = pneg %p405
        %p699 = pneg %p402
        %p700 = pneg %p431
        %p701 = pneg %p428
        %s702 = sand.u32 %s418, 1
        %s703 = scalar_lea.sflag [#allocation7], %s702
        %s704 = sand.u32 %s418, 1
        %s705 = smul.addr %s704, 8
        %s706 = scalar_lea.vmem [#allocation14], %s705
        %p707 = pneg %p457
        %p708 = pneg %p454
        %s709 = sand.u32 %s48, 1
        %s710 = scalar_lea.sflag [#allocation16], %s709
        %s711 = sand.u32 %s444, 1
        %s712 = smul.addr %s711, 4
        %s713 = scalar_lea.vmem [#allocation15], %s712
        %p714 = pneg %p483
        %p715 = pneg %p480
        %s716 = sand.u32 %s48, 1
        %s717 = scalar_lea.sflag [#allocation16], %s716
        %s718 = sand.u32 %s470, 1
        %s719 = smul.addr %s718, 2
        %s720 = scalar_lea.vmem [#allocation17], %s719
        %p721 = pneg %p509
        %p722 = pneg %p506
        %s723 = sand.u32 %s496, 1
        %s724 = scalar_lea.sflag [#allocation19], %s723
        %s725 = sand.u32 %s496, 1
        %s726 = scalar_lea.vmem [#allocation18], %s725
        %v728 = vld [vmem:[%s640] sm:$0xff]
        %v729 = vld [vmem:[%s640 + $0x8] sm:$0xff]
        %vm730 = vcmask 516096
        %731 = vst.msk [vmem:[#allocation2] sm:$0x1] %vm730, 0.0
        %732 = vst.msk [vmem:[#allocation2 + $0x11] sm:$0x1] %vm730, 0.0
        %vm733 = vcmask 523264
        %734 = vst.msk [vmem:[#allocation2 + $0x1] sm:$0xff] %vm733, %v728
        %735 = vst.msk [vmem:[#allocation2 + $0x9] sm:$0xff] %vm733, %v729
        %v736 = vld [vmem:[#allocation2] sm:$0xff]
        %v737 = vld [vmem:[#allocation2 + $0x8] sm:$0xff]
        %v738 = vpack.c.bf16 %v737, %v736
        %v739 = vld [vmem:[%s1] sm:$0xf]
        %v740 = vld [vmem:[%s1 + $0x4] sm:$0xf]
        %v741 = vld [vmem:[%s1 + $0x8] sm:$0xf]
        %v742 = vld [vmem:[%s1 + $0xc] sm:$0xf]
        %v743 = vld [vmem:[%s1 + $0x10] sm:$0xf]
        %v744 = vld [vmem:[%s1 + $0x14] sm:$0xf]
        %v745 = vld [vmem:[%s1 + $0x18] sm:$0xf]
        %v746 = vld [vmem:[%s1 + $0x1c] sm:$0xf]
        %v755 = vunpack.c.l.b16 %v739
        %v756 = vunpack.c.l.b16 %v740
        %v757 = vunpack.c.l.b16 %v741
        %v758 = vunpack.c.l.b16 %v742
        %v759 = vunpack.c.l.b16 %v743
        %v760 = vunpack.c.l.b16 %v744
        %v761 = vunpack.c.l.b16 %v745
        %v762 = vunpack.c.l.b16 %v746
        %v763 = vpack.c.b16 %v756, %v755
        %v764 = vpack.c.b16 %v758, %v757
        %v765 = vpack.c.b16 %v760, %v759
        %v766 = vpack.c.b16 %v762, %v761
        %v772 = vsel %vm733, %v738, 0
        %774 = vmatprep.subr.bf16.mxu0 0
        %775 = vmatpush1.bf16.msra.mxu0 %v763
        %776 = vmatprep.subr.bf16.mxu0 0
        %777 = vmatpush1.bf16.msra.mxu0 %v764
        %778 = vmatprep.subr.bf16.mxu0 0
        %779 = vmatpush1.bf16.msra.mxu0 %v765
        %780 = vmatprep.subr.bf16.mxu0 0
        %781 = vmatpush1.bf16.msra.mxu0 %v766
        %782 = vmatprep.subr.bf16.mxu0 0
        %783 = vmatpush1.bf16.msra.mxu0 0
        %784 = vmatprep.subr.bf16.mxu0 0
        %785 = vmatpush1.bf16.msra.mxu0 0
        %786 = vmatprep.subr.bf16.mxu0 0
        %787 = vmatpush1.bf16.msra.mxu0 0
        %788 = vmatprep.subr.bf16.mxu0 0
        %789 = vmatpush1.bf16.msra.mxu0 0
        %790 = vmatprep.subr.bf16.mxu0 0
        %791 = vmatpush1.bf16.msra.mxu0 0
        %792 = vmatprep.subr.bf16.mxu0 0
        %793 = vmatpush1.bf16.msra.mxu0 0
        %794 = vmatprep.subr.bf16.mxu0 0
        %795 = vmatpush1.bf16.msra.mxu0 0
        %796 = vmatprep.subr.bf16.mxu0 0
        %797 = vmatpush1.bf16.msra.mxu0 0
        %798 = vmatprep.subr.bf16.mxu0 0
        %799 = vmatpush1.bf16.msra.mxu0 0
        %800 = vmatprep.subr.bf16.mxu0 0
        %801 = vmatpush1.bf16.msra.mxu0 0
        %802 = vmatprep.subr.bf16.mxu0 0
        %803 = vmatpush1.bf16.msra.mxu0 0
        %804 = vmatprep.subr.bf16.mxu0 0
        %805 = vmatpush1.bf16.msra.mxu0 0
        %806 = vmatprep.mubr.bf16.mxu0 0
        %807 = vmatmul.mubr.bf16.gmra.mrb[0].mxu0 %v772
        %v808 = vpop.f32.mrb[0].mxu0
        %v809 = vadd.f32 0.0, %v808
        %v810 = vpop.f32.mrb[0].mxu0
        %v811 = vpop.f32.mrb[0].mxu0
        %v812 = vadd.f32 0.0, %v811
        %v813 = vpop.f32.mrb[0].mxu0
        %814 = vdwg.mxu0
        %815 = vst [vmem:[#allocation3] sm:$0xff] %v809
        %816 = vst [vmem:[#allocation3 + $0x8] sm:$0xff] %v812
        %v817 = vld [vmem:[#allocation2 + $0x1] sm:$0xff]
        %v818 = vld [vmem:[#allocation2 + $0x9] sm:$0xff]
        %v819 = vpack.c.bf16 %v818, %v817
        %s820 = scalar_lea.vmem %s1, 32
        %v821 = vld [vmem:[%s820] sm:$0xf]
        %v822 = vld [vmem:[%s820 + $0x4] sm:$0xf]
        %v823 = vld [vmem:[%s820 + $0x8] sm:$0xf]
        %v824 = vld [vmem:[%s820 + $0xc] sm:$0xf]
        %v825 = vld [vmem:[%s820 + $0x10] sm:$0xf]
        %v826 = vld [vmem:[%s820 + $0x14] sm:$0xf]
        %v827 = vld [vmem:[%s820 + $0x18] sm:$0xf]
        %v828 = vld [vmem:[%s820 + $0x1c] sm:$0xf]
        %v837 = vunpack.c.l.b16 %v821
        %v838 = vunpack.c.l.b16 %v822
        %v839 = vunpack.c.l.b16 %v823
        %v840 = vunpack.c.l.b16 %v824
        %v841 = vunpack.c.l.b16 %v825
        %v842 = vunpack.c.l.b16 %v826
        %v843 = vunpack.c.l.b16 %v827
        %v844 = vunpack.c.l.b16 %v828
        %v845 = vpack.c.b16 %v838, %v837
        %v846 = vpack.c.b16 %v840, %v839
        %v847 = vpack.c.b16 %v842, %v841
        %v848 = vpack.c.b16 %v844, %v843
        %v854 = vsel %vm733, %v819, 0
        %856 = vmatprep.subr.bf16.mxu0 0
        %857 = vmatpush1.bf16.msra.mxu0 %v845
        %858 = vmatprep.subr.bf16.mxu0 0
        %859 = vmatpush1.bf16.msra.mxu0 %v846
        %860 = vmatprep.subr.bf16.mxu0 0
        %861 = vmatpush1.bf16.msra.mxu0 %v847
        %862 = vmatprep.subr.bf16.mxu0 0
        %863 = vmatpush1.bf16.msra.mxu0 %v848
        %864 = vmatprep.subr.bf16.mxu0 0
        %865 = vmatpush1.bf16.msra.mxu0 0
        %866 = vmatprep.subr.bf16.mxu0 0
        %867 = vmatpush1.bf16.msra.mxu0 0
        %868 = vmatprep.subr.bf16.mxu0 0
        %869 = vmatpush1.bf16.msra.mxu0 0
        %870 = vmatprep.subr.bf16.mxu0 0
        %871 = vmatpush1.bf16.msra.mxu0 0
        %872 = vmatprep.subr.bf16.mxu0 0
        %873 = vmatpush1.bf16.msra.mxu0 0
        %874 = vmatprep.subr.bf16.mxu0 0
        %875 = vmatpush1.bf16.msra.mxu0 0
        %876 = vmatprep.subr.bf16.mxu0 0
        %877 = vmatpush1.bf16.msra.mxu0 0
        %878 = vmatprep.subr.bf16.mxu0 0
        %879 = vmatpush1.bf16.msra.mxu0 0
        %880 = vmatprep.subr.bf16.mxu0 0
        %881 = vmatpush1.bf16.msra.mxu0 0
        %882 = vmatprep.subr.bf16.mxu0 0
        %883 = vmatpush1.bf16.msra.mxu0 0
        %884 = vmatprep.subr.bf16.mxu0 0
        %885 = vmatpush1.bf16.msra.mxu0 0
        %886 = vmatprep.subr.bf16.mxu0 0
        %887 = vmatpush1.bf16.msra.mxu0 0
        %888 = vmatprep.mubr.bf16.mxu0 0
        %889 = vmatmul.mubr.bf16.gmra.mrb[0].mxu0 %v854
        %v890 = vpop.f32.mrb[0].mxu0
        %v891 = vadd.f32 0.0, %v890
        %v892 = vpop.f32.mrb[0].mxu0
        %v893 = vpop.f32.mrb[0].mxu0
        %v894 = vadd.f32 0.0, %v893
        %v895 = vpop.f32.mrb[0].mxu0
        %896 = vdwg.mxu0
        %v897 = vld [vmem:[#allocation3] sm:$0xff]
        %v898 = vld [vmem:[#allocation3 + $0x8] sm:$0xff]
        %v899 = vadd.f32 %v897, %v891
        %v900 = vadd.f32 %v898, %v894
        %901 = vst [vmem:[#allocation3] sm:$0xff] %v899
        %902 = vst [vmem:[#allocation3 + $0x8] sm:$0xff] %v900
        %v903 = vld [vmem:[#allocation2 + $0x2] sm:$0xff]
        %v904 = vld [vmem:[#allocation2 + $0xa] sm:$0xff]
        %v905 = vpack.c.bf16 %v904, %v903
        %s906 = scalar_lea.vmem %s1, 64
        %v907 = vld [vmem:[%s906] sm:$0xf]
        %v908 = vld [vmem:[%s906 + $0x4] sm:$0xf]
        %v909 = vld [vmem:[%s906 + $0x8] sm:$0xf]
        %v910 = vld [vmem:[%s906 + $0xc] sm:$0xf]
        %v911 = vld [vmem:[%s906 + $0x10] sm:$0xf]
        %v912 = vld [vmem:[%s906 + $0x14] sm:$0xf]
        %v913 = vld [vmem:[%s906 + $0x18] sm:$0xf]
        %v914 = vld [vmem:[%s906 + $0x1c] sm:$0xf]
        %v923 = vunpack.c.l.b16 %v907
        %v924 = vunpack.c.l.b16 %v908
        %v925 = vunpack.c.l.b16 %v909
        %v926 = vunpack.c.l.b16 %v910
        %v927 = vunpack.c.l.b16 %v911
        %v928 = vunpack.c.l.b16 %v912
        %v929 = vunpack.c.l.b16 %v913
        %v930 = vunpack.c.l.b16 %v914
        %v931 = vpack.c.b16 %v924, %v923
        %v932 = vpack.c.b16 %v926, %v925
        %v933 = vpack.c.b16 %v928, %v927
        %v934 = vpack.c.b16 %v930, %v929
        %v940 = vsel %vm733, %v905, 0
        %942 = vmatprep.subr.bf16.mxu0 0
        %943 = vmatpush1.bf16.msra.mxu0 %v931
        %944 = vmatprep.subr.bf16.mxu0 0
        %945 = vmatpush1.bf16.msra.mxu0 %v932
        %946 = vmatprep.subr.bf16.mxu0 0
        %947 = vmatpush1.bf16.msra.mxu0 %v933
        %948 = vmatprep.subr.bf16.mxu0 0
        %949 = vmatpush1.bf16.msra.mxu0 %v934
        %950 = vmatprep.subr.bf16.mxu0 0
        %951 = vmatpush1.bf16.msra.mxu0 0
        %952 = vmatprep.subr.bf16.mxu0 0
        %953 = vmatpush1.bf16.msra.mxu0 0
        %954 = vmatprep.subr.bf16.mxu0 0
        %955 = vmatpush1.bf16.msra.mxu0 0
        %956 = vmatprep.subr.bf16.mxu0 0
        %957 = vmatpush1.bf16.msra.mxu0 0
        %958 = vmatprep.subr.bf16.mxu0 0
        %959 = vmatpush1.bf16.msra.mxu0 0
        %960 = vmatprep.subr.bf16.mxu0 0
        %961 = vmatpush1.bf16.msra.mxu0 0
        %962 = vmatprep.subr.bf16.mxu0 0
        %963 = vmatpush1.bf16.msra.mxu0 0
        %964 = vmatprep.subr.bf16.mxu0 0
        %965 = vmatpush1.bf16.msra.mxu0 0
        %966 = vmatprep.subr.bf16.mxu0 0
        %967 = vmatpush1.bf16.msra.mxu0 0
        %968 = vmatprep.subr.bf16.mxu0 0
        %969 = vmatpush1.bf16.msra.mxu0 0
        %970 = vmatprep.subr.bf16.mxu0 0
        %971 = vmatpush1.bf16.msra.mxu0 0
        %972 = vmatprep.subr.bf16.mxu0 0
        %973 = vmatpush1.bf16.msra.mxu0 0
        %974 = vmatprep.mubr.bf16.mxu0 0
        %975 = vmatmul.mubr.bf16.gmra.mrb[0].mxu0 %v940
        %v976 = vpop.f32.mrb[0].mxu0
        %v977 = vadd.f32 0.0, %v976
        %v978 = vpop.f32.mrb[0].mxu0
        %v979 = vpop.f32.mrb[0].mxu0
        %v980 = vadd.f32 0.0, %v979
        %v981 = vpop.f32.mrb[0].mxu0
        %982 = vdwg.mxu0
        %v983 = vld [vmem:[#allocation3] sm:$0xff]
        %v984 = vld [vmem:[#allocation3 + $0x8] sm:$0xff]
        %v985 = vadd.f32 %v983, %v977
        %v986 = vadd.f32 %v984, %v980
        %987 = vst [vmem:[#allocation3] sm:$0xff] %v985
        %988 = vst [vmem:[#allocation3 + $0x8] sm:$0xff] %v986
        %v989 = vld [vmem:[#allocation3] sm:$0xff]
        %v990 = vld [vmem:[#allocation3 + $0x8] sm:$0xff]
        %v991 = vld [vmem:[%s2] sm:$0x1]
        %v993 = vlaneseq
        %v994 = vshrl.u32 %v993, 7
        %v995 = vsub.s32 0, %v994
        %v996 = vrot.slane %v991, %v995
        %v998 = vadd.f32 %v989, %v996
        %v999 = vadd.f32 %v990, %v996
        %v1000 = vmax.f32 %v998, 0.0
        %v1001 = vmax.f32 %v999, 0.0
        %vm1004 = vcmask 1046528
        %v1005 = vrot.slane %v1000, 1
        %v1006 = vrot.slane %v1001, 1
        %v1007 = vsel %vm1004, %v1005, %v1006
        %v1010 = vmax.f32 %v1000, %v1007
        %v1011 = vmax.f32 %v1001, %v1006
        %v1012 = vld [vmem:[#allocation8] sm:$0xff]
        %vm1013 = vcmask 121856
        %v1015 = vsel %vm1013, %v1012, 0
        %v1018 = vsel %vm1004, %v1011, 0
        %1020 = vmatprep.subr.mxu0 0.0
        %1021 = vmatpush1.msra.mxu0 %v1010
        %1022 = vmatprep.subr.mxu0 0.0
        %1023 = vmatpush1.msra.mxu0 %v1018
        %1024 = vmatprep.subr.mxu0 0.0
        %1025 = vmatpush1.msra.mxu0 0.0
        %1026 = vmatprep.subr.mxu0 0.0
        %1027 = vmatpush1.msra.mxu0 0.0
        %1028 = vmatprep.subr.mxu0 0.0
        %1029 = vmatpush1.msra.mxu0 0.0
        %1030 = vmatprep.subr.mxu0 0.0
        %1031 = vmatpush1.msra.mxu0 0.0
        %1032 = vmatprep.subr.mxu0 0.0
        %1033 = vmatpush1.msra.mxu0 0.0
        %1034 = vmatprep.subr.mxu0 0.0
        %1035 = vmatpush1.msra.mxu0 0.0
        %1036 = vmatprep.subr.mxu0 0.0
        %1037 = vmatpush1.msra.mxu0 0.0
        %1038 = vmatprep.subr.mxu0 0.0
        %1039 = vmatpush1.msra.mxu0 0.0
        %1040 = vmatprep.subr.mxu0 0.0
        %1041 = vmatpush1.msra.mxu0 0.0
        %1042 = vmatprep.subr.mxu0 0.0
        %1043 = vmatpush1.msra.mxu0 0.0
        %1044 = vmatprep.subr.mxu0 0.0
        %1045 = vmatpush1.msra.mxu0 0.0
        %1046 = vmatprep.subr.mxu0 0.0
        %1047 = vmatpush1.msra.mxu0 0.0
        %1048 = vmatprep.subr.mxu0 0.0
        %1049 = vmatpush1.msra.mxu0 0.0
        %1050 = vmatprep.subr.mxu0 0.0
        %1051 = vmatpush1.msra.mxu0 0.0
        %1052 = vmatprep.subr.mxu0 0.0
        %1053 = vmatpush1.msra.mxu0 0.0
        %1054 = vmatprep.subr.mxu0 0.0
        %1055 = vmatpush1.msra.mxu0 0.0
        %1056 = vmatprep.subr.mxu0 0.0
        %1057 = vmatpush1.msra.mxu0 0.0
        %1058 = vmatprep.subr.mxu0 0.0
        %1059 = vmatpush1.msra.mxu0 0.0
        %1060 = vmatprep.subr.mxu0 0.0
        %1061 = vmatpush1.msra.mxu0 0.0
        %1062 = vmatprep.subr.mxu0 0.0
        %1063 = vmatpush1.msra.mxu0 0.0
        %1064 = vmatprep.subr.mxu0 0.0
        %1065 = vmatpush1.msra.mxu0 0.0
        %1066 = vmatprep.subr.mxu0 0.0
        %1067 = vmatpush1.msra.mxu0 0.0
        %1068 = vmatprep.subr.mxu0 0.0
        %1069 = vmatpush1.msra.mxu0 0.0
        %1070 = vmatprep.subr.mxu0 0.0
        %1071 = vmatpush1.msra.mxu0 0.0
        %1072 = vmatprep.subr.mxu0 0.0
        %1073 = vmatpush1.msra.mxu0 0.0
        %1074 = vmatprep.subr.mxu0 0.0
        %1075 = vmatpush1.msra.mxu0 0.0
        %1076 = vmatprep.subr.mxu0 0.0
        %1077 = vmatpush1.msra.mxu0 0.0
        %1078 = vmatprep.subr.mxu0 0.0
        %1079 = vmatpush1.msra.mxu0 0.0
        %1080 = vmatprep.subr.mxu0 0.0
        %1081 = vmatpush1.msra.mxu0 0.0
        %1082 = vmatprep.subr.mxu0 0.0
        %1083 = vmatpush1.msra.mxu0 0.0
        %1084 = vmatprep.mubr.f32.mxu0 0.0
        %1085 = vmatmul.mubr.f32.gmra.mrb[0].mxu0 %v1015
        %v1086 = vpop.f32.mrb[0].mxu0
        %v1087 = vadd.f32 0.0, %v1086
        %v1088 = vpop.f32.mrb[0].mxu0
        %1089 = vdwg.mxu0
        %1091 = vrot.lane.b32.xlu0 %v1087, 120
        %v1092 = vpop.permute.xlu0 %1091
        %v1094 = vmax.f32 %v1087, %v1092
        %v1095 = vld [vmem:[%s4] sm:$0xff]
        %v1096 = vld [vmem:[%s4 + $0x8] sm:$0xff]
        %v1097 = vld [vmem:[%s4 + $0x10] sm:$0xff]
        %v1098 = vld [vmem:[%s4 + $0x18] sm:$0xff]
        %v1099 = vld [vmem:[%s4 + $0x20] sm:$0xff]
        %v1100 = vld [vmem:[%s4 + $0x28] sm:$0xff]
        %v1101 = vld [vmem:[%s4 + $0x30] sm:$0xff]
        %v1102 = vld [vmem:[%s4 + $0x38] sm:$0xff]
        %v1103 = vld [vmem:[%s4 + $0x40] sm:$0xff]
        %v1104 = vld [vmem:[%s4 + $0x48] sm:$0xff]
        %v1105 = vld [vmem:[%s4 + $0x50] sm:$0xff]
        %v1106 = vld [vmem:[%s4 + $0x58] sm:$0xff]
        %v1107 = vld [vmem:[%s4 + $0x60] sm:$0xff]
        %v1108 = vld [vmem:[%s4 + $0x68] sm:$0xff]
        %v1109 = vld [vmem:[%s4 + $0x70] sm:$0xff]
        %vm1110 = vcmask 982016
        %v1112 = vsel %vm1110, %v1094, 0
        %1114 = vmatprep.subr.mxu0 0.0
        %1115 = vmatpush1.msra.mxu0 %v1095
        %1116 = vmatprep.subr.mxu0 0.0
        %1117 = vmatpush1.msra.mxu0 %v1096
        %1118 = vmatprep.subr.mxu0 0.0
        %1119 = vmatpush1.msra.mxu0 %v1097
        %1120 = vmatprep.subr.mxu0 0.0
        %1121 = vmatpush1.msra.mxu0 %v1098
        %1122 = vmatprep.subr.mxu0 0.0
        %1123 = vmatpush1.msra.mxu0 %v1099
        %1124 = vmatprep.subr.mxu0 0.0
        %1125 = vmatpush1.msra.mxu0 %v1100
        %1126 = vmatprep.subr.mxu0 0.0
        %1127 = vmatpush1.msra.mxu0 %v1101
        %1128 = vmatprep.subr.mxu0 0.0
        %1129 = vmatpush1.msra.mxu0 %v1102
        %1130 = vmatprep.subr.mxu0 0.0
        %1131 = vmatpush1.msra.mxu0 %v1103
        %1132 = vmatprep.subr.mxu0 0.0
        %1133 = vmatpush1.msra.mxu0 %v1104
        %1134 = vmatprep.subr.mxu0 0.0
        %1135 = vmatpush1.msra.mxu0 %v1105
        %1136 = vmatprep.subr.mxu0 0.0
        %1137 = vmatpush1.msra.mxu0 %v1106
        %1138 = vmatprep.subr.mxu0 0.0
        %1139 = vmatpush1.msra.mxu0 %v1107
        %1140 = vmatprep.subr.mxu0 0.0
        %1141 = vmatpush1.msra.mxu0 %v1108
        %1142 = vmatprep.subr.mxu0 0.0
        %1143 = vmatpush1.msra.mxu0 %v1109
        %1144 = vmatprep.subr.mxu0 0.0
        %1145 = vmatpush1.msra.mxu0 0.0
        %1146 = vmatprep.subr.mxu0 0.0
        %1147 = vmatpush1.msra.mxu0 0.0
        %1148 = vmatprep.subr.mxu0 0.0
        %1149 = vmatpush1.msra.mxu0 0.0
        %1150 = vmatprep.subr.mxu0 0.0
        %1151 = vmatpush1.msra.mxu0 0.0
        %1152 = vmatprep.subr.mxu0 0.0
        %1153 = vmatpush1.msra.mxu0 0.0
        %1154 = vmatprep.subr.mxu0 0.0
        %1155 = vmatpush1.msra.mxu0 0.0
        %1156 = vmatprep.subr.mxu0 0.0
        %1157 = vmatpush1.msra.mxu0 0.0
        %1158 = vmatprep.subr.mxu0 0.0
        %1159 = vmatpush1.msra.mxu0 0.0
        %1160 = vmatprep.subr.mxu0 0.0
        %1161 = vmatpush1.msra.mxu0 0.0
        %1162 = vmatprep.subr.mxu0 0.0
        %1163 = vmatpush1.msra.mxu0 0.0
        %1164 = vmatprep.subr.mxu0 0.0
        %1165 = vmatpush1.msra.mxu0 0.0
        %1166 = vmatprep.subr.mxu0 0.0
        %1167 = vmatpush1.msra.mxu0 0.0
        %1168 = vmatprep.subr.mxu0 0.0
        %1169 = vmatpush1.msra.mxu0 0.0
        %1170 = vmatprep.subr.mxu0 0.0
        %1171 = vmatpush1.msra.mxu0 0.0
        %1172 = vmatprep.subr.mxu0 0.0
        %1173 = vmatpush1.msra.mxu0 0.0
        %1174 = vmatprep.subr.mxu0 0.0
        %1175 = vmatpush1.msra.mxu0 0.0
        %1176 = vmatprep.subr.mxu0 0.0
        %1177 = vmatpush1.msra.mxu0 0.0
        %1178 = vmatprep.mubr.f32.mxu0 0.0
        %1179 = vmatmul.mubr.f32.gmra.mrb[0].mxu0 %v1112
        %v1180 = vpop.f32.mrb[0].mxu0
        %v1181 = vadd.f32 0.0, %v1180
        %v1182 = vpop.f32.mrb[0].mxu0
        %1183 = vdwg.mxu0
        %1184 = vst.msk [vmem:[%s706] sm:$0xff] %vm733, %v1181
        %1185 = vst.msk [vmem:[#allocation2] sm:$0x1] %vm730, 0.0
        %1186 = vst.msk [vmem:[#allocation2 + $0x9] sm:$0x1] %vm730, 0.0
        %1187 = vst.msk [vmem:[#allocation2 + $0x1] sm:$0xff] %vm733, %v1181
        %v1188 = vld [vmem:[#allocation2] sm:$0xff]
        %v1189 = vpack.c.bf16 %v1188, %v1188
        %v1190 = vld [vmem:[%s5] sm:$0xf]
        %v1191 = vld [vmem:[%s5 + $0x4] sm:$0xf]
        %v1192 = vld [vmem:[%s5 + $0x8] sm:$0xf]
        %v1193 = vld [vmem:[%s5 + $0xc] sm:$0xf]
        %v1194 = vld [vmem:[%s5 + $0x10] sm:$0xf]
        %v1195 = vld [vmem:[%s5 + $0x14] sm:$0xf]
        %v1196 = vld [vmem:[%s5 + $0x18] sm:$0xf]
        %v1197 = vld [vmem:[%s5 + $0x1c] sm:$0xf]
        %v1206 = vunpack.c.l.b16 %v1190
        %v1207 = vunpack.c.l.b16 %v1191
        %v1208 = vunpack.c.l.b16 %v1192
        %v1209 = vunpack.c.l.b16 %v1193
        %v1210 = vunpack.c.l.b16 %v1194
        %v1211 = vunpack.c.l.b16 %v1195
        %v1212 = vunpack.c.l.b16 %v1196
        %v1213 = vunpack.c.l.b16 %v1197
        %v1214 = vpack.c.b16 %v1207, %v1206
        %v1215 = vpack.c.b16 %v1209, %v1208
        %v1216 = vpack.c.b16 %v1211, %v1210
        %v1217 = vpack.c.b16 %v1213, %v1212
        %v1223 = vsel %vm733, %v1189, 0
        %1225 = vmatprep.subr.bf16.mxu0 0
        %1226 = vmatpush1.bf16.msra.mxu0 %v1214
        %1227 = vmatprep.subr.bf16.mxu0 0
        %1228 = vmatpush1.bf16.msra.mxu0 %v1215
        %1229 = vmatprep.subr.bf16.mxu0 0
        %1230 = vmatpush1.bf16.msra.mxu0 %v1216
        %1231 = vmatprep.subr.bf16.mxu0 0
        %1232 = vmatpush1.bf16.msra.mxu0 %v1217
        %1233 = vmatprep.subr.bf16.mxu0 0
        %1234 = vmatpush1.bf16.msra.mxu0 0
        %1235 = vmatprep.subr.bf16.mxu0 0
        %1236 = vmatpush1.bf16.msra.mxu0 0
        %1237 = vmatprep.subr.bf16.mxu0 0
        %1238 = vmatpush1.bf16.msra.mxu0 0
        %1239 = vmatprep.subr.bf16.mxu0 0
        %1240 = vmatpush1.bf16.msra.mxu0 0
        %1241 = vmatprep.subr.bf16.mxu0 0
        %1242 = vmatpush1.bf16.msra.mxu0 0
        %1243 = vmatprep.subr.bf16.mxu0 0
        %1244 = vmatpush1.bf16.msra.mxu0 0
        %1245 = vmatprep.subr.bf16.mxu0 0
        %1246 = vmatpush1.bf16.msra.mxu0 0
        %1247 = vmatprep.subr.bf16.mxu0 0
        %1248 = vmatpush1.bf16.msra.mxu0 0
        %1249 = vmatprep.subr.bf16.mxu0 0
        %1250 = vmatpush1.bf16.msra.mxu0 0
        %1251 = vmatprep.subr.bf16.mxu0 0
        %1252 = vmatpush1.bf16.msra.mxu0 0
        %1253 = vmatprep.subr.bf16.mxu0 0
        %1254 = vmatpush1.bf16.msra.mxu0 0
        %1255 = vmatprep.subr.bf16.mxu0 0
        %1256 = vmatpush1.bf16.msra.mxu0 0
        %1257 = vmatprep.mubr.bf16.mxu0 0
        %1258 = vmatmul.mubr.bf16.gmra.mrb[0].mxu0 %v1223
        %v1259 = vpop.f32.mrb[0].mxu0
        %v1260 = vadd.f32 0.0, %v1259
        %v1261 = vpop.f32.mrb[0].mxu0
        %v1262 = vpop.f32.mrb[0].mxu0
        %v1263 = vpop.f32.mrb[0].mxu0
        %1264 = vdwg.mxu0
        %1265 = vst [vmem:[#allocation3] sm:$0xff] %v1260
        %v1266 = vld [vmem:[#allocation2 + $0x1] sm:$0xff]
        %v1267 = vpack.c.bf16 %v1266, %v1266
        %s1268 = scalar_lea.vmem %s5, 32
        %v1269 = vld [vmem:[%s1268] sm:$0xf]
        %v1270 = vld [vmem:[%s1268 + $0x4] sm:$0xf]
        %v1271 = vld [vmem:[%s1268 + $0x8] sm:$0xf]
        %v1272 = vld [vmem:[%s1268 + $0xc] sm:$0xf]
        %v1273 = vld [vmem:[%s1268 + $0x10] sm:$0xf]
        %v1274 = vld [vmem:[%s1268 + $0x14] sm:$0xf]
        %v1275 = vld [vmem:[%s1268 + $0x18] sm:$0xf]
        %v1276 = vld [vmem:[%s1268 + $0x1c] sm:$0xf]
        %v1285 = vunpack.c.l.b16 %v1269
        %v1286 = vunpack.c.l.b16 %v1270
        %v1287 = vunpack.c.l.b16 %v1271
        %v1288 = vunpack.c.l.b16 %v1272
        %v1289 = vunpack.c.l.b16 %v1273
        %v1290 = vunpack.c.l.b16 %v1274
        %v1291 = vunpack.c.l.b16 %v1275
        %v1292 = vunpack.c.l.b16 %v1276
        %v1293 = vpack.c.b16 %v1286, %v1285
        %v1294 = vpack.c.b16 %v1288, %v1287
        %v1295 = vpack.c.b16 %v1290, %v1289
        %v1296 = vpack.c.b16 %v1292, %v1291
        %v1302 = vsel %vm733, %v1267, 0
        %1304 = vmatprep.subr.bf16.mxu0 0
        %1305 = vmatpush1.bf16.msra.mxu0 %v1293
        %1306 = vmatprep.subr.bf16.mxu0 0
        %1307 = vmatpush1.bf16.msra.mxu0 %v1294
        %1308 = vmatprep.subr.bf16.mxu0 0
        %1309 = vmatpush1.bf16.msra.mxu0 %v1295
        %1310 = vmatprep.subr.bf16.mxu0 0
        %1311 = vmatpush1.bf16.msra.mxu0 %v1296
        %1312 = vmatprep.subr.bf16.mxu0 0
        %1313 = vmatpush1.bf16.msra.mxu0 0
        %1314 = vmatprep.subr.bf16.mxu0 0
        %1315 = vmatpush1.bf16.msra.mxu0 0
        %1316 = vmatprep.subr.bf16.mxu0 0
        %1317 = vmatpush1.bf16.msra.mxu0 0
        %1318 = vmatprep.subr.bf16.mxu0 0
        %1319 = vmatpush1.bf16.msra.mxu0 0
        %1320 = vmatprep.subr.bf16.mxu0 0
        %1321 = vmatpush1.bf16.msra.mxu0 0
        %1322 = vmatprep.subr.bf16.mxu0 0
        %1323 = vmatpush1.bf16.msra.mxu0 0
        %1324 = vmatprep.subr.bf16.mxu0 0
        %1325 = vmatpush1.bf16.msra.mxu0 0
        %1326 = vmatprep.subr.bf16.mxu0 0
        %1327 = vmatpush1.bf16.msra.mxu0 0
        %1328 = vmatprep.subr.bf16.mxu0 0
        %1329 = vmatpush1.bf16.msra.mxu0 0
        %1330 = vmatprep.subr.bf16.mxu0 0
        %1331 = vmatpush1.bf16.msra.mxu0 0
        %1332 = vmatprep.subr.bf16.mxu0 0
        %1333 = vmatpush1.bf16.msra.mxu0 0
        %1334 = vmatprep.subr.bf16.mxu0 0
        %1335 = vmatpush1.bf16.msra.mxu0 0
        %1336 = vmatprep.mubr.bf16.mxu0 0
        %1337 = vmatmul.mubr.bf16.gmra.mrb[0].mxu0 %v1302
        %v1338 = vpop.f32.mrb[0].mxu0
        %v1339 = vadd.f32 0.0, %v1338
        %v1340 = vpop.f32.mrb[0].mxu0
        %v1341 = vpop.f32.mrb[0].mxu0
        %v1342 = vpop.f32.mrb[0].mxu0
        %1343 = vdwg.mxu0
        %v1344 = vld [vmem:[#allocation3] sm:$0xff]
        %v1345 = vadd.f32 %v1344, %v1339
        %1346 = vst [vmem:[#allocation3] sm:$0xff] %v1345
        %v1347 = vld [vmem:[#allocation2 + $0x2] sm:$0xff]
        %v1348 = vpack.c.bf16 %v1347, %v1347
        %s1349 = scalar_lea.vmem %s5, 64
        %v1350 = vld [vmem:[%s1349] sm:$0xf]
        %v1351 = vld [vmem:[%s1349 + $0x4] sm:$0xf]
        %v1352 = vld [vmem:[%s1349 + $0x8] sm:$0xf]
        %v1353 = vld [vmem:[%s1349 + $0xc] sm:$0xf]
        %v1354 = vld [vmem:[%s1349 + $0x10] sm:$0xf]
        %v1355 = vld [vmem:[%s1349 + $0x14] sm:$0xf]
        %v1356 = vld [vmem:[%s1349 + $0x18] sm:$0xf]
        %v1357 = vld [vmem:[%s1349 + $0x1c] sm:$0xf]
        %v1366 = vunpack.c.l.b16 %v1350
        %v1367 = vunpack.c.l.b16 %v1351
        %v1368 = vunpack.c.l.b16 %v1352
        %v1369 = vunpack.c.l.b16 %v1353
        %v1370 = vunpack.c.l.b16 %v1354
        %v1371 = vunpack.c.l.b16 %v1355
        %v1372 = vunpack.c.l.b16 %v1356
        %v1373 = vunpack.c.l.b16 %v1357
        %v1374 = vpack.c.b16 %v1367, %v1366
        %v1375 = vpack.c.b16 %v1369, %v1368
        %v1376 = vpack.c.b16 %v1371, %v1370
        %v1377 = vpack.c.b16 %v1373, %v1372
        %v1383 = vsel %vm733, %v1348, 0
        %1385 = vmatprep.subr.bf16.mxu0 0
        %1386 = vmatpush1.bf16.msra.mxu0 %v1374
        %1387 = vmatprep.subr.bf16.mxu0 0
        %1388 = vmatpush1.bf16.msra.mxu0 %v1375
        %1389 = vmatprep.subr.bf16.mxu0 0
        %1390 = vmatpush1.bf16.msra.mxu0 %v1376
        %1391 = vmatprep.subr.bf16.mxu0 0
        %1392 = vmatpush1.bf16.msra.mxu0 %v1377
        %1393 = vmatprep.subr.bf16.mxu0 0
        %1394 = vmatpush1.bf16.msra.mxu0 0
        %1395 = vmatprep.subr.bf16.mxu0 0
        %1396 = vmatpush1.bf16.msra.mxu0 0
        %1397 = vmatprep.subr.bf16.mxu0 0
        %1398 = vmatpush1.bf16.msra.mxu0 0
        %1399 = vmatprep.subr.bf16.mxu0 0
        %1400 = vmatpush1.bf16.msra.mxu0 0
        %1401 = vmatprep.subr.bf16.mxu0 0
        %1402 = vmatpush1.bf16.msra.mxu0 0
        %1403 = vmatprep.subr.bf16.mxu0 0
        %1404 = vmatpush1.bf16.msra.mxu0 0
        %1405 = vmatprep.subr.bf16.mxu0 0
        %1406 = vmatpush1.bf16.msra.mxu0 0
        %1407 = vmatprep.subr.bf16.mxu0 0
        %1408 = vmatpush1.bf16.msra.mxu0 0
        %1409 = vmatprep.subr.bf16.mxu0 0
        %1410 = vmatpush1.bf16.msra.mxu0 0
        %1411 = vmatprep.subr.bf16.mxu0 0
        %1412 = vmatpush1.bf16.msra.mxu0 0
        %1413 = vmatprep.subr.bf16.mxu0 0
        %1414 = vmatpush1.bf16.msra.mxu0 0
        %1415 = vmatprep.subr.bf16.mxu0 0
        %1416 = vmatpush1.bf16.msra.mxu0 0
        %1417 = vmatprep.mubr.bf16.mxu0 0
        %1418 = vmatmul.mubr.bf16.gmra.mrb[0].mxu0 %v1383
        %v1419 = vpop.f32.mrb[0].mxu0
        %v1420 = vadd.f32 0.0, %v1419
        %v1421 = vpop.f32.mrb[0].mxu0
        %v1422 = vpop.f32.mrb[0].mxu0
        %v1423 = vpop.f32.mrb[0].mxu0
        %1424 = vdwg.mxu0
        %v1425 = vld [vmem:[#allocation3] sm:$0xff]
        %v1426 = vadd.f32 %v1425, %v1420
        %1427 = vst [vmem:[#allocation3] sm:$0xff] %v1426
        %v1428 = vld [vmem:[#allocation3] sm:$0xff]
        %v1429 = vld [vmem:[#allocation10] sm:$0x1]
        %v1431 = vlaneseq
        %v1432 = vshrl.u32 %v1431, 7
        %v1433 = vsub.s32 0, %v1432
        %v1434 = vrot.slane %v1429, %v1433
        %v1436 = vadd.f32 %v1428, %v1434
        %v1437 = vmax.f32 %v1436, 0.0
        %v1439 = vrot.slane %v1437, 1
        %v1441 = vmax.f32 %v1437, %v1439
        %v1442 = vld [vmem:[%s7] sm:$0xf]
        %vm1443 = vcmask 56320
        %v1445 = vsel %vm1443, %v1442, 0
        %v1448 = vsel %vm1004, %v1441, 0
        %1450 = vmatprep.subr.mxu0 0.0
        %1451 = vmatpush1.msra.mxu0 %v1448
        %1452 = vmatprep.subr.mxu0 0.0
        %1453 = vmatpush1.msra.mxu0 0.0
        %1454 = vmatprep.subr.mxu0 0.0
        %1455 = vmatpush1.msra.mxu0 0.0
        %1456 = vmatprep.subr.mxu0 0.0
        %1457 = vmatpush1.msra.mxu0 0.0
        %1458 = vmatprep.subr.mxu0 0.0
        %1459 = vmatpush1.msra.mxu0 0.0
        %1460 = vmatprep.subr.mxu0 0.0
        %1461 = vmatpush1.msra.mxu0 0.0
        %1462 = vmatprep.subr.mxu0 0.0
        %1463 = vmatpush1.msra.mxu0 0.0
        %1464 = vmatprep.subr.mxu0 0.0
        %1465 = vmatpush1.msra.mxu0 0.0
        %1466 = vmatprep.subr.mxu0 0.0
        %1467 = vmatpush1.msra.mxu0 0.0
        %1468 = vmatprep.subr.mxu0 0.0
        %1469 = vmatpush1.msra.mxu0 0.0
        %1470 = vmatprep.subr.mxu0 0.0
        %1471 = vmatpush1.msra.mxu0 0.0
        %1472 = vmatprep.subr.mxu0 0.0
        %1473 = vmatpush1.msra.mxu0 0.0
        %1474 = vmatprep.subr.mxu0 0.0
        %1475 = vmatpush1.msra.mxu0 0.0
        %1476 = vmatprep.subr.mxu0 0.0
        %1477 = vmatpush1.msra.mxu0 0.0
        %1478 = vmatprep.subr.mxu0 0.0
        %1479 = vmatpush1.msra.mxu0 0.0
        %1480 = vmatprep.subr.mxu0 0.0
        %1481 = vmatpush1.msra.mxu0 0.0
        %1482 = vmatprep.subr.mxu0 0.0
        %1483 = vmatpush1.msra.mxu0 0.0
        %1484 = vmatprep.subr.mxu0 0.0
        %1485 = vmatpush1.msra.mxu0 0.0
        %1486 = vmatprep.subr.mxu0 0.0
        %1487 = vmatpush1.msra.mxu0 0.0
        %1488 = vmatprep.subr.mxu0 0.0
        %1489 = vmatpush1.msra.mxu0 0.0
        %1490 = vmatprep.subr.mxu0 0.0
        %1491 = vmatpush1.msra.mxu0 0.0
        %1492 = vmatprep.subr.mxu0 0.0
        %1493 = vmatpush1.msra.mxu0 0.0
        %1494 = vmatprep.subr.mxu0 0.0
        %1495 = vmatpush1.msra.mxu0 0.0
        %1496 = vmatprep.subr.mxu0 0.0
        %1497 = vmatpush1.msra.mxu0 0.0
        %1498 = vmatprep.subr.mxu0 0.0
        %1499 = vmatpush1.msra.mxu0 0.0
        %1500 = vmatprep.subr.mxu0 0.0
        %1501 = vmatpush1.msra.mxu0 0.0
        %1502 = vmatprep.subr.mxu0 0.0
        %1503 = vmatpush1.msra.mxu0 0.0
        %1504 = vmatprep.subr.mxu0 0.0
        %1505 = vmatpush1.msra.mxu0 0.0
        %1506 = vmatprep.subr.mxu0 0.0
        %1507 = vmatpush1.msra.mxu0 0.0
        %1508 = vmatprep.subr.mxu0 0.0
        %1509 = vmatpush1.msra.mxu0 0.0
        %1510 = vmatprep.subr.mxu0 0.0
        %1511 = vmatpush1.msra.mxu0 0.0
        %1512 = vmatprep.subr.mxu0 0.0
        %1513 = vmatpush1.msra.mxu0 0.0
        %1514 = vmatprep.mubr.f32.mxu0 0.0
        %1515 = vmatmul.mubr.f32.gmra.mrb[0].mxu0 %v1445
        %v1516 = vpop.f32.mrb[0].mxu0
        %v1517 = vadd.f32 0.0, %v1516
        %v1518 = vpop.f32.mrb[0].mxu0
        %1519 = vdwg.mxu0
        %1521 = vrot.lane.b32.xlu0 %v1517, 112
        %v1522 = vpop.permute.xlu0 %1521
        %v1524 = vmax.f32 %v1517, %v1522
        %v1525 = vld [vmem:[%s8] sm:$0xff]
        %v1526 = vld [vmem:[%s8 + $0x8] sm:$0xff]
        %v1527 = vld [vmem:[%s8 + $0x10] sm:$0xff]
        %v1528 = vld [vmem:[%s8 + $0x18] sm:$0xff]
        %v1529 = vld [vmem:[%s8 + $0x20] sm:$0xff]
        %v1530 = vld [vmem:[%s8 + $0x28] sm:$0xff]
        %v1531 = vld [vmem:[%s8 + $0x30] sm:$0xff]
        %v1532 = vld [vmem:[%s8 + $0x38] sm:$0xff]
        %v1533 = vld [vmem:[%s8 + $0x40] sm:$0xff]
        %v1534 = vld [vmem:[%s8 + $0x48] sm:$0xff]
        %v1535 = vld [vmem:[%s8 + $0x50] sm:$0xff]
        %v1536 = vld [vmem:[%s8 + $0x58] sm:$0xff]
        %v1537 = vld [vmem:[%s8 + $0x60] sm:$0xff]
        %v1538 = vld [vmem:[%s8 + $0x68] sm:$0xff]
        %vm1539 = vcmask 916480
        %v1541 = vsel %vm1539, %v1524, 0
        %1543 = vmatprep.subr.mxu0 0.0
        %1544 = vmatpush1.msra.mxu0 %v1525
        %1545 = vmatprep.subr.mxu0 0.0
        %1546 = vmatpush1.msra.mxu0 %v1526
        %1547 = vmatprep.subr.mxu0 0.0
        %1548 = vmatpush1.msra.mxu0 %v1527
        %1549 = vmatprep.subr.mxu0 0.0
        %1550 = vmatpush1.msra.mxu0 %v1528
        %1551 = vmatprep.subr.mxu0 0.0
        %1552 = vmatpush1.msra.mxu0 %v1529
        %1553 = vmatprep.subr.mxu0 0.0
        %1554 = vmatpush1.msra.mxu0 %v1530
        %1555 = vmatprep.subr.mxu0 0.0
        %1556 = vmatpush1.msra.mxu0 %v1531
        %1557 = vmatprep.subr.mxu0 0.0
        %1558 = vmatpush1.msra.mxu0 %v1532
        %1559 = vmatprep.subr.mxu0 0.0
        %1560 = vmatpush1.msra.mxu0 %v1533
        %1561 = vmatprep.subr.mxu0 0.0
        %1562 = vmatpush1.msra.mxu0 %v1534
        %1563 = vmatprep.subr.mxu0 0.0
        %1564 = vmatpush1.msra.mxu0 %v1535
        %1565 = vmatprep.subr.mxu0 0.0
        %1566 = vmatpush1.msra.mxu0 %v1536
        %1567 = vmatprep.subr.mxu0 0.0
        %1568 = vmatpush1.msra.mxu0 %v1537
        %1569 = vmatprep.subr.mxu0 0.0
        %1570 = vmatpush1.msra.mxu0 %v1538
        %1571 = vmatprep.subr.mxu0 0.0
        %1572 = vmatpush1.msra.mxu0 0.0
        %1573 = vmatprep.subr.mxu0 0.0
        %1574 = vmatpush1.msra.mxu0 0.0
        %1575 = vmatprep.subr.mxu0 0.0
        %1576 = vmatpush1.msra.mxu0 0.0
        %1577 = vmatprep.subr.mxu0 0.0
        %1578 = vmatpush1.msra.mxu0 0.0
        %1579 = vmatprep.subr.mxu0 0.0
        %1580 = vmatpush1.msra.mxu0 0.0
        %1581 = vmatprep.subr.mxu0 0.0
        %1582 = vmatpush1.msra.mxu0 0.0
        %1583 = vmatprep.subr.mxu0 0.0
        %1584 = vmatpush1.msra.mxu0 0.0
        %1585 = vmatprep.subr.mxu0 0.0
        %1586 = vmatpush1.msra.mxu0 0.0
        %1587 = vmatprep.subr.mxu0 0.0
        %1588 = vmatpush1.msra.mxu0 0.0
        %1589 = vmatprep.subr.mxu0 0.0
        %1590 = vmatpush1.msra.mxu0 0.0
        %1591 = vmatprep.subr.mxu0 0.0
        %1592 = vmatpush1.msra.mxu0 0.0
        %1593 = vmatprep.subr.mxu0 0.0
        %1594 = vmatpush1.msra.mxu0 0.0
        %1595 = vmatprep.subr.mxu0 0.0
        %1596 = vmatpush1.msra.mxu0 0.0
        %1597 = vmatprep.subr.mxu0 0.0
        %1598 = vmatpush1.msra.mxu0 0.0
        %1599 = vmatprep.subr.mxu0 0.0
        %1600 = vmatpush1.msra.mxu0 0.0
        %1601 = vmatprep.subr.mxu0 0.0
        %1602 = vmatpush1.msra.mxu0 0.0
        %1603 = vmatprep.subr.mxu0 0.0
        %1604 = vmatpush1.msra.mxu0 0.0
        %1605 = vmatprep.subr.mxu0 0.0
        %1606 = vmatpush1.msra.mxu0 0.0
        %1607 = vmatprep.mubr.f32.mxu0 0.0
        %1608 = vmatmul.mubr.f32.gmra.mrb[0].mxu0 %v1541
        %v1609 = vpop.f32.mrb[0].mxu0
        %v1610 = vadd.f32 0.0, %v1609
        %v1611 = vpop.f32.mrb[0].mxu0
        %1612 = vdwg.mxu0
        %vm1613 = vcmask 519168
        %1614 = vst.msk [vmem:[%s713] sm:$0xf] %vm1613, %v1610
        %1615 = vst.msk [vmem:[#allocation2] sm:$0x1] %vm730, 0.0
        %1616 = vst.msk [vmem:[#allocation2 + $0x5] sm:$0x1] %vm730, 0.0
        %1617 = vst.msk [vmem:[#allocation2 + $0x1] sm:$0xf] %vm1613, %v1610
        %v1618 = vld [vmem:[#allocation2] sm:$0xf]
        %v1619 = vpack.c.bf16 %v1618, %v1618
        %v1620 = vld [vmem:[%s9] sm:$0xf]
        %v1621 = vld [vmem:[%s9 + $0x4] sm:$0xf]
        %v1622 = vld [vmem:[%s9 + $0x8] sm:$0xf]
        %v1623 = vld [vmem:[%s9 + $0xc] sm:$0xf]
        %v1624 = vld [vmem:[%s9 + $0x10] sm:$0xf]
        %v1625 = vld [vmem:[%s9 + $0x14] sm:$0xf]
        %v1626 = vld [vmem:[%s9 + $0x18] sm:$0xf]
        %v1627 = vld [vmem:[%s9 + $0x1c] sm:$0xf]
        %v1636 = vunpack.c.l.b16 %v1620
        %v1637 = vunpack.c.l.b16 %v1621
        %v1638 = vunpack.c.l.b16 %v1622
        %v1639 = vunpack.c.l.b16 %v1623
        %v1640 = vunpack.c.l.b16 %v1624
        %v1641 = vunpack.c.l.b16 %v1625
        %v1642 = vunpack.c.l.b16 %v1626
        %v1643 = vunpack.c.l.b16 %v1627
        %v1644 = vpack.c.b16 %v1637, %v1636
        %v1645 = vpack.c.b16 %v1639, %v1638
        %v1646 = vpack.c.b16 %v1641, %v1640
        %v1647 = vpack.c.b16 %v1643, %v1642
        %v1653 = vsel %vm733, %v1619, 0
        %1655 = vmatprep.subr.bf16.mxu0 0
        %1656 = vmatpush1.bf16.msra.mxu0 %v1644
        %1657 = vmatprep.subr.bf16.mxu0 0
        %1658 = vmatpush1.bf16.msra.mxu0 %v1645
        %1659 = vmatprep.subr.bf16.mxu0 0
        %1660 = vmatpush1.bf16.msra.mxu0 %v1646
        %1661 = vmatprep.subr.bf16.mxu0 0
        %1662 = vmatpush1.bf16.msra.mxu0 %v1647
        %1663 = vmatprep.subr.bf16.mxu0 0
        %1664 = vmatpush1.bf16.msra.mxu0 0
        %1665 = vmatprep.subr.bf16.mxu0 0
        %1666 = vmatpush1.bf16.msra.mxu0 0
        %1667 = vmatprep.subr.bf16.mxu0 0
        %1668 = vmatpush1.bf16.msra.mxu0 0
        %1669 = vmatprep.subr.bf16.mxu0 0
        %1670 = vmatpush1.bf16.msra.mxu0 0
        %1671 = vmatprep.subr.bf16.mxu0 0
        %1672 = vmatpush1.bf16.msra.mxu0 0
        %1673 = vmatprep.subr.bf16.mxu0 0
        %1674 = vmatpush1.bf16.msra.mxu0 0
        %1675 = vmatprep.subr.bf16.mxu0 0
        %1676 = vmatpush1.bf16.msra.mxu0 0
        %1677 = vmatprep.subr.bf16.mxu0 0
        %1678 = vmatpush1.bf16.msra.mxu0 0
        %1679 = vmatprep.subr.bf16.mxu0 0
        %1680 = vmatpush1.bf16.msra.mxu0 0
        %1681 = vmatprep.subr.bf16.mxu0 0
        %1682 = vmatpush1.bf16.msra.mxu0 0
        %1683 = vmatprep.subr.bf16.mxu0 0
        %1684 = vmatpush1.bf16.msra.mxu0 0
        %1685 = vmatprep.subr.bf16.mxu0 0
        %1686 = vmatpush1.bf16.msra.mxu0 0
        %1687 = vmatprep.mubr.bf16.mxu0 0
        %1688 = vmatmul.mubr.bf16.gmra.mrb[0].mxu0 %v1653
        %v1689 = vpop.f32.mrb[0].mxu0
        %v1690 = vadd.f32 0.0, %v1689
        %v1691 = vpop.f32.mrb[0].mxu0
        %v1692 = vpop.f32.mrb[0].mxu0
        %v1693 = vpop.f32.mrb[0].mxu0
        %1694 = vdwg.mxu0
        %vm1695 = vcmask 781312
        %1696 = vst.msk [vmem:[#allocation3] sm:$0xf] %vm1695, %v1690
        %v1697 = vld [vmem:[#allocation2 + $0x1] sm:$0xf]
        %v1698 = vpack.c.bf16 %v1697, %v1697
        %s1699 = scalar_lea.vmem %s9, 32
        %v1700 = vld [vmem:[%s1699] sm:$0xf]
        %v1701 = vld [vmem:[%s1699 + $0x4] sm:$0xf]
        %v1702 = vld [vmem:[%s1699 + $0x8] sm:$0xf]
        %v1703 = vld [vmem:[%s1699 + $0xc] sm:$0xf]
        %v1704 = vld [vmem:[%s1699 + $0x10] sm:$0xf]
        %v1705 = vld [vmem:[%s1699 + $0x14] sm:$0xf]
        %v1706 = vld [vmem:[%s1699 + $0x18] sm:$0xf]
        %v1707 = vld [vmem:[%s1699 + $0x1c] sm:$0xf]
        %v1716 = vunpack.c.l.b16 %v1700
        %v1717 = vunpack.c.l.b16 %v1701
        %v1718 = vunpack.c.l.b16 %v1702
        %v1719 = vunpack.c.l.b16 %v1703
        %v1720 = vunpack.c.l.b16 %v1704
        %v1721 = vunpack.c.l.b16 %v1705
        %v1722 = vunpack.c.l.b16 %v1706
        %v1723 = vunpack.c.l.b16 %v1707
        %v1724 = vpack.c.b16 %v1717, %v1716
        %v1725 = vpack.c.b16 %v1719, %v1718
        %v1726 = vpack.c.b16 %v1721, %v1720
        %v1727 = vpack.c.b16 %v1723, %v1722
        %v1733 = vsel %vm733, %v1698, 0
        %1735 = vmatprep.subr.bf16.mxu0 0
        %1736 = vmatpush1.bf16.msra.mxu0 %v1724
        %1737 = vmatprep.subr.bf16.mxu0 0
        %1738 = vmatpush1.bf16.msra.mxu0 %v1725
        %1739 = vmatprep.subr.bf16.mxu0 0
        %1740 = vmatpush1.bf16.msra.mxu0 %v1726
        %1741 = vmatprep.subr.bf16.mxu0 0
        %1742 = vmatpush1.bf16.msra.mxu0 %v1727
        %1743 = vmatprep.subr.bf16.mxu0 0
        %1744 = vmatpush1.bf16.msra.mxu0 0
        %1745 = vmatprep.subr.bf16.mxu0 0
        %1746 = vmatpush1.bf16.msra.mxu0 0
        %1747 = vmatprep.subr.bf16.mxu0 0
        %1748 = vmatpush1.bf16.msra.mxu0 0
        %1749 = vmatprep.subr.bf16.mxu0 0
        %1750 = vmatpush1.bf16.msra.mxu0 0
        %1751 = vmatprep.subr.bf16.mxu0 0
        %1752 = vmatpush1.bf16.msra.mxu0 0
        %1753 = vmatprep.subr.bf16.mxu0 0
        %1754 = vmatpush1.bf16.msra.mxu0 0
        %1755 = vmatprep.subr.bf16.mxu0 0
        %1756 = vmatpush1.bf16.msra.mxu0 0
        %1757 = vmatprep.subr.bf16.mxu0 0
        %1758 = vmatpush1.bf16.msra.mxu0 0
        %1759 = vmatprep.subr.bf16.mxu0 0
        %1760 = vmatpush1.bf16.msra.mxu0 0
        %1761 = vmatprep.subr.bf16.mxu0 0
        %1762 = vmatpush1.bf16.msra.mxu0 0
        %1763 = vmatprep.subr.bf16.mxu0 0
        %1764 = vmatpush1.bf16.msra.mxu0 0
        %1765 = vmatprep.subr.bf16.mxu0 0
        %1766 = vmatpush1.bf16.msra.mxu0 0
        %1767 = vmatprep.mubr.bf16.mxu0 0
        %1768 = vmatmul.mubr.bf16.gmra.mrb[0].mxu0 %v1733
        %v1769 = vpop.f32.mrb[0].mxu0
        %v1770 = vadd.f32 0.0, %v1769
        %v1771 = vpop.f32.mrb[0].mxu0
        %v1772 = vpop.f32.mrb[0].mxu0
        %v1773 = vpop.f32.mrb[0].mxu0
        %1774 = vdwg.mxu0
        %v1775 = vld [vmem:[#allocation3] sm:$0xf]
        %v1776 = vadd.f32 %v1775, %v1770
        %1777 = vst.msk [vmem:[#allocation3] sm:$0xf] %vm1695, %v1776
        %v1778 = vld [vmem:[#allocation2 + $0x2] sm:$0xf]
        %v1779 = vpack.c.bf16 %v1778, %v1778
        %s1780 = scalar_lea.vmem %s9, 64
        %v1781 = vld [vmem:[%s1780] sm:$0xf]
        %v1782 = vld [vmem:[%s1780 + $0x4] sm:$0xf]
        %v1783 = vld [vmem:[%s1780 + $0x8] sm:$0xf]
        %v1784 = vld [vmem:[%s1780 + $0xc] sm:$0xf]
        %v1785 = vld [vmem:[%s1780 + $0x10] sm:$0xf]
        %v1786 = vld [vmem:[%s1780 + $0x14] sm:$0xf]
        %v1787 = vld [vmem:[%s1780 + $0x18] sm:$0xf]
        %v1788 = vld [vmem:[%s1780 + $0x1c] sm:$0xf]
        %v1797 = vunpack.c.l.b16 %v1781
        %v1798 = vunpack.c.l.b16 %v1782
        %v1799 = vunpack.c.l.b16 %v1783
        %v1800 = vunpack.c.l.b16 %v1784
        %v1801 = vunpack.c.l.b16 %v1785
        %v1802 = vunpack.c.l.b16 %v1786
        %v1803 = vunpack.c.l.b16 %v1787
        %v1804 = vunpack.c.l.b16 %v1788
        %v1805 = vpack.c.b16 %v1798, %v1797
        %v1806 = vpack.c.b16 %v1800, %v1799
        %v1807 = vpack.c.b16 %v1802, %v1801
        %v1808 = vpack.c.b16 %v1804, %v1803
        %v1814 = vsel %vm733, %v1779, 0
        %1816 = vmatprep.subr.bf16.mxu0 0
        %1817 = vmatpush1.bf16.msra.mxu0 %v1805
        %1818 = vmatprep.subr.bf16.mxu0 0
        %1819 = vmatpush1.bf16.msra.mxu0 %v1806
        %1820 = vmatprep.subr.bf16.mxu0 0
        %1821 = vmatpush1.bf16.msra.mxu0 %v1807
        %1822 = vmatprep.subr.bf16.mxu0 0
        %1823 = vmatpush1.bf16.msra.mxu0 %v1808
        %1824 = vmatprep.subr.bf16.mxu0 0
        %1825 = vmatpush1.bf16.msra.mxu0 0
        %1826 = vmatprep.subr.bf16.mxu0 0
        %1827 = vmatpush1.bf16.msra.mxu0 0
        %1828 = vmatprep.subr.bf16.mxu0 0
        %1829 = vmatpush1.bf16.msra.mxu0 0
        %1830 = vmatprep.subr.bf16.mxu0 0
        %1831 = vmatpush1.bf16.msra.mxu0 0
        %1832 = vmatprep.subr.bf16.mxu0 0
        %1833 = vmatpush1.bf16.msra.mxu0 0
        %1834 = vmatprep.subr.bf16.mxu0 0
        %1835 = vmatpush1.bf16.msra.mxu0 0
        %1836 = vmatprep.subr.bf16.mxu0 0
        %1837 = vmatpush1.bf16.msra.mxu0 0
        %1838 = vmatprep.subr.bf16.mxu0 0
        %1839 = vmatpush1.bf16.msra.mxu0 0
        %1840 = vmatprep.subr.bf16.mxu0 0
        %1841 = vmatpush1.bf16.msra.mxu0 0
        %1842 = vmatprep.subr.bf16.mxu0 0
        %1843 = vmatpush1.bf16.msra.mxu0 0
        %1844 = vmatprep.subr.bf16.mxu0 0
        %1845 = vmatpush1.bf16.msra.mxu0 0
        %1846 = vmatprep.subr.bf16.mxu0 0
        %1847 = vmatpush1.bf16.msra.mxu0 0
        %1848 = vmatprep.mubr.bf16.mxu0 0
        %1849 = vmatmul.mubr.bf16.gmra.mrb[0].mxu0 %v1814
        %v1850 = vpop.f32.mrb[0].mxu0
        %v1851 = vadd.f32 0.0, %v1850
        %v1852 = vpop.f32.mrb[0].mxu0
        %v1853 = vpop.f32.mrb[0].mxu0
        %v1854 = vpop.f32.mrb[0].mxu0
        %1855 = vdwg.mxu0
        %v1856 = vld [vmem:[#allocation3] sm:$0xf]
        %v1857 = vadd.f32 %v1856, %v1851
        %1858 = vst.msk [vmem:[#allocation3] sm:$0xf] %vm1695, %v1857
        %v1859 = vld [vmem:[#allocation3] sm:$0xf]
        %v1860 = vld [vmem:[#allocation11] sm:$0x1]
        %v1862 = vlaneseq
        %v1863 = vshrl.u32 %v1862, 7
        %v1864 = vsub.s32 0, %v1863
        %v1865 = vrot.slane %v1860, %v1864
        %v1867 = vadd.f32 %v1859, %v1865
        %v1868 = vmax.f32 %v1867, 0.0
        %v1870 = vrot.slane %v1868, 1
        %v1872 = vmax.f32 %v1868, %v1870
        %v1873 = vld [vmem:[#allocation13] sm:$0x3]
        %vm1874 = vcmask 23552
        %v1876 = vsel %vm1874, %v1873, 0
        %vm1878 = vcmask 1042432
        %v1880 = vsel %vm1878, %v1872, 0
        %1882 = vmatprep.subr.mxu0 0.0
        %1883 = vmatpush1.msra.mxu0 %v1880
        %1884 = vmatprep.subr.mxu0 0.0
        %1885 = vmatpush1.msra.mxu0 0.0
        %1886 = vmatprep.subr.mxu0 0.0
        %1887 = vmatpush1.msra.mxu0 0.0
        %1888 = vmatprep.subr.mxu0 0.0
        %1889 = vmatpush1.msra.mxu0 0.0
        %1890 = vmatprep.subr.mxu0 0.0
        %1891 = vmatpush1.msra.mxu0 0.0
        %1892 = vmatprep.subr.mxu0 0.0
        %1893 = vmatpush1.msra.mxu0 0.0
        %1894 = vmatprep.subr.mxu0 0.0
        %1895 = vmatpush1.msra.mxu0 0.0
        %1896 = vmatprep.subr.mxu0 0.0
        %1897 = vmatpush1.msra.mxu0 0.0
        %1898 = vmatprep.subr.mxu0 0.0
        %1899 = vmatpush1.msra.mxu0 0.0
        %1900 = vmatprep.subr.mxu0 0.0
        %1901 = vmatpush1.msra.mxu0 0.0
        %1902 = vmatprep.subr.mxu0 0.0
        %1903 = vmatpush1.msra.mxu0 0.0
        %1904 = vmatprep.subr.mxu0 0.0
        %1905 = vmatpush1.msra.mxu0 0.0
        %1906 = vmatprep.subr.mxu0 0.0
        %1907 = vmatpush1.msra.mxu0 0.0
        %1908 = vmatprep.subr.mxu0 0.0
        %1909 = vmatpush1.msra.mxu0 0.0
        %1910 = vmatprep.subr.mxu0 0.0
        %1911 = vmatpush1.msra.mxu0 0.0
        %1912 = vmatprep.subr.mxu0 0.0
        %1913 = vmatpush1.msra.mxu0 0.0
        %1914 = vmatprep.subr.mxu0 0.0
        %1915 = vmatpush1.msra.mxu0 0.0
        %1916 = vmatprep.subr.mxu0 0.0
        %1917 = vmatpush1.msra.mxu0 0.0
        %1918 = vmatprep.subr.mxu0 0.0
        %1919 = vmatpush1.msra.mxu0 0.0
        %1920 = vmatprep.subr.mxu0 0.0
        %1921 = vmatpush1.msra.mxu0 0.0
        %1922 = vmatprep.subr.mxu0 0.0
        %1923 = vmatpush1.msra.mxu0 0.0
        %1924 = vmatprep.subr.mxu0 0.0
        %1925 = vmatpush1.msra.mxu0 0.0
        %1926 = vmatprep.subr.mxu0 0.0
        %1927 = vmatpush1.msra.mxu0 0.0
        %1928 = vmatprep.subr.mxu0 0.0
        %1929 = vmatpush1.msra.mxu0 0.0
        %1930 = vmatprep.subr.mxu0 0.0
        %1931 = vmatpush1.msra.mxu0 0.0
        %1932 = vmatprep.subr.mxu0 0.0
        %1933 = vmatpush1.msra.mxu0 0.0
        %1934 = vmatprep.subr.mxu0 0.0
        %1935 = vmatpush1.msra.mxu0 0.0
        %1936 = vmatprep.subr.mxu0 0.0
        %1937 = vmatpush1.msra.mxu0 0.0
        %1938 = vmatprep.subr.mxu0 0.0
        %1939 = vmatpush1.msra.mxu0 0.0
        %1940 = vmatprep.subr.mxu0 0.0
        %1941 = vmatpush1.msra.mxu0 0.0
        %1942 = vmatprep.subr.mxu0 0.0
        %1943 = vmatpush1.msra.mxu0 0.0
        %1944 = vmatprep.subr.mxu0 0.0
        %1945 = vmatpush1.msra.mxu0 0.0
        %1946 = vmatprep.mubr.f32.mxu0 0.0
        %1947 = vmatmul.mubr.f32.gmra.mrb[0].mxu0 %v1876
        %v1948 = vpop.f32.mrb[0].mxu0
        %v1949 = vadd.f32 0.0, %v1948
        %v1950 = vpop.f32.mrb[0].mxu0
        %1951 = vdwg.mxu0
        %1953 = vrot.lane.b32.xlu0 %v1949, 104
        %v1954 = vpop.permute.xlu0 %1953
        %v1956 = vmax.f32 %v1949, %v1954
        %v1957 = vld [vmem:[%s12] sm:$0xff]
        %v1958 = vld [vmem:[%s12 + $0x8] sm:$0xff]
        %v1959 = vld [vmem:[%s12 + $0x10] sm:$0xff]
        %v1960 = vld [vmem:[%s12 + $0x18] sm:$0xff]
        %v1961 = vld [vmem:[%s12 + $0x20] sm:$0xff]
        %v1962 = vld [vmem:[%s12 + $0x28] sm:$0xff]
        %v1963 = vld [vmem:[%s12 + $0x30] sm:$0xff]
        %v1964 = vld [vmem:[%s12 + $0x38] sm:$0xff]
        %v1965 = vld [vmem:[%s12 + $0x40] sm:$0xff]
        %vm1966 = vcmask 588800
        %v1968 = vsel %vm1966, %v1956, 0
        %1970 = vmatprep.subr.mxu0 0.0
        %1971 = vmatpush1.msra.mxu0 %v1957
        %1972 = vmatprep.subr.mxu0 0.0
        %1973 = vmatpush1.msra.mxu0 %v1958
        %1974 = vmatprep.subr.mxu0 0.0
        %1975 = vmatpush1.msra.mxu0 %v1959
        %1976 = vmatprep.subr.mxu0 0.0
        %1977 = vmatpush1.msra.mxu0 %v1960
        %1978 = vmatprep.subr.mxu0 0.0
        %1979 = vmatpush1.msra.mxu0 %v1961
        %1980 = vmatprep.subr.mxu0 0.0
        %1981 = vmatpush1.msra.mxu0 %v1962
        %1982 = vmatprep.subr.mxu0 0.0
        %1983 = vmatpush1.msra.mxu0 %v1963
        %1984 = vmatprep.subr.mxu0 0.0
        %1985 = vmatpush1.msra.mxu0 %v1964
        %1986 = vmatprep.subr.mxu0 0.0
        %1987 = vmatpush1.msra.mxu0 %v1965
        %1988 = vmatprep.subr.mxu0 0.0
        %1989 = vmatpush1.msra.mxu0 0.0
        %1990 = vmatprep.subr.mxu0 0.0
        %1991 = vmatpush1.msra.mxu0 0.0
        %1992 = vmatprep.subr.mxu0 0.0
        %1993 = vmatpush1.msra.mxu0 0.0
        %1994 = vmatprep.subr.mxu0 0.0
        %1995 = vmatpush1.msra.mxu0 0.0
        %1996 = vmatprep.subr.mxu0 0.0
        %1997 = vmatpush1.msra.mxu0 0.0
        %1998 = vmatprep.subr.mxu0 0.0
        %1999 = vmatpush1.msra.mxu0 0.0
        %2000 = vmatprep.subr.mxu0 0.0
        %2001 = vmatpush1.msra.mxu0 0.0
        %2002 = vmatprep.subr.mxu0 0.0
        %2003 = vmatpush1.msra.mxu0 0.0
        %2004 = vmatprep.subr.mxu0 0.0
        %2005 = vmatpush1.msra.mxu0 0.0
        %2006 = vmatprep.subr.mxu0 0.0
        %2007 = vmatpush1.msra.mxu0 0.0
        %2008 = vmatprep.subr.mxu0 0.0
        %2009 = vmatpush1.msra.mxu0 0.0
        %2010 = vmatprep.subr.mxu0 0.0
        %2011 = vmatpush1.msra.mxu0 0.0
        %2012 = vmatprep.subr.mxu0 0.0
        %2013 = vmatpush1.msra.mxu0 0.0
        %2014 = vmatprep.subr.mxu0 0.0
        %2015 = vmatpush1.msra.mxu0 0.0
        %2016 = vmatprep.subr.mxu0 0.0
        %2017 = vmatpush1.msra.mxu0 0.0
        %2018 = vmatprep.subr.mxu0 0.0
        %2019 = vmatpush1.msra.mxu0 0.0
        %2020 = vmatprep.subr.mxu0 0.0
        %2021 = vmatpush1.msra.mxu0 0.0
        %2022 = vmatprep.subr.mxu0 0.0
        %2023 = vmatpush1.msra.mxu0 0.0
        %2024 = vmatprep.subr.mxu0 0.0
        %2025 = vmatpush1.msra.mxu0 0.0
        %2026 = vmatprep.subr.mxu0 0.0
        %2027 = vmatpush1.msra.mxu0 0.0
        %2028 = vmatprep.subr.mxu0 0.0
        %2029 = vmatpush1.msra.mxu0 0.0
        %2030 = vmatprep.subr.mxu0 0.0
        %2031 = vmatpush1.msra.mxu0 0.0
        %2032 = vmatprep.subr.mxu0 0.0
        %2033 = vmatpush1.msra.mxu0 0.0
        %2034 = vmatprep.mubr.f32.mxu0 0.0
        %2035 = vmatmul.mubr.f32.gmra.mrb[0].mxu0 %v1968
        %v2036 = vpop.f32.mrb[0].mxu0
        %v2037 = vadd.f32 0.0, %v2036
        %v2038 = vpop.f32.mrb[0].mxu0
        %2039 = vdwg.mxu0
        %vm2040 = vcmask 386048
        %2041 = vst.msk [vmem:[%s720] sm:$0x3] %vm2040, %v2037
        %vm2042 = vcmask 385024
        %2043 = vst.msk [vmem:[#allocation2] sm:$0x1] %vm2042, 0.0
        %2044 = vst.msk [vmem:[#allocation2 + $0x3] sm:$0x1] %vm2042, 0.0
        %2045 = vst.msk [vmem:[#allocation2 + $0x1] sm:$0x3] %vm2040, %v2037
        %v2046 = vld [vmem:[#allocation2] sm:$0x3]
        %v2047 = vpack.c.bf16 %v2046, %v2046
        %v2048 = vld [vmem:[%s13] sm:$0xf]
        %v2049 = vld [vmem:[%s13 + $0x4] sm:$0xf]
        %v2050 = vld [vmem:[%s13 + $0x8] sm:$0xf]
        %v2051 = vld [vmem:[%s13 + $0xc] sm:$0xf]
        %v2052 = vld [vmem:[%s13 + $0x10] sm:$0xf]
        %v2053 = vld [vmem:[%s13 + $0x14] sm:$0xf]
        %v2060 = vunpack.c.l.b16 %v2048
        %v2061 = vunpack.c.l.b16 %v2049
        %v2062 = vunpack.c.l.b16 %v2050
        %v2063 = vunpack.c.l.b16 %v2051
        %v2064 = vunpack.c.l.b16 %v2052
        %v2065 = vunpack.c.l.b16 %v2053
        %v2066 = vpack.c.b16 %v2061, %v2060
        %v2067 = vpack.c.b16 %v2063, %v2062
        %v2068 = vpack.c.b16 %v2065, %v2064
        %vm2072 = vcmask 392192
        %v2074 = vsel %vm2072, %v2047, 0
        %2076 = vmatprep.subr.bf16.mxu0 0
        %2077 = vmatpush1.bf16.msra.mxu0 %v2066
        %2078 = vmatprep.subr.bf16.mxu0 0
        %2079 = vmatpush1.bf16.msra.mxu0 %v2067
        %2080 = vmatprep.subr.bf16.mxu0 0
        %2081 = vmatpush1.bf16.msra.mxu0 %v2068
        %2082 = vmatprep.subr.bf16.mxu0 0
        %2083 = vmatpush1.bf16.msra.mxu0 0
        %2084 = vmatprep.subr.bf16.mxu0 0
        %2085 = vmatpush1.bf16.msra.mxu0 0
        %2086 = vmatprep.subr.bf16.mxu0 0
        %2087 = vmatpush1.bf16.msra.mxu0 0
        %2088 = vmatprep.subr.bf16.mxu0 0
        %2089 = vmatpush1.bf16.msra.mxu0 0
        %2090 = vmatprep.subr.bf16.mxu0 0
        %2091 = vmatpush1.bf16.msra.mxu0 0
        %2092 = vmatprep.subr.bf16.mxu0 0
        %2093 = vmatpush1.bf16.msra.mxu0 0
        %2094 = vmatprep.subr.bf16.mxu0 0
        %2095 = vmatpush1.bf16.msra.mxu0 0
        %2096 = vmatprep.subr.bf16.mxu0 0
        %2097 = vmatpush1.bf16.msra.mxu0 0
        %2098 = vmatprep.subr.bf16.mxu0 0
        %2099 = vmatpush1.bf16.msra.mxu0 0
        %2100 = vmatprep.subr.bf16.mxu0 0
        %2101 = vmatpush1.bf16.msra.mxu0 0
        %2102 = vmatprep.subr.bf16.mxu0 0
        %2103 = vmatpush1.bf16.msra.mxu0 0
        %2104 = vmatprep.subr.bf16.mxu0 0
        %2105 = vmatpush1.bf16.msra.mxu0 0
        %2106 = vmatprep.subr.bf16.mxu0 0
        %2107 = vmatpush1.bf16.msra.mxu0 0
        %2108 = vmatprep.mubr.bf16.mxu0 0
        %2109 = vmatmul.mubr.bf16.gmra.mrb[0].mxu0 %v2074
        %v2110 = vpop.f32.mrb[0].mxu0
        %v2111 = vadd.f32 0.0, %v2110
        %v2112 = vpop.f32.mrb[0].mxu0
        %v2113 = vpop.f32.mrb[0].mxu0
        %v2114 = vpop.f32.mrb[0].mxu0
        %2115 = vdwg.mxu0
        %vm2116 = vcmask 517120
        %2117 = vst.msk [vmem:[#allocation3] sm:$0x3] %vm2116, %v2111
        %v2118 = vld [vmem:[#allocation2 + $0x1] sm:$0x3]
        %v2119 = vpack.c.bf16 %v2118, %v2118
        %s2120 = scalar_lea.vmem %s13, 24
        %v2121 = vld [vmem:[%s2120] sm:$0xf]
        %v2122 = vld [vmem:[%s2120 + $0x4] sm:$0xf]
        %v2123 = vld [vmem:[%s2120 + $0x8] sm:$0xf]
        %v2124 = vld [vmem:[%s2120 + $0xc] sm:$0xf]
        %v2125 = vld [vmem:[%s2120 + $0x10] sm:$0xf]
        %v2126 = vld [vmem:[%s2120 + $0x14] sm:$0xf]
        %v2133 = vunpack.c.l.b16 %v2121
        %v2134 = vunpack.c.l.b16 %v2122
        %v2135 = vunpack.c.l.b16 %v2123
        %v2136 = vunpack.c.l.b16 %v2124
        %v2137 = vunpack.c.l.b16 %v2125
        %v2138 = vunpack.c.l.b16 %v2126
        %v2139 = vpack.c.b16 %v2134, %v2133
        %v2140 = vpack.c.b16 %v2136, %v2135
        %v2141 = vpack.c.b16 %v2138, %v2137
        %v2146 = vsel %vm2072, %v2119, 0
        %2148 = vmatprep.subr.bf16.mxu0 0
        %2149 = vmatpush1.bf16.msra.mxu0 %v2139
        %2150 = vmatprep.subr.bf16.mxu0 0
        %2151 = vmatpush1.bf16.msra.mxu0 %v2140
        %2152 = vmatprep.subr.bf16.mxu0 0
        %2153 = vmatpush1.bf16.msra.mxu0 %v2141
        %2154 = vmatprep.subr.bf16.mxu0 0
        %2155 = vmatpush1.bf16.msra.mxu0 0
        %2156 = vmatprep.subr.bf16.mxu0 0
        %2157 = vmatpush1.bf16.msra.mxu0 0
        %2158 = vmatprep.subr.bf16.mxu0 0
        %2159 = vmatpush1.bf16.msra.mxu0 0
        %2160 = vmatprep.subr.bf16.mxu0 0
        %2161 = vmatpush1.bf16.msra.mxu0 0
        %2162 = vmatprep.subr.bf16.mxu0 0
        %2163 = vmatpush1.bf16.msra.mxu0 0
        %2164 = vmatprep.subr.bf16.mxu0 0
        %2165 = vmatpush1.bf16.msra.mxu0 0
        %2166 = vmatprep.subr.bf16.mxu0 0
        %2167 = vmatpush1.bf16.msra.mxu0 0
        %2168 = vmatprep.subr.bf16.mxu0 0
        %2169 = vmatpush1.bf16.msra.mxu0 0
        %2170 = vmatprep.subr.bf16.mxu0 0
        %2171 = vmatpush1.bf16.msra.mxu0 0
        %2172 = vmatprep.subr.bf16.mxu0 0
        %2173 = vmatpush1.bf16.msra.mxu0 0
        %2174 = vmatprep.subr.bf16.mxu0 0
        %2175 = vmatpush1.bf16.msra.mxu0 0
        %2176 = vmatprep.subr.bf16.mxu0 0
        %2177 = vmatpush1.bf16.msra.mxu0 0
        %2178 = vmatprep.subr.bf16.mxu0 0
        %2179 = vmatpush1.bf16.msra.mxu0 0
        %2180 = vmatprep.mubr.bf16.mxu0 0
        %2181 = vmatmul.mubr.bf16.gmra.mrb[0].mxu0 %v2146
        %v2182 = vpop.f32.mrb[0].mxu0
        %v2183 = vadd.f32 0.0, %v2182
        %v2184 = vpop.f32.mrb[0].mxu0
        %v2185 = vpop.f32.mrb[0].mxu0
        %v2186 = vpop.f32.mrb[0].mxu0
        %2187 = vdwg.mxu0
        %v2188 = vld [vmem:[#allocation3] sm:$0x3]
        %v2189 = vadd.f32 %v2188, %v2183
        %2190 = vst.msk [vmem:[#allocation3] sm:$0x3] %vm2116, %v2189
        %v2191 = vld [vmem:[#allocation2 + $0x2] sm:$0x3]
        %v2192 = vpack.c.bf16 %v2191, %v2191
        %s2193 = scalar_lea.vmem %s13, 48
        %v2194 = vld [vmem:[%s2193] sm:$0xf]
        %v2195 = vld [vmem:[%s2193 + $0x4] sm:$0xf]
        %v2196 = vld [vmem:[%s2193 + $0x8] sm:$0xf]
        %v2197 = vld [vmem:[%s2193 + $0xc] sm:$0xf]
        %v2198 = vld [vmem:[%s2193 + $0x10] sm:$0xf]
        %v2199 = vld [vmem:[%s2193 + $0x14] sm:$0xf]
        %v2206 = vunpack.c.l.b16 %v2194
        %v2207 = vunpack.c.l.b16 %v2195
        %v2208 = vunpack.c.l.b16 %v2196
        %v2209 = vunpack.c.l.b16 %v2197
        %v2210 = vunpack.c.l.b16 %v2198
        %v2211 = vunpack.c.l.b16 %v2199
        %v2212 = vpack.c.b16 %v2207, %v2206
        %v2213 = vpack.c.b16 %v2209, %v2208
        %v2214 = vpack.c.b16 %v2211, %v2210
        %v2219 = vsel %vm2072, %v2192, 0
        %2221 = vmatprep.subr.bf16.mxu0 0
        %2222 = vmatpush1.bf16.msra.mxu0 %v2212
        %2223 = vmatprep.subr.bf16.mxu0 0
        %2224 = vmatpush1.bf16.msra.mxu0 %v2213
        %2225 = vmatprep.subr.bf16.mxu0 0
        %2226 = vmatpush1.bf16.msra.mxu0 %v2214
        %2227 = vmatprep.subr.bf16.mxu0 0
        %2228 = vmatpush1.bf16.msra.mxu0 0
        %2229 = vmatprep.subr.bf16.mxu0 0
        %2230 = vmatpush1.bf16.msra.mxu0 0
        %2231 = vmatprep.subr.bf16.mxu0 0
        %2232 = vmatpush1.bf16.msra.mxu0 0
        %2233 = vmatprep.subr.bf16.mxu0 0
        %2234 = vmatpush1.bf16.msra.mxu0 0
        %2235 = vmatprep.subr.bf16.mxu0 0
        %2236 = vmatpush1.bf16.msra.mxu0 0
        %2237 = vmatprep.subr.bf16.mxu0 0
        %2238 = vmatpush1.bf16.msra.mxu0 0
        %2239 = vmatprep.subr.bf16.mxu0 0
        %2240 = vmatpush1.bf16.msra.mxu0 0
        %2241 = vmatprep.subr.bf16.mxu0 0
        %2242 = vmatpush1.bf16.msra.mxu0 0
        %2243 = vmatprep.subr.bf16.mxu0 0
        %2244 = vmatpush1.bf16.msra.mxu0 0
        %2245 = vmatprep.subr.bf16.mxu0 0
        %2246 = vmatpush1.bf16.msra.mxu0 0
        %2247 = vmatprep.subr.bf16.mxu0 0
        %2248 = vmatpush1.bf16.msra.mxu0 0
        %2249 = vmatprep.subr.bf16.mxu0 0
        %2250 = vmatpush1.bf16.msra.mxu0 0
        %2251 = vmatprep.subr.bf16.mxu0 0
        %2252 = vmatpush1.bf16.msra.mxu0 0
        %2253 = vmatprep.mubr.bf16.mxu0 0
        %2254 = vmatmul.mubr.bf16.gmra.mrb[0].mxu0 %v2219
        %v2255 = vpop.f32.mrb[0].mxu0
        %v2256 = vadd.f32 0.0, %v2255
        %v2257 = vpop.f32.mrb[0].mxu0
        %v2258 = vpop.f32.mrb[0].mxu0
        %v2259 = vpop.f32.mrb[0].mxu0
        %2260 = vdwg.mxu0
        %v2261 = vld [vmem:[#allocation3] sm:$0x3]
        %v2262 = vadd.f32 %v2261, %v2256
        %2263 = vst.msk [vmem:[#allocation3] sm:$0x3] %vm2116, %v2262
        %v2264 = vld [vmem:[#allocation3] sm:$0x3]
        %v2265 = vld [vmem:[%s14] sm:$0x1]
        %v2267 = vlaneseq
        %v2268 = vshrl.u32 %v2267, 7
        %v2269 = vsub.s32 0, %v2268
        %v2270 = vrot.slane %v2265, %v2269
        %v2272 = vadd.f32 %v2264, %v2270
        %v2273 = vmax.f32 %v2272, 0.0
        %v2275 = vrot.slane %v2273, 1
        %v2277 = vmax.f32 %v2273, %v2275
        %2279 = vrot.lane.b32.xlu0 %v2277, 96
        %v2280 = vpop.permute.xlu0 %2279
        %v2282 = vmax.f32 %v2277, %v2280
        %vm2283 = vcmask 253952
        %2284 = vst.msk [vmem:[%s726] sm:$0x1] %vm2283, %v2282
        %s2285 = sand.u32 %s418, 1
        %s2286 = scalar_lea.sflag [#allocation7], %s2285
        %s2287 = sand.u32 %s418, 1
        %s2288 = smul.addr %s2287, 8
        %s2289 = scalar_lea.vmem [#allocation14], %s2288
        %s2290 = sand.u32 %s48, 1
        %s2291 = scalar_lea.sflag [#allocation16], %s2290
        %s2292 = sand.u32 %s444, 1
        %s2293 = smul.addr %s2292, 4
        %s2294 = scalar_lea.vmem [#allocation15], %s2293
        %s2295 = sand.u32 %s48, 1
        %s2296 = scalar_lea.sflag [#allocation16], %s2295
        %s2297 = sand.u32 %s470, 1
        %s2298 = smul.addr %s2297, 2
        %s2299 = scalar_lea.vmem [#allocation17], %s2298
        %s2300 = sand.u32 %s496, 1
        %s2301 = scalar_lea.sflag [#allocation19], %s2300
        %s2302 = sand.u32 %s496, 1
        %s2303 = scalar_lea.vmem [#allocation18], %s2302
        // Predicated region
        $region109: #{tpu_custom_call.1} parent=87 // pred_check
          %p2304 = pneg %p428
        $region110: #{tpu_custom_call.1} parent=87 // pred_check_branch
          %2306 = sbr.rel (%p2304) target = $region112
        $region111: #{tpu_custom_call.1} parent=87 // pred_region
          %s2308 = ssub.s32 128, 128
          %2309 = vsyncadd %s2286, %s2308
          %s2310 = smul.addr %s48, 128
          %s2311 = scalar_lea.hbm %s17, %s2310
          %s2313 = sshll.u32 %s2289, 4
          %s2314 = int_to_ptr.vmem [resolvable:$true] %s2313
          %2316 = dma.vmem_to_hbm [thread:$0]  %s2314, 128, %s2311, %s2286
        $region112: #{tpu_custom_call.1} parent=87 // pred_fallthru
          _
        // Predicated region
        $region113: #{tpu_custom_call.1} parent=87 // pred_check
          %p2317 = pneg %p454
        $region114: #{tpu_custom_call.1} parent=87 // pred_check_branch
          %2319 = sbr.rel (%p2317) target = $region116
        $region115: #{tpu_custom_call.1} parent=87 // pred_region
          %s2321 = ssub.s32 64, 64
          %2322 = vsyncadd %s2291, %s2321
          %s2323 = smul.addr %s48, 64
          %s2324 = scalar_lea.hbm %s18, %s2323
          %s2326 = sshll.u32 %s2294, 4
          %s2327 = int_to_ptr.vmem [resolvable:$true] %s2326
          %2329 = dma.vmem_to_hbm [thread:$0]  %s2327, 64, %s2324, %s2291
        $region116: #{tpu_custom_call.1} parent=87 // pred_fallthru
          _
        // Predicated region
        $region117: #{tpu_custom_call.1} parent=87 // pred_check
          %p2330 = pneg %p480
        $region118: #{tpu_custom_call.1} parent=87 // pred_check_branch
          %2332 = sbr.rel (%p2330) target = $region120
        $region119: #{tpu_custom_call.1} parent=87 // pred_region
          %s2334 = ssub.s32 32, 32
          %2335 = vsyncadd %s2296, %s2334
          %s2336 = smul.addr %s48, 32
          %s2337 = scalar_lea.hbm %s19, %s2336
          %s2339 = sshll.u32 %s2299, 4
          %s2340 = int_to_ptr.vmem [resolvable:$true] %s2339
          %2342 = dma.vmem_to_hbm [thread:$0]  %s2340, 32, %s2337, %s2296
        $region120: #{tpu_custom_call.1} parent=87 // pred_fallthru
          _
        // Predicated region
        $region121: #{tpu_custom_call.1} parent=87 // pred_check
          %p2343 = pneg %p506
        $region122: #{tpu_custom_call.1} parent=87 // pred_check_branch
          %2345 = sbr.rel (%p2343) target = $region124
        $region123: #{tpu_custom_call.1} parent=87 // pred_region
          %s2347 = ssub.s32 16, 16
          %2348 = vsyncadd %s2301, %s2347
          %s2349 = smul.addr %s48, 16
          %s2350 = scalar_lea.hbm %s20, %s2349
          %s2352 = sshll.u32 %s2303, 4
          %s2353 = int_to_ptr.vmem [resolvable:$true] %s2352
          %2355 = dma.vmem_to_hbm [thread:$0]  %s2353, 16, %s2350, %s2301
        $region124: #{tpu_custom_call.1} parent=87 // pred_fallthru
          _
      $region88: #{tpu_custom_call.1} parent=5 // pred_fallthru
        _
      %p2356 = scmp.le.s32.totalorder 2, %s43
      // Predicated region
      $region125: #{tpu_custom_call.1} parent=5 // pred_check
        %p2357 = pneg %p2356
      $region126: #{tpu_custom_call.1} parent=5 // pred_check_branch
        %2359 = sbr.rel (%p2357) target = $region128
      $region127: #{tpu_custom_call.1} parent=5 // pred_region
        %s2360 = ssub.s32 %s43, 2
        // Predicated region
        $region129: #{tpu_custom_call.1} parent=127 // pred_check
          %p2361 = pneg %p434
        $region130: #{tpu_custom_call.1} parent=127 // pred_check_branch
          %2363 = sbr.rel (%p2361) target = $region132
        $region131: #{tpu_custom_call.1} parent=127 // pred_region
          %s2364 = sand.u32 %s419, 1
          %s2365 = scalar_lea.sflag [#allocation7], %s2364
          %s2366 = sand.u32 %s419, 1
          %s2367 = smul.addr %s2366, 8
          %s2368 = scalar_lea.vmem [#allocation14], %s2367
          %2369 = dma.done %s2365, 128
        $region132: #{tpu_custom_call.1} parent=127 // pred_fallthru
          _
        // Predicated region
        $region133: #{tpu_custom_call.1} parent=127 // pred_check
          %p2370 = pneg %p460
        $region134: #{tpu_custom_call.1} parent=127 // pred_check_branch
          %2372 = sbr.rel (%p2370) target = $region136
        $region135: #{tpu_custom_call.1} parent=127 // pred_region
          %s2373 = sand.u32 %s49, 1
          %s2374 = scalar_lea.sflag [#allocation16], %s2373
          %s2375 = sand.u32 %s445, 1
          %s2376 = smul.addr %s2375, 4
          %s2377 = scalar_lea.vmem [#allocation15], %s2376
          %2378 = dma.done %s2374, 64
        $region136: #{tpu_custom_call.1} parent=127 // pred_fallthru
          _
        // Predicated region
        $region137: #{tpu_custom_call.1} parent=127 // pred_check
          %p2379 = pneg %p486
        $region138: #{tpu_custom_call.1} parent=127 // pred_check_branch
          %2381 = sbr.rel (%p2379) target = $region140
        $region139: #{tpu_custom_call.1} parent=127 // pred_region
          %s2382 = sand.u32 %s49, 1
          %s2383 = scalar_lea.sflag [#allocation16], %s2382
          %s2384 = sand.u32 %s471, 1
          %s2385 = smul.addr %s2384, 2
          %s2386 = scalar_lea.vmem [#allocation17], %s2385
          %2387 = dma.done %s2383, 32
        $region140: #{tpu_custom_call.1} parent=127 // pred_fallthru
          _
        // Predicated region
        $region141: #{tpu_custom_call.1} parent=127 // pred_check
          %p2388 = pneg %p512
        $region142: #{tpu_custom_call.1} parent=127 // pred_check_branch
          %2390 = sbr.rel (%p2388) target = $region144
        $region143: #{tpu_custom_call.1} parent=127 // pred_region
          %s2391 = sand.u32 %s497, 1
          %s2392 = scalar_lea.sflag [#allocation19], %s2391
          %s2393 = sand.u32 %s497, 1
          %s2394 = scalar_lea.vmem [#allocation18], %s2393
          %2395 = dma.done %s2392, 16
        $region144: #{tpu_custom_call.1} parent=127 // pred_fallthru
          _
      $region128: #{tpu_custom_call.1} parent=5 // pred_fallthru
        _
    $region6: #{tpu_custom_call.1} parent=1 // loop_footer
      %s47 = sadd.s32 1, %s43
    $region7: #{tpu_custom_call.1} parent=1 // loop_footer_branch
      %42 = sbr.rel target = $region3
    $region8: #{tpu_custom_call.1} parent=1 // loop_exit
      _
    %2396 = vsyncpa [#allocation6], 1
    %s2397 = scalar_lea.sflag [#allocation6], 1
    %2398 = vsyncpa %s2397, 1
    %2399 = vsyncpa [#allocation9], 1
    %2400 = vsyncpa [#allocation12], 1
    %2401 = vsyncpa [#allocation7], 1
    %s2402 = scalar_lea.sflag [#allocation7], 1
    %2403 = vsyncpa %s2402, 1
    %2404 = vsyncpa [#allocation16], 1
    %s2405 = scalar_lea.sflag [#allocation16], 1
    %2406 = vsyncpa %s2405, 1
    %2407 = vsyncpa [#allocation19], 1
    %s2408 = scalar_lea.sflag [#allocation19], 1
    %2409 = vsyncpa %s2408, 1

</llo_original>
